<compile_context>
chip_gen: v7x
topology: tpu7x:2x2x1
jax: 0.10.0
libtpu: 0.0.40
codegen_flags: <defaults>
</compile_context>

<pallas_src>
import functools

import jax
import jax.numpy as jnp
from jax.experimental import pallas as pl
from jax.experimental.pallas import tpu as pltpu


CFG = [8, "M", 16, "M", 32, "M"]   # conv channels / maxpool markers
NUM_CLASS = 10
HIDDEN = 512
BN_EPS = 1e-5


# ----------------------------------------------------------------------------
# Fused kernel (one image per grid step)
# ----------------------------------------------------------------------------
def _vgg_bw_fused_kernel(*refs, layer_dims, n_sel, matmul_dtype):
    L = len(layer_dims)
    x_ref = refs[0]
    conv_refs = refs[1:1 + 2 * L]                       # w1, b1, w2, b2, w3, b3
    wc_ref, bc_ref = refs[1 + 2 * L], refs[2 + 2 * L]   # folded classifier
    sel_refs = refs[3 + 2 * L:3 + 2 * L + n_sel]        # pooling selectors (layers w/ Np>1)
    out_ref = refs[3 + 2 * L + n_sel]
    pad_refs = refs[4 + 2 * L + n_sel:4 + 3 * L + n_sel]
    patch_refs = refs[4 + 3 * L + n_sel:4 + 4 * L + n_sel]

    # Borders of the flat-padded scratches provide the conv zero padding.  Scratch contents
    # are undefined on each core's first step (grid is split across cores on v7x), so zero
    # every step — the buffers are tiny (<= 82x1 / 26x8 / 10x16 f32).
    for p in pad_refs:
        p[...] = jnp.zeros_like(p)

    H0, W0, _, _ = layer_dims[0]
    pad_refs[0][pl.ds(W0 + 1, H0 * W0), :] = x_ref[0]   # stage this image's input

    act = None
    sel_idx = 0
    for li, (H, W, Cin, Cout) in enumerate(layer_dims):
        HW, OFF = H * W, W + 1
        pad_ref, patch_ref = pad_refs[li], patch_refs[li]
        if li > 0:
            pad_ref[pl.ds(OFF, HW), :] = act            # previous layer's pooled output

        # Column masks (hoisted: built once per layer, shared by all 9 taps and all images;
        # they kill the row wrap-around of the flat-padded layout for the kw=0 / kw=2 taps).
        wcol = jax.lax.broadcasted_iota(jnp.int32, (HW, 1), 0) % W
        mask_l = (wcol != 0).astype(jnp.float32)
        mask_r = (wcol != W - 1).astype(jnp.float32)

        # im2col: 9 shifted views of the padded buffer -> one (HW, 9*Cin) patch matrix.
        for kh in range(3):
            for kw in range(3):
                t = kh * 3 + kw
                v = pad_ref[pl.ds(OFF + (kh - 1) * W + (kw - 1), HW), :]
                if kw == 0:
                    v = v * mask_l
                elif kw == 2:
                    v = v * mask_r
                patch_ref[:, t * Cin:(t + 1) * Cin] = v

        # Single MXU matmul per conv layer; folded BN + ReLU epilogue stays f32 on the VPU.
        w_ref, b_ref = conv_refs[2 * li], conv_refs[2 * li + 1]
        y = jnp.dot(patch_ref[...].astype(matmul_dtype), w_ref[...],
                    preferred_element_type=jnp.float32) + b_ref[...]
        y = jnp.maximum(y, 0.0)

        # 2x2 / stride-2 maxpool.
        Ho, Wo = H // 2, W // 2
        if Ho * Wo == 1:
            act = jnp.max(y, axis=0, keepdims=True)     # whole map == the single pool window
        else:
            sel_ref = sel_refs[sel_idx]
            sel_idx += 1
            pooled = None
            for k in range(4):                          # 4 host-precomputed one-hot selectors
                tap = jnp.dot(sel_ref[k], y, preferred_element_type=jnp.float32)
                pooled = tap if pooled is None else jnp.maximum(pooled, tap)
            act = pooled

    # act == torch.flatten(features, 1) for this image: (1, 32).  Folded classifier.
    out_ref[0] = jnp.dot(act.astype(matmul_dtype), wc_ref[...],
                         preferred_element_type=jnp.float32) + bc_ref[...]


# ----------------------------------------------------------------------------
# Parameter construction (mirrors _initialize_weights; BN folded into conv W/b)
# ----------------------------------------------------------------------------
def _build_layer_dims(H, W, in_ch, cfg=CFG):
    dims = []
    for c in cfg:
        if c == "M":
            H, W = H // 2, W // 2
        else:
            dims.append((H, W, in_ch, c))
            in_ch = c
    return tuple(dims), in_ch, H, W


def init_params(key):
    params = {"convs": [], "fcs": []}
    in_ch = 1  # BW -> grayscale
    for c in CFG:
        if c == "M":
            continue
        key, wk = jax.random.split(key)
        std = (2.0 / (c * 3 * 3)) ** 0.5                      # kaiming_normal_, fan_out, relu
        w = jax.random.normal(wk, (c, in_ch, 3, 3), jnp.float32) * std   # torch OIHW
        conv_bias = jnp.zeros((c,), jnp.float32)
        # BatchNorm2d eval stats: gamma=1, beta=0, running_mean=0, running_var=1
        gamma = jnp.ones((c,), jnp.float32)
        beta = jnp.zeros((c,), jnp.float32)
        r_mean = jnp.zeros((c,), jnp.float32)
        r_var = jnp.ones((c,), jnp.float32)
        bn_scale = gamma / jnp.sqrt(r_var + BN_EPS)
        # (Cout,Cin,3,3) -> (kh,kw,Cin,Cout) -> (9,Cin,Cout); fold BN scale into W
        w_mat = jnp.transpose(w, (2, 3, 1, 0)).reshape(9, in_ch, c) * bn_scale[None, None, :]
        bias = ((conv_bias - r_mean) * bn_scale + beta).reshape(1, c)
        params["convs"].append((w_mat, bias))
        in_ch = c

    feat_dim = CFG[-2]
    for (din, dout) in [(feat_dim, HIDDEN), (HIDDEN, NUM_CLASS)]:
        key, wk = jax.random.split(key)
        w = jax.random.normal(wk, (dout, din), jnp.float32) * 0.01       # torch (out,in)
        b = jnp.zeros((1, dout), jnp.float32)
        params["fcs"].append((w.T, b))
    return params


def _pool_selectors(H, W):
    """(4, Ho*Wo, H*W) one-hot selection matrices for a 2x2/stride-2 maxpool."""
    Ho, Wo = H // 2, W // 2
    Np, HW = Ho * Wo, H * W
    q = jnp.arange(Np)
    anchor = 2 * (q // Wo) * W + 2 * (q % Wo)                 # top-left of each window
    cols = jnp.arange(HW)[None, :]
    return jnp.stack([(cols == (anchor + d)[:, None]).astype(jnp.float32)
                      for d in (0, 1, W, W + 1)], axis=0)


# ----------------------------------------------------------------------------
# Forward (single pallas_call, grid over images)
# ----------------------------------------------------------------------------
def vgg_bw_forward(x_nchw, params, *, use_bf16_matmul=False):
    N, Cin, H, W = x_nchw.shape
    assert Cin == 1, "VGG_BW expects a single (black & white) input channel"
    layer_dims, feat_ch, Hf, Wf = _build_layer_dims(H, W, Cin)
    assert (Hf, Wf) == (1, 1) and feat_ch == CFG[-2], \
        "Linear(cfg[-2], 512) requires a 1x1 spatial map after the features"

    mdt = jnp.bfloat16 if use_bf16_matmul else jnp.float32    # MXU operand dtype (v6e/v7x)

    # NCHW with C==1 has the same memory order as NHWC -> free reshape
    x = x_nchw.reshape(N, H * W, 1).astype(jnp.float32)

    conv_inputs = []
    for (w9, b) in params["convs"]:
        k9, ci, co = w9.shape
        conv_inputs += [w9.reshape(k9 * ci, co).astype(mdt), b]   # im2col weights (9*Cin, Cout)

    # Fold Linear(32,512) -> Linear(512,10): algebraically exact (no nonlinearity between).
    (fw1, fb1), (fw2, fb2) = params["fcs"]
    wc = (fw1 @ fw2).astype(mdt)                              # (32, 10)
    bc = fb1 @ fw2 + fb2                                      # (1, 10)

    sels = [_pool_selectors(Hh, Ww) for (Hh, Ww, _, _) in layer_dims
            if (Hh // 2) * (Ww // 2) > 1]

    inputs = [x] + conv_inputs + [wc, bc] + sels
    in_specs = [pl.BlockSpec((1, H * W, 1), lambda i: (i, 0, 0))]
    # Constant index maps -> weights/biases/selectors stay VMEM-resident across grid steps.
    in_specs += [pl.BlockSpec(a.shape, lambda i, n=a.ndim: (0,) * n) for a in inputs[1:]]

    scratch_shapes = [pltpu.VMEM((Hh * Ww + 2 * Ww + 2, Ci), jnp.float32)   # flat-padded act
                      for (Hh, Ww, Ci, _) in layer_dims]
    scratch_shapes += [pltpu.VMEM((Hh * Ww, 9 * Ci), jnp.float32)           # im2col patches
                       for (Hh, Ww, Ci, _) in layer_dims]

    # Advisory cost hint (folded classifier, selector pooling, last-layer max is free-ish).
    flops = 0
    for (Hh, Ww, Ci, Co) in layer_dims:
        hw = Hh * Ww
        flops += 2 * N * hw * 9 * Ci * Co                     # im2col conv matmul
        if (Hh // 2) * (Ww // 2) > 1:
            flops += 4 * 2 * N * (hw // 4) * hw * Co          # pooling selector matmuls
    flops += 2 * N * feat_ch * NUM_CLASS                      # folded classifier
    bytes_accessed = sum(int(a.size) * a.dtype.itemsize for a in inputs) + N * NUM_CLASS * 4

    kernel = functools.partial(_vgg_bw_fused_kernel, layer_dims=layer_dims,
                               n_sel=len(sels), matmul_dtype=mdt)
    out = pl.pallas_call(
        kernel,
        out_shape=jax.ShapeDtypeStruct((N, 1, NUM_CLASS), jnp.float32),
        grid=(N,),
        in_specs=in_specs,
        out_specs=pl.BlockSpec((1, 1, NUM_CLASS), lambda i: (i, 0, 0)),
        scratch_shapes=scratch_shapes,
        compiler_params=pltpu.CompilerParams(dimension_semantics=("parallel",)),
        cost_estimate=pl.CostEstimate(flops=int(flops), transcendentals=0,
                                      bytes_accessed=int(bytes_accessed)),
    )(*inputs)
    return out.reshape(N, NUM_CLASS)


# ----------------------------------------------------------------------------
# Pure-JAX reference (unfolded classifier; for self-verification only)
# ----------------------------------------------------------------------------
def vgg_bw_reference(x_nchw, params):
    x = jnp.transpose(x_nchw, (0, 2, 3, 1)).astype(jnp.float32)   # NHWC
    for (w, b) in params["convs"]:
        N, H, W, _ = x.shape
        xp = jnp.pad(x, ((0, 0), (1, 1), (1, 1), (0, 0)))
        pm = jnp.stack([xp[:, kh:kh + H, kw:kw + W, :]
                        for kh in range(3) for kw in range(3)], axis=3)   # (N,H,W,9,C)
        y = jnp.einsum("nhwkc,kco->nhwo", pm, w) + b[0]
        y = jnp.maximum(y, 0.0)
        Co = y.shape[-1]
        x = y.reshape(N, H // 2, 2, W // 2, 2, Co).max(axis=(2, 4))
    f = x.reshape(x.shape[0], -1)
    for (w, b) in params["fcs"]:
        f = f @ w + b
    return f


if __name__ == "__main__":
    key = jax.random.PRNGKey(0)
    pkey, xkey = jax.random.split(key)
    params = init_params(pkey)
    # Input: batch=2, 1 channel (black & white), 8x8 spatial, NCHW like PyTorch.
    x = jax.random.normal(xkey, (2, 1, 8, 8), jnp.float32)

    fwd = jax.jit(lambda a: vgg_bw_forward(a, params))
    out = jax.block_until_ready(fwd(x))

    assert out.shape == (2, NUM_CLASS), out.shape
    assert bool(jnp.all(jnp.isfinite(out)))
    ref = vgg_bw_reference(x, params)
    assert bool(jnp.allclose(out, ref, atol=1e-4, rtol=1e-4)), \
        float(jnp.max(jnp.abs(out - ref)))
    print("KERNEL_OK")
</pallas_src>

<mosaic_0001>
module attributes {stable_mosaic.version = 11 : i64} {
  func.func @_vgg_bw_fused_kernel(%arg0: i32, %arg1: memref<1x64x1xf32, #tpu.memory_space<vmem>>, %arg2: memref<9x8xf32, #tpu.memory_space<vmem>>, %arg3: memref<1x8xf32, #tpu.memory_space<vmem>>, %arg4: memref<72x16xf32, #tpu.memory_space<vmem>>, %arg5: memref<1x16xf32, #tpu.memory_space<vmem>>, %arg6: memref<144x32xf32, #tpu.memory_space<vmem>>, %arg7: memref<1x32xf32, #tpu.memory_space<vmem>>, %arg8: memref<32x10xf32, #tpu.memory_space<vmem>>, %arg9: memref<1x10xf32, #tpu.memory_space<vmem>>, %arg10: memref<4x16x64xf32, #tpu.memory_space<vmem>>, %arg11: memref<4x4x16xf32, #tpu.memory_space<vmem>>, %arg12: memref<1x1x10xf32, #tpu.memory_space<vmem>>, %arg13: memref<82x1xf32, #tpu.memory_space<vmem>>, %arg14: memref<26x8xf32, #tpu.memory_space<vmem>>, %arg15: memref<10x16xf32, #tpu.memory_space<vmem>>, %arg16: memref<64x9xf32, #tpu.memory_space<vmem>>, %arg17: memref<16x72xf32, #tpu.memory_space<vmem>>, %arg18: memref<4x144xf32, #tpu.memory_space<vmem>>) attributes {dimension_semantics = [#tpu.dimension_semantics<parallel>], iteration_bounds = array<i64: 2>, scalar_prefetch = 0 : i64, scratch_operands = 6 : i64, tpu.core_type = #tpu.core_type<tc>, window_params = [{transform_indices = @transform_0, window_bounds = array<i64: 1, 64, 1>}, {pipeline_mode = #tpu.pipeline_mode<synchronous>, transform_indices = @transform_1, window_bounds = array<i64: 9, 8>}, {pipeline_mode = #tpu.pipeline_mode<synchronous>, transform_indices = @transform_2, window_bounds = array<i64: 1, 8>}, {pipeline_mode = #tpu.pipeline_mode<synchronous>, transform_indices = @transform_3, window_bounds = array<i64: 72, 16>}, {pipeline_mode = #tpu.pipeline_mode<synchronous>, transform_indices = @transform_4, window_bounds = array<i64: 1, 16>}, {pipeline_mode = #tpu.pipeline_mode<synchronous>, transform_indices = @transform_5, window_bounds = array<i64: 144, 32>}, {pipeline_mode = #tpu.pipeline_mode<synchronous>, transform_indices = @transform_6, window_bounds = array<i64: 1, 32>}, {pipeline_mode = #tpu.pipeline_mode<synchronous>, transform_indices = @transform_7, window_bounds = array<i64: 32, 10>}, {pipeline_mode = #tpu.pipeline_mode<synchronous>, transform_indices = @transform_8, window_bounds = array<i64: 1, 10>}, {pipeline_mode = #tpu.pipeline_mode<synchronous>, transform_indices = @transform_9, window_bounds = array<i64: 4, 16, 64>}, {pipeline_mode = #tpu.pipeline_mode<synchronous>, transform_indices = @transform_10, window_bounds = array<i64: 4, 4, 16>}, {transform_indices = @transform_11, window_bounds = array<i64: 1, 1, 10>}]} {
    %cst = arith.constant 0.000000e+00 : f32
    %0 = vector.broadcast %cst : f32 to vector<82x1xf32>
    %c0 = arith.constant 0 : index
    %c0_0 = arith.constant 0 : index
    %1 = vector.load %arg13[%c0, %c0_0] : memref<82x1xf32, #tpu.memory_space<vmem>>, vector<82x1xf32>
    tpu.vector_store %arg13[%c0, %c0_0], %0 {strides = array<i32>} : memref<82x1xf32, #tpu.memory_space<vmem>>, vector<82x1xf32>,
    %cst_1 = arith.constant 0.000000e+00 : f32
    %2 = vector.broadcast %cst_1 : f32 to vector<26x8xf32>
    %c0_2 = arith.constant 0 : index
    %c0_3 = arith.constant 0 : index
    %3 = vector.load %arg14[%c0_2, %c0_3] : memref<26x8xf32, #tpu.memory_space<vmem>>, vector<26x8xf32>
    tpu.vector_store %arg14[%c0_2, %c0_3], %2 {strides = array<i32>} : memref<26x8xf32, #tpu.memory_space<vmem>>, vector<26x8xf32>,
    %cst_4 = arith.constant 0.000000e+00 : f32
    %4 = vector.broadcast %cst_4 : f32 to vector<10x16xf32>
    %c0_5 = arith.constant 0 : index
    %c0_6 = arith.constant 0 : index
    %5 = vector.load %arg15[%c0_5, %c0_6] : memref<10x16xf32, #tpu.memory_space<vmem>>, vector<10x16xf32>
    tpu.vector_store %arg15[%c0_5, %c0_6], %4 {strides = array<i32>} : memref<10x16xf32, #tpu.memory_space<vmem>>, vector<10x16xf32>,
    %c0_7 = arith.constant 0 : index
    %c0_8 = arith.constant 0 : index
    %c0_9 = arith.constant 0 : index
    %6 = vector.load %arg1[%c0_7, %c0_8, %c0_9] : memref<1x64x1xf32, #tpu.memory_space<vmem>>, vector<1x64x1xf32>
    %7 = vector.shape_cast %6 : vector<1x64x1xf32> to vector<64x1xf32>
    %c9 = arith.constant 9 : index
    %c0_10 = arith.constant 0 : index
    %8 = vector.load %arg13[%c9, %c0_10] : memref<82x1xf32, #tpu.memory_space<vmem>>, vector<64x1xf32>
    tpu.vector_store %arg13[%c9, %c0_10], %7 {strides = array<i32>} : memref<82x1xf32, #tpu.memory_space<vmem>>, vector<64x1xf32>,
    %9 = tpu.iota {dimensions = array<i32: 0>} : vector<64x1xi32>
    %c8_i32 = arith.constant 8 : i32
    %c0_i32 = arith.constant 0 : i32
    %10 = arith.cmpi eq, %c8_i32, %c0_i32 : i32
    %c1_i32 = arith.constant 1 : i32
    %11 = arith.select %10, %c1_i32, %c8_i32 : i32
    %12 = vector.broadcast %11 : i32 to vector<64x1xi32>
    %13 = arith.remsi %9, %12 : vector<64x1xi32>
    %c0_i32_11 = arith.constant 0 : i32
    %14 = vector.broadcast %c0_i32_11 : i32 to vector<64x1xi32>
    %15 = arith.cmpi ne, %13, %14 : vector<64x1xi32>
    %c0_i32_12 = arith.constant 0 : i32
    %16 = vector.broadcast %c0_i32_12 : i32 to vector<64x1xi32>
    %17 = arith.cmpi slt, %13, %16 : vector<64x1xi32>
    %c0_i32_13 = arith.constant 0 : i32
    %18 = arith.cmpi slt, %11, %c0_i32_13 : i32
    %19 = vector.broadcast %18 : i1 to vector<64x1xi1>
    %20 = vector.broadcast %19 : vector<64x1xi1> to vector<64x1xi1>
    %21 = arith.xori %17, %20 : vector<64x1xi1>
    %22 = arith.andi %21, %15 : vector<64x1xi1>
    %23 = vector.broadcast %11 : i32 to vector<64x1xi32>
    %24 = arith.addi %13, %23 : vector<64x1xi32>
    %25 = arith.select %22, %24, %13 : vector<64x1xi1>, vector<64x1xi32>
    %c0_i32_14 = arith.constant 0 : i32
    %26 = vector.broadcast %c0_i32_14 : i32 to vector<64x1xi32>
    %27 = arith.cmpi ne, %25, %26 : vector<64x1xi32>
    %28 = arith.extui %27 : vector<64x1xi1> to vector<64x1xi32>
    %29 = arith.sitofp %28 : vector<64x1xi32> to vector<64x1xf32>
    %c7_i32 = arith.constant 7 : i32
    %30 = vector.broadcast %c7_i32 : i32 to vector<64x1xi32>
    %31 = arith.cmpi ne, %25, %30 : vector<64x1xi32>
    %32 = arith.extui %31 : vector<64x1xi1> to vector<64x1xi32>
    %33 = arith.sitofp %32 : vector<64x1xi32> to vector<64x1xf32>
    %c0_15 = arith.constant 0 : index
    %c0_16 = arith.constant 0 : index
    %34 = vector.load %arg13[%c0_15, %c0_16] : memref<82x1xf32, #tpu.memory_space<vmem>>, vector<64x1xf32>
    %35 = arith.mulf %34, %29 : vector<64x1xf32>
    %c0_17 = arith.constant 0 : index
    %c0_18 = arith.constant 0 : index
    %36 = vector.load %arg16[%c0_17, %c0_18] : memref<64x9xf32, #tpu.memory_space<vmem>>, vector<64x1xf32>
    tpu.vector_store %arg16[%c0_17, %c0_18], %35 {strides = array<i32>} : memref<64x9xf32, #tpu.memory_space<vmem>>, vector<64x1xf32>,
    %c1 = arith.constant 1 : index
    %c0_19 = arith.constant 0 : index
    %37 = vector.load %arg13[%c1, %c0_19] : memref<82x1xf32, #tpu.memory_space<vmem>>, vector<64x1xf32>
    %c0_20 = arith.constant 0 : index
    %c1_21 = arith.constant 1 : index
    %38 = vector.load %arg16[%c0_20, %c1_21] : memref<64x9xf32, #tpu.memory_space<vmem>>, vector<64x1xf32>
    tpu.vector_store %arg16[%c0_20, %c1_21], %37 {strides = array<i32>} : memref<64x9xf32, #tpu.memory_space<vmem>>, vector<64x1xf32>,
    %c2 = arith.constant 2 : index
    %c0_22 = arith.constant 0 : index
    %39 = vector.load %arg13[%c2, %c0_22] : memref<82x1xf32, #tpu.memory_space<vmem>>, vector<64x1xf32>
    %40 = arith.mulf %39, %33 : vector<64x1xf32>
    %c0_23 = arith.constant 0 : index
    %c2_24 = arith.constant 2 : index
    %41 = vector.load %arg16[%c0_23, %c2_24] : memref<64x9xf32, #tpu.memory_space<vmem>>, vector<64x1xf32>
    tpu.vector_store %arg16[%c0_23, %c2_24], %40 {strides = array<i32>} : memref<64x9xf32, #tpu.memory_space<vmem>>, vector<64x1xf32>,
    %c8 = arith.constant 8 : index
    %c0_25 = arith.constant 0 : index
    %42 = vector.load %arg13[%c8, %c0_25] : memref<82x1xf32, #tpu.memory_space<vmem>>, vector<64x1xf32>
    %43 = arith.mulf %42, %29 : vector<64x1xf32>
    %c0_26 = arith.constant 0 : index
    %c3 = arith.constant 3 : index
    %44 = vector.load %arg16[%c0_26, %c3] : memref<64x9xf32, #tpu.memory_space<vmem>>, vector<64x1xf32>
    tpu.vector_store %arg16[%c0_26, %c3], %43 {strides = array<i32>} : memref<64x9xf32, #tpu.memory_space<vmem>>, vector<64x1xf32>,
    %c9_27 = arith.constant 9 : index
    %c0_28 = arith.constant 0 : index
    %45 = vector.load %arg13[%c9_27, %c0_28] : memref<82x1xf32, #tpu.memory_space<vmem>>, vector<64x1xf32>
    %c0_29 = arith.constant 0 : index
    %c4 = arith.constant 4 : index
    %46 = vector.load %arg16[%c0_29, %c4] : memref<64x9xf32, #tpu.memory_space<vmem>>, vector<64x1xf32>
    tpu.vector_store %arg16[%c0_29, %c4], %45 {strides = array<i32>} : memref<64x9xf32, #tpu.memory_space<vmem>>, vector<64x1xf32>,
    %c10 = arith.constant 10 : index
    %c0_30 = arith.constant 0 : index
    %47 = vector.load %arg13[%c10, %c0_30] : memref<82x1xf32, #tpu.memory_space<vmem>>, vector<64x1xf32>
    %48 = arith.mulf %47, %33 : vector<64x1xf32>
    %c0_31 = arith.constant 0 : index
    %c5 = arith.constant 5 : index
    %49 = vector.load %arg16[%c0_31, %c5] : memref<64x9xf32, #tpu.memory_space<vmem>>, vector<64x1xf32>
    tpu.vector_store %arg16[%c0_31, %c5], %48 {strides = array<i32>} : memref<64x9xf32, #tpu.memory_space<vmem>>, vector<64x1xf32>,
    %c16 = arith.constant 16 : index
    %c0_32 = arith.constant 0 : index
    %50 = vector.load %arg13[%c16, %c0_32] : memref<82x1xf32, #tpu.memory_space<vmem>>, vector<64x1xf32>
    %51 = arith.mulf %50, %29 : vector<64x1xf32>
    %c0_33 = arith.constant 0 : index
    %c6 = arith.constant 6 : index
    %52 = vector.load %arg16[%c0_33, %c6] : memref<64x9xf32, #tpu.memory_space<vmem>>, vector<64x1xf32>
    tpu.vector_store %arg16[%c0_33, %c6], %51 {strides = array<i32>} : memref<64x9xf32, #tpu.memory_space<vmem>>, vector<64x1xf32>,
    %c17 = arith.constant 17 : index
    %c0_34 = arith.constant 0 : index
    %53 = vector.load %arg13[%c17, %c0_34] : memref<82x1xf32, #tpu.memory_space<vmem>>, vector<64x1xf32>
    %c0_35 = arith.constant 0 : index
    %c7 = arith.constant 7 : index
    %54 = vector.load %arg16[%c0_35, %c7] : memref<64x9xf32, #tpu.memory_space<vmem>>, vector<64x1xf32>
    tpu.vector_store %arg16[%c0_35, %c7], %53 {strides = array<i32>} : memref<64x9xf32, #tpu.memory_space<vmem>>, vector<64x1xf32>,
    %c18 = arith.constant 18 : index
    %c0_36 = arith.constant 0 : index
    %55 = vector.load %arg13[%c18, %c0_36] : memref<82x1xf32, #tpu.memory_space<vmem>>, vector<64x1xf32>
    %56 = arith.mulf %55, %33 : vector<64x1xf32>
    %c0_37 = arith.constant 0 : index
    %c8_38 = arith.constant 8 : index
    %57 = vector.load %arg16[%c0_37, %c8_38] : memref<64x9xf32, #tpu.memory_space<vmem>>, vector<64x1xf32>
    tpu.vector_store %arg16[%c0_37, %c8_38], %56 {strides = array<i32>} : memref<64x9xf32, #tpu.memory_space<vmem>>, vector<64x1xf32>,
    %c0_39 = arith.constant 0 : index
    %c0_40 = arith.constant 0 : index
    %58 = vector.load %arg16[%c0_39, %c0_40] : memref<64x9xf32, #tpu.memory_space<vmem>>, vector<64x9xf32>
    %c0_41 = arith.constant 0 : index
    %c0_42 = arith.constant 0 : index
    %59 = vector.load %arg2[%c0_41, %c0_42] : memref<9x8xf32, #tpu.memory_space<vmem>>, vector<9x8xf32>
    %cst_43 = arith.constant dense<0.000000e+00> : vector<64x8xf32>
    %60 = tpu.matmul %58, %59, %cst_43 {dimension_numbers = #tpu.dot_dimension_numbers<[1], [0], [0], [1], [0, 0, 1, 1], [], []>} : vector<64x9xf32>, vector<9x8xf32>, vector<64x8xf32> -> vector<64x8xf32>
    %c0_44 = arith.constant 0 : index
    %c0_45 = arith.constant 0 : index
    %61 = vector.load %arg3[%c0_44, %c0_45] : memref<1x8xf32, #tpu.memory_space<vmem>>, vector<1x8xf32>
    %62 = vector.broadcast %61 : vector<1x8xf32> to vector<64x8xf32>
    %63 = arith.addf %60, %62 : vector<64x8xf32>
    %cst_46 = arith.constant 0.000000e+00 : f32
    %64 = vector.broadcast %cst_46 : f32 to vector<64x8xf32>
    %65 = arith.maximumf %63, %64 : vector<64x8xf32>
    %c0_47 = arith.constant 0 : index
    %c0_48 = arith.constant 0 : index
    %c0_49 = arith.constant 0 : index
    %66 = vector.load %arg10[%c0_47, %c0_48, %c0_49] : memref<4x16x64xf32, #tpu.memory_space<vmem>>, vector<1x16x64xf32>
    %67 = vector.shape_cast %66 : vector<1x16x64xf32> to vector<16x64xf32>
    %cst_50 = arith.constant dense<0.000000e+00> : vector<16x8xf32>
    %68 = tpu.matmul %67, %65, %cst_50 {dimension_numbers = #tpu.dot_dimension_numbers<[1], [0], [0], [1], [0, 0, 1, 1], [], []>} : vector<16x64xf32>, vector<64x8xf32>, vector<16x8xf32> -> vector<16x8xf32>
    %c1_51 = arith.constant 1 : index
    %c0_52 = arith.constant 0 : index
    %c0_53 = arith.constant 0 : index
    %69 = vector.load %arg10[%c1_51, %c0_52, %c0_53] : memref<4x16x64xf32, #tpu.memory_space<vmem>>, vector<1x16x64xf32>
    %70 = vector.shape_cast %69 : vector<1x16x64xf32> to vector<16x64xf32>
    %cst_54 = arith.constant dense<0.000000e+00> : vector<16x8xf32>
    %71 = tpu.matmul %70, %65, %cst_54 {dimension_numbers = #tpu.dot_dimension_numbers<[1], [0], [0], [1], [0, 0, 1, 1], [], []>} : vector<16x64xf32>, vector<64x8xf32>, vector<16x8xf32> -> vector<16x8xf32>
    %72 = arith.maximumf %68, %71 : vector<16x8xf32>
    %c2_55 = arith.constant 2 : index
    %c0_56 = arith.constant 0 : index
    %c0_57 = arith.constant 0 : index
    %73 = vector.load %arg10[%c2_55, %c0_56, %c0_57] : memref<4x16x64xf32, #tpu.memory_space<vmem>>, vector<1x16x64xf32>
    %74 = vector.shape_cast %73 : vector<1x16x64xf32> to vector<16x64xf32>
    %cst_58 = arith.constant dense<0.000000e+00> : vector<16x8xf32>
    %75 = tpu.matmul %74, %65, %cst_58 {dimension_numbers = #tpu.dot_dimension_numbers<[1], [0], [0], [1], [0, 0, 1, 1], [], []>} : vector<16x64xf32>, vector<64x8xf32>, vector<16x8xf32> -> vector<16x8xf32>
    %76 = arith.maximumf %72, %75 : vector<16x8xf32>
    %c3_59 = arith.constant 3 : index
    %c0_60 = arith.constant 0 : index
    %c0_61 = arith.constant 0 : index
    %77 = vector.load %arg10[%c3_59, %c0_60, %c0_61] : memref<4x16x64xf32, #tpu.memory_space<vmem>>, vector<1x16x64xf32>
    %78 = vector.shape_cast %77 : vector<1x16x64xf32> to vector<16x64xf32>
    %cst_62 = arith.constant dense<0.000000e+00> : vector<16x8xf32>
    %79 = tpu.matmul %78, %65, %cst_62 {dimension_numbers = #tpu.dot_dimension_numbers<[1], [0], [0], [1], [0, 0, 1, 1], [], []>} : vector<16x64xf32>, vector<64x8xf32>, vector<16x8xf32> -> vector<16x8xf32>
    %80 = arith.maximumf %76, %79 : vector<16x8xf32>
    %c5_63 = arith.constant 5 : index
    %c0_64 = arith.constant 0 : index
    %81 = vector.load %arg14[%c5_63, %c0_64] : memref<26x8xf32, #tpu.memory_space<vmem>>, vector<16x8xf32>
    tpu.vector_store %arg14[%c5_63, %c0_64], %80 {strides = array<i32>} : memref<26x8xf32, #tpu.memory_space<vmem>>, vector<16x8xf32>,
    %82 = tpu.iota {dimensions = array<i32: 0>} : vector<16x1xi32>
    %c4_i32 = arith.constant 4 : i32
    %c0_i32_65 = arith.constant 0 : i32
    %83 = arith.cmpi eq, %c4_i32, %c0_i32_65 : i32
    %c1_i32_66 = arith.constant 1 : i32
    %84 = arith.select %83, %c1_i32_66, %c4_i32 : i32
    %85 = vector.broadcast %84 : i32 to vector<16x1xi32>
    %86 = arith.remsi %82, %85 : vector<16x1xi32>
    %c0_i32_67 = arith.constant 0 : i32
    %87 = vector.broadcast %c0_i32_67 : i32 to vector<16x1xi32>
    %88 = arith.cmpi ne, %86, %87 : vector<16x1xi32>
    %c0_i32_68 = arith.constant 0 : i32
    %89 = vector.broadcast %c0_i32_68 : i32 to vector<16x1xi32>
    %90 = arith.cmpi slt, %86, %89 : vector<16x1xi32>
    %c0_i32_69 = arith.constant 0 : i32
    %91 = arith.cmpi slt, %84, %c0_i32_69 : i32
    %92 = vector.broadcast %91 : i1 to vector<16x1xi1>
    %93 = vector.broadcast %92 : vector<16x1xi1> to vector<16x1xi1>
    %94 = arith.xori %90, %93 : vector<16x1xi1>
    %95 = arith.andi %94, %88 : vector<16x1xi1>
    %96 = vector.broadcast %84 : i32 to vector<16x1xi32>
    %97 = arith.addi %86, %96 : vector<16x1xi32>
    %98 = arith.select %95, %97, %86 : vector<16x1xi1>, vector<16x1xi32>
    %c0_i32_70 = arith.constant 0 : i32
    %99 = vector.broadcast %c0_i32_70 : i32 to vector<16x1xi32>
    %100 = arith.cmpi ne, %98, %99 : vector<16x1xi32>
    %101 = arith.extui %100 : vector<16x1xi1> to vector<16x1xi32>
    %102 = arith.sitofp %101 : vector<16x1xi32> to vector<16x1xf32>
    %c3_i32 = arith.constant 3 : i32
    %103 = vector.broadcast %c3_i32 : i32 to vector<16x1xi32>
    %104 = arith.cmpi ne, %98, %103 : vector<16x1xi32>
    %105 = arith.extui %104 : vector<16x1xi1> to vector<16x1xi32>
    %106 = arith.sitofp %105 : vector<16x1xi32> to vector<16x1xf32>
    %c0_71 = arith.constant 0 : index
    %c0_72 = arith.constant 0 : index
    %107 = vector.load %arg14[%c0_71, %c0_72] : memref<26x8xf32, #tpu.memory_space<vmem>>, vector<16x8xf32>
    %108 = vector.broadcast %102 : vector<16x1xf32> to vector<16x8xf32>
    %109 = arith.mulf %107, %108 : vector<16x8xf32>
    %c0_73 = arith.constant 0 : index
    %c0_74 = arith.constant 0 : index
    %110 = vector.load %arg17[%c0_73, %c0_74] : memref<16x72xf32, #tpu.memory_space<vmem>>, vector<16x8xf32>
    tpu.vector_store %arg17[%c0_73, %c0_74], %109 {strides = array<i32>} : memref<16x72xf32, #tpu.memory_space<vmem>>, vector<16x8xf32>,
    %c1_75 = arith.constant 1 : index
    %c0_76 = arith.constant 0 : index
    %111 = vector.load %arg14[%c1_75, %c0_76] : memref<26x8xf32, #tpu.memory_space<vmem>>, vector<16x8xf32>
    %c0_77 = arith.constant 0 : index
    %c8_78 = arith.constant 8 : index
    %112 = vector.load %arg17[%c0_77, %c8_78] : memref<16x72xf32, #tpu.memory_space<vmem>>, vector<16x8xf32>
    tpu.vector_store %arg17[%c0_77, %c8_78], %111 {strides = array<i32>} : memref<16x72xf32, #tpu.memory_space<vmem>>, vector<16x8xf32>,
    %c2_79 = arith.constant 2 : index
    %c0_80 = arith.constant 0 : index
    %113 = vector.load %arg14[%c2_79, %c0_80] : memref<26x8xf32, #tpu.memory_space<vmem>>, vector<16x8xf32>
    %114 = vector.broadcast %106 : vector<16x1xf32> to vector<16x8xf32>
    %115 = arith.mulf %113, %114 : vector<16x8xf32>
    %c0_81 = arith.constant 0 : index
    %c16_82 = arith.constant 16 : index
    %116 = vector.load %arg17[%c0_81, %c16_82] : memref<16x72xf32, #tpu.memory_space<vmem>>, vector<16x8xf32>
    tpu.vector_store %arg17[%c0_81, %c16_82], %115 {strides = array<i32>} : memref<16x72xf32, #tpu.memory_space<vmem>>, vector<16x8xf32>,
    %c4_83 = arith.constant 4 : index
    %c0_84 = arith.constant 0 : index
    %117 = vector.load %arg14[%c4_83, %c0_84] : memref<26x8xf32, #tpu.memory_space<vmem>>, vector<16x8xf32>
    %118 = vector.broadcast %102 : vector<16x1xf32> to vector<16x8xf32>
    %119 = arith.mulf %117, %118 : vector<16x8xf32>
    %c0_85 = arith.constant 0 : index
    %c24 = arith.constant 24 : index
    %120 = vector.load %arg17[%c0_85, %c24] : memref<16x72xf32, #tpu.memory_space<vmem>>, vector<16x8xf32>
    tpu.vector_store %arg17[%c0_85, %c24], %119 {strides = array<i32>} : memref<16x72xf32, #tpu.memory_space<vmem>>, vector<16x8xf32>,
    %c5_86 = arith.constant 5 : index
    %c0_87 = arith.constant 0 : index
    %121 = vector.load %arg14[%c5_86, %c0_87] : memref<26x8xf32, #tpu.memory_space<vmem>>, vector<16x8xf32>
    %c0_88 = arith.constant 0 : index
    %c32 = arith.constant 32 : index
    %122 = vector.load %arg17[%c0_88, %c32] : memref<16x72xf32, #tpu.memory_space<vmem>>, vector<16x8xf32>
    tpu.vector_store %arg17[%c0_88, %c32], %121 {strides = array<i32>} : memref<16x72xf32, #tpu.memory_space<vmem>>, vector<16x8xf32>,
    %c6_89 = arith.constant 6 : index
    %c0_90 = arith.constant 0 : index
    %123 = vector.load %arg14[%c6_89, %c0_90] : memref<26x8xf32, #tpu.memory_space<vmem>>, vector<16x8xf32>
    %124 = vector.broadcast %106 : vector<16x1xf32> to vector<16x8xf32>
    %125 = arith.mulf %123, %124 : vector<16x8xf32>
    %c0_91 = arith.constant 0 : index
    %c40 = arith.constant 40 : index
    %126 = vector.load %arg17[%c0_91, %c40] : memref<16x72xf32, #tpu.memory_space<vmem>>, vector<16x8xf32>
    tpu.vector_store %arg17[%c0_91, %c40], %125 {strides = array<i32>} : memref<16x72xf32, #tpu.memory_space<vmem>>, vector<16x8xf32>,
    %c8_92 = arith.constant 8 : index
    %c0_93 = arith.constant 0 : index
    %127 = vector.load %arg14[%c8_92, %c0_93] : memref<26x8xf32, #tpu.memory_space<vmem>>, vector<16x8xf32>
    %128 = vector.broadcast %102 : vector<16x1xf32> to vector<16x8xf32>
    %129 = arith.mulf %127, %128 : vector<16x8xf32>
    %c0_94 = arith.constant 0 : index
    %c48 = arith.constant 48 : index
    %130 = vector.load %arg17[%c0_94, %c48] : memref<16x72xf32, #tpu.memory_space<vmem>>, vector<16x8xf32>
    tpu.vector_store %arg17[%c0_94, %c48], %129 {strides = array<i32>} : memref<16x72xf32, #tpu.memory_space<vmem>>, vector<16x8xf32>,
    %c9_95 = arith.constant 9 : index
    %c0_96 = arith.constant 0 : index
    %131 = vector.load %arg14[%c9_95, %c0_96] : memref<26x8xf32, #tpu.memory_space<vmem>>, vector<16x8xf32>
    %c0_97 = arith.constant 0 : index
    %c56 = arith.constant 56 : index
    %132 = vector.load %arg17[%c0_97, %c56] : memref<16x72xf32, #tpu.memory_space<vmem>>, vector<16x8xf32>
    tpu.vector_store %arg17[%c0_97, %c56], %131 {strides = array<i32>} : memref<16x72xf32, #tpu.memory_space<vmem>>, vector<16x8xf32>,
    %c10_98 = arith.constant 10 : index
    %c0_99 = arith.constant 0 : index
    %133 = vector.load %arg14[%c10_98, %c0_99] : memref<26x8xf32, #tpu.memory_space<vmem>>, vector<16x8xf32>
    %134 = vector.broadcast %106 : vector<16x1xf32> to vector<16x8xf32>
    %135 = arith.mulf %133, %134 : vector<16x8xf32>
    %c0_100 = arith.constant 0 : index
    %c64 = arith.constant 64 : index
    %136 = vector.load %arg17[%c0_100, %c64] : memref<16x72xf32, #tpu.memory_space<vmem>>, vector<16x8xf32>
    tpu.vector_store %arg17[%c0_100, %c64], %135 {strides = array<i32>} : memref<16x72xf32, #tpu.memory_space<vmem>>, vector<16x8xf32>,
    %c0_101 = arith.constant 0 : index
    %c0_102 = arith.constant 0 : index
    %137 = vector.load %arg17[%c0_101, %c0_102] : memref<16x72xf32, #tpu.memory_space<vmem>>, vector<16x72xf32>
    %c0_103 = arith.constant 0 : index
    %c0_104 = arith.constant 0 : index
    %138 = vector.load %arg4[%c0_103, %c0_104] : memref<72x16xf32, #tpu.memory_space<vmem>>, vector<72x16xf32>
    %cst_105 = arith.constant dense<0.000000e+00> : vector<16x16xf32>
    %139 = tpu.matmul %137, %138, %cst_105 {dimension_numbers = #tpu.dot_dimension_numbers<[1], [0], [0], [1], [0, 0, 1, 1], [], []>} : vector<16x72xf32>, vector<72x16xf32>, vector<16x16xf32> -> vector<16x16xf32>
    %c0_106 = arith.constant 0 : index
    %c0_107 = arith.constant 0 : index
    %140 = vector.load %arg5[%c0_106, %c0_107] : memref<1x16xf32, #tpu.memory_space<vmem>>, vector<1x16xf32>
    %141 = vector.broadcast %140 : vector<1x16xf32> to vector<16x16xf32>
    %142 = arith.addf %139, %141 : vector<16x16xf32>
    %cst_108 = arith.constant 0.000000e+00 : f32
    %143 = vector.broadcast %cst_108 : f32 to vector<16x16xf32>
    %144 = arith.maximumf %142, %143 : vector<16x16xf32>
    %c0_109 = arith.constant 0 : index
    %c0_110 = arith.constant 0 : index
    %c0_111 = arith.constant 0 : index
    %145 = vector.load %arg11[%c0_109, %c0_110, %c0_111] : memref<4x4x16xf32, #tpu.memory_space<vmem>>, vector<1x4x16xf32>
    %146 = vector.shape_cast %145 : vector<1x4x16xf32> to vector<4x16xf32>
    %cst_112 = arith.constant dense<0.000000e+00> : vector<4x16xf32>
    %147 = tpu.matmul %146, %144, %cst_112 {dimension_numbers = #tpu.dot_dimension_numbers<[1], [0], [0], [1], [0, 0, 1, 1], [], []>} : vector<4x16xf32>, vector<16x16xf32>, vector<4x16xf32> -> vector<4x16xf32>
    %c1_113 = arith.constant 1 : index
    %c0_114 = arith.constant 0 : index
    %c0_115 = arith.constant 0 : index
    %148 = vector.load %arg11[%c1_113, %c0_114, %c0_115] : memref<4x4x16xf32, #tpu.memory_space<vmem>>, vector<1x4x16xf32>
    %149 = vector.shape_cast %148 : vector<1x4x16xf32> to vector<4x16xf32>
    %cst_116 = arith.constant dense<0.000000e+00> : vector<4x16xf32>
    %150 = tpu.matmul %149, %144, %cst_116 {dimension_numbers = #tpu.dot_dimension_numbers<[1], [0], [0], [1], [0, 0, 1, 1], [], []>} : vector<4x16xf32>, vector<16x16xf32>, vector<4x16xf32> -> vector<4x16xf32>
    %151 = arith.maximumf %147, %150 : vector<4x16xf32>
    %c2_117 = arith.constant 2 : index
    %c0_118 = arith.constant 0 : index
    %c0_119 = arith.constant 0 : index
    %152 = vector.load %arg11[%c2_117, %c0_118, %c0_119] : memref<4x4x16xf32, #tpu.memory_space<vmem>>, vector<1x4x16xf32>
    %153 = vector.shape_cast %152 : vector<1x4x16xf32> to vector<4x16xf32>
    %cst_120 = arith.constant dense<0.000000e+00> : vector<4x16xf32>
    %154 = tpu.matmul %153, %144, %cst_120 {dimension_numbers = #tpu.dot_dimension_numbers<[1], [0], [0], [1], [0, 0, 1, 1], [], []>} : vector<4x16xf32>, vector<16x16xf32>, vector<4x16xf32> -> vector<4x16xf32>
    %155 = arith.maximumf %151, %154 : vector<4x16xf32>
    %c3_121 = arith.constant 3 : index
    %c0_122 = arith.constant 0 : index
    %c0_123 = arith.constant 0 : index
    %156 = vector.load %arg11[%c3_121, %c0_122, %c0_123] : memref<4x4x16xf32, #tpu.memory_space<vmem>>, vector<1x4x16xf32>
    %157 = vector.shape_cast %156 : vector<1x4x16xf32> to vector<4x16xf32>
    %cst_124 = arith.constant dense<0.000000e+00> : vector<4x16xf32>
    %158 = tpu.matmul %157, %144, %cst_124 {dimension_numbers = #tpu.dot_dimension_numbers<[1], [0], [0], [1], [0, 0, 1, 1], [], []>} : vector<4x16xf32>, vector<16x16xf32>, vector<4x16xf32> -> vector<4x16xf32>
    %159 = arith.maximumf %155, %158 : vector<4x16xf32>
    %c3_125 = arith.constant 3 : index
    %c0_126 = arith.constant 0 : index
    %160 = vector.load %arg15[%c3_125, %c0_126] : memref<10x16xf32, #tpu.memory_space<vmem>>, vector<4x16xf32>
    tpu.vector_store %arg15[%c3_125, %c0_126], %159 {strides = array<i32>} : memref<10x16xf32, #tpu.memory_space<vmem>>, vector<4x16xf32>,
    %161 = tpu.iota {dimensions = array<i32: 0>} : vector<4x1xi32>
    %c2_i32 = arith.constant 2 : i32
    %c0_i32_127 = arith.constant 0 : i32
    %162 = arith.cmpi eq, %c2_i32, %c0_i32_127 : i32
    %c1_i32_128 = arith.constant 1 : i32
    %163 = arith.select %162, %c1_i32_128, %c2_i32 : i32
    %164 = vector.broadcast %163 : i32 to vector<4x1xi32>
    %165 = arith.remsi %161, %164 : vector<4x1xi32>
    %c0_i32_129 = arith.constant 0 : i32
    %166 = vector.broadcast %c0_i32_129 : i32 to vector<4x1xi32>
    %167 = arith.cmpi ne, %165, %166 : vector<4x1xi32>
    %c0_i32_130 = arith.constant 0 : i32
    %168 = vector.broadcast %c0_i32_130 : i32 to vector<4x1xi32>
    %169 = arith.cmpi slt, %165, %168 : vector<4x1xi32>
    %c0_i32_131 = arith.constant 0 : i32
    %170 = arith.cmpi slt, %163, %c0_i32_131 : i32
    %171 = vector.broadcast %170 : i1 to vector<4x1xi1>
    %172 = vector.broadcast %171 : vector<4x1xi1> to vector<4x1xi1>
    %173 = arith.xori %169, %172 : vector<4x1xi1>
    %174 = arith.andi %173, %167 : vector<4x1xi1>
    %175 = vector.broadcast %163 : i32 to vector<4x1xi32>
    %176 = arith.addi %165, %175 : vector<4x1xi32>
    %177 = arith.select %174, %176, %165 : vector<4x1xi1>, vector<4x1xi32>
    %c0_i32_132 = arith.constant 0 : i32
    %178 = vector.broadcast %c0_i32_132 : i32 to vector<4x1xi32>
    %179 = arith.cmpi ne, %177, %178 : vector<4x1xi32>
    %180 = arith.extui %179 : vector<4x1xi1> to vector<4x1xi32>
    %181 = arith.sitofp %180 : vector<4x1xi32> to vector<4x1xf32>
    %c1_i32_133 = arith.constant 1 : i32
    %182 = vector.broadcast %c1_i32_133 : i32 to vector<4x1xi32>
    %183 = arith.cmpi ne, %177, %182 : vector<4x1xi32>
    %184 = arith.extui %183 : vector<4x1xi1> to vector<4x1xi32>
    %185 = arith.sitofp %184 : vector<4x1xi32> to vector<4x1xf32>
    %c0_134 = arith.constant 0 : index
    %c0_135 = arith.constant 0 : index
    %186 = vector.load %arg15[%c0_134, %c0_135] : memref<10x16xf32, #tpu.memory_space<vmem>>, vector<4x16xf32>
    %187 = vector.broadcast %181 : vector<4x1xf32> to vector<4x16xf32>
    %188 = arith.mulf %186, %187 : vector<4x16xf32>
    %c0_136 = arith.constant 0 : index
    %c0_137 = arith.constant 0 : index
    %189 = vector.load %arg18[%c0_136, %c0_137] : memref<4x144xf32, #tpu.memory_space<vmem>>, vector<4x16xf32>
    tpu.vector_store %arg18[%c0_136, %c0_137], %188 {strides = array<i32>} : memref<4x144xf32, #tpu.memory_space<vmem>>, vector<4x16xf32>,
    %c1_138 = arith.constant 1 : index
    %c0_139 = arith.constant 0 : index
    %190 = vector.load %arg15[%c1_138, %c0_139] : memref<10x16xf32, #tpu.memory_space<vmem>>, vector<4x16xf32>
    %c0_140 = arith.constant 0 : index
    %c16_141 = arith.constant 16 : index
    %191 = vector.load %arg18[%c0_140, %c16_141] : memref<4x144xf32, #tpu.memory_space<vmem>>, vector<4x16xf32>
    tpu.vector_store %arg18[%c0_140, %c16_141], %190 {strides = array<i32>} : memref<4x144xf32, #tpu.memory_space<vmem>>, vector<4x16xf32>,
    %c2_142 = arith.constant 2 : index
    %c0_143 = arith.constant 0 : index
    %192 = vector.load %arg15[%c2_142, %c0_143] : memref<10x16xf32, #tpu.memory_space<vmem>>, vector<4x16xf32>
    %193 = vector.broadcast %185 : vector<4x1xf32> to vector<4x16xf32>
    %194 = arith.mulf %192, %193 : vector<4x16xf32>
    %c0_144 = arith.constant 0 : index
    %c32_145 = arith.constant 32 : index
    %195 = vector.load %arg18[%c0_144, %c32_145] : memref<4x144xf32, #tpu.memory_space<vmem>>, vector<4x16xf32>
    tpu.vector_store %arg18[%c0_144, %c32_145], %194 {strides = array<i32>} : memref<4x144xf32, #tpu.memory_space<vmem>>, vector<4x16xf32>,
    %c2_146 = arith.constant 2 : index
    %c0_147 = arith.constant 0 : index
    %196 = vector.load %arg15[%c2_146, %c0_147] : memref<10x16xf32, #tpu.memory_space<vmem>>, vector<4x16xf32>
    %197 = vector.broadcast %181 : vector<4x1xf32> to vector<4x16xf32>
    %198 = arith.mulf %196, %197 : vector<4x16xf32>
    %c0_148 = arith.constant 0 : index
    %c48_149 = arith.constant 48 : index
    %199 = vector.load %arg18[%c0_148, %c48_149] : memref<4x144xf32, #tpu.memory_space<vmem>>, vector<4x16xf32>
    tpu.vector_store %arg18[%c0_148, %c48_149], %198 {strides = array<i32>} : memref<4x144xf32, #tpu.memory_space<vmem>>, vector<4x16xf32>,
    %c3_150 = arith.constant 3 : index
    %c0_151 = arith.constant 0 : index
    %200 = vector.load %arg15[%c3_150, %c0_151] : memref<10x16xf32, #tpu.memory_space<vmem>>, vector<4x16xf32>
    %c0_152 = arith.constant 0 : index
    %c64_153 = arith.constant 64 : index
    %201 = vector.load %arg18[%c0_152, %c64_153] : memref<4x144xf32, #tpu.memory_space<vmem>>, vector<4x16xf32>
    tpu.vector_store %arg18[%c0_152, %c64_153], %200 {strides = array<i32>} : memref<4x144xf32, #tpu.memory_space<vmem>>, vector<4x16xf32>,
    %c4_154 = arith.constant 4 : index
    %c0_155 = arith.constant 0 : index
    %202 = vector.load %arg15[%c4_154, %c0_155] : memref<10x16xf32, #tpu.memory_space<vmem>>, vector<4x16xf32>
    %203 = vector.broadcast %185 : vector<4x1xf32> to vector<4x16xf32>
    %204 = arith.mulf %202, %203 : vector<4x16xf32>
    %c0_156 = arith.constant 0 : index
    %c80 = arith.constant 80 : index
    %205 = vector.load %arg18[%c0_156, %c80] : memref<4x144xf32, #tpu.memory_space<vmem>>, vector<4x16xf32>
    tpu.vector_store %arg18[%c0_156, %c80], %204 {strides = array<i32>} : memref<4x144xf32, #tpu.memory_space<vmem>>, vector<4x16xf32>,
    %c4_157 = arith.constant 4 : index
    %c0_158 = arith.constant 0 : index
    %206 = vector.load %arg15[%c4_157, %c0_158] : memref<10x16xf32, #tpu.memory_space<vmem>>, vector<4x16xf32>
    %207 = vector.broadcast %181 : vector<4x1xf32> to vector<4x16xf32>
    %208 = arith.mulf %206, %207 : vector<4x16xf32>
    %c0_159 = arith.constant 0 : index
    %c96 = arith.constant 96 : index
    %209 = vector.load %arg18[%c0_159, %c96] : memref<4x144xf32, #tpu.memory_space<vmem>>, vector<4x16xf32>
    tpu.vector_store %arg18[%c0_159, %c96], %208 {strides = array<i32>} : memref<4x144xf32, #tpu.memory_space<vmem>>, vector<4x16xf32>,
    %c5_160 = arith.constant 5 : index
    %c0_161 = arith.constant 0 : index
    %210 = vector.load %arg15[%c5_160, %c0_161] : memref<10x16xf32, #tpu.memory_space<vmem>>, vector<4x16xf32>
    %c0_162 = arith.constant 0 : index
    %c112 = arith.constant 112 : index
    %211 = vector.load %arg18[%c0_162, %c112] : memref<4x144xf32, #tpu.memory_space<vmem>>, vector<4x16xf32>
    tpu.vector_store %arg18[%c0_162, %c112], %210 {strides = array<i32>} : memref<4x144xf32, #tpu.memory_space<vmem>>, vector<4x16xf32>,
    %c6_163 = arith.constant 6 : index
    %c0_164 = arith.constant 0 : index
    %212 = vector.load %arg15[%c6_163, %c0_164] : memref<10x16xf32, #tpu.memory_space<vmem>>, vector<4x16xf32>
    %213 = vector.broadcast %185 : vector<4x1xf32> to vector<4x16xf32>
    %214 = arith.mulf %212, %213 : vector<4x16xf32>
    %c0_165 = arith.constant 0 : index
    %c128 = arith.constant 128 : index
    %215 = vector.load %arg18[%c0_165, %c128] : memref<4x144xf32, #tpu.memory_space<vmem>>, vector<4x16xf32>
    tpu.vector_store %arg18[%c0_165, %c128], %214 {strides = array<i32>} : memref<4x144xf32, #tpu.memory_space<vmem>>, vector<4x16xf32>,
    %c0_166 = arith.constant 0 : index
    %c0_167 = arith.constant 0 : index
    %216 = vector.load %arg18[%c0_166, %c0_167] : memref<4x144xf32, #tpu.memory_space<vmem>>, vector<4x144xf32>
    %c0_168 = arith.constant 0 : index
    %c0_169 = arith.constant 0 : index
    %217 = vector.load %arg6[%c0_168, %c0_169] : memref<144x32xf32, #tpu.memory_space<vmem>>, vector<144x32xf32>
    %cst_170 = arith.constant dense<0.000000e+00> : vector<4x32xf32>
    %218 = tpu.matmul %216, %217, %cst_170 {dimension_numbers = #tpu.dot_dimension_numbers<[1], [0], [0], [1], [0, 0, 1, 1], [], []>} : vector<4x144xf32>, vector<144x32xf32>, vector<4x32xf32> -> vector<4x32xf32>
    %c0_171 = arith.constant 0 : index
    %c0_172 = arith.constant 0 : index
    %219 = vector.load %arg7[%c0_171, %c0_172] : memref<1x32xf32, #tpu.memory_space<vmem>>, vector<1x32xf32>
    %220 = vector.broadcast %219 : vector<1x32xf32> to vector<4x32xf32>
    %221 = arith.addf %218, %220 : vector<4x32xf32>
    %cst_173 = arith.constant 0.000000e+00 : f32
    %222 = vector.broadcast %cst_173 : f32 to vector<4x32xf32>
    %223 = arith.maximumf %221, %222 : vector<4x32xf32>
    %cst_174 = arith.constant dense<0xFF800000> : vector<32xf32>
    %224 = vector.multi_reduction <maximumf>, %223, %cst_174 [0] : vector<4x32xf32> to vector<32xf32>
    %225 = vector.shape_cast %224 : vector<32xf32> to vector<1x32xf32>
    %c0_175 = arith.constant 0 : index
    %c0_176 = arith.constant 0 : index
    %226 = vector.load %arg8[%c0_175, %c0_176] : memref<32x10xf32, #tpu.memory_space<vmem>>, vector<32x10xf32>
    %cst_177 = arith.constant dense<0.000000e+00> : vector<1x10xf32>
    %227 = tpu.matmul %225, %226, %cst_177 {dimension_numbers = #tpu.dot_dimension_numbers<[1], [0], [0], [1], [0, 0, 1, 1], [], []>} : vector<1x32xf32>, vector<32x10xf32>, vector<1x10xf32> -> vector<1x10xf32>
    %c0_178 = arith.constant 0 : index
    %c0_179 = arith.constant 0 : index
    %228 = vector.load %arg9[%c0_178, %c0_179] : memref<1x10xf32, #tpu.memory_space<vmem>>, vector<1x10xf32>
    %229 = arith.addf %227, %228 : vector<1x10xf32>
    %c0_180 = arith.constant 0 : index
    %c0_181 = arith.constant 0 : index
    %c0_182 = arith.constant 0 : index
    %230 = vector.load %arg12[%c0_180, %c0_181, %c0_182] : memref<1x1x10xf32, #tpu.memory_space<vmem>>, vector<1x1x10xf32>
    %231 = vector.shape_cast %230 : vector<1x1x10xf32> to vector<1x10xf32>
    %232 = vector.shape_cast %229 : vector<1x10xf32> to vector<1x1x10xf32>
    tpu.vector_store %arg12[%c0_180, %c0_181, %c0_182], %232 {strides = array<i32>} : memref<1x1x10xf32, #tpu.memory_space<vmem>>, vector<1x1x10xf32>,
    return
  }
  func.func @transform_0(%arg0: i32) -> (i32, i32, i32) {
    %c0_i32 = arith.constant 0 : i32
    %c0_i32_0 = arith.constant 0 : i32
    %c0_i32_1 = arith.constant 0 : i32
    return %arg0, %c0_i32, %c0_i32_0 : i32, i32, i32
  }
  func.func @transform_1(%arg0: i32) -> (i32, i32) {
    %c0_i32 = arith.constant 0 : i32
    %c0_i32_0 = arith.constant 0 : i32
    %c0_i32_1 = arith.constant 0 : i32
    return %c0_i32, %c0_i32_0 : i32, i32
  }
  func.func @transform_2(%arg0: i32) -> (i32, i32) {
    %c0_i32 = arith.constant 0 : i32
    %c0_i32_0 = arith.constant 0 : i32
    %c0_i32_1 = arith.constant 0 : i32
    return %c0_i32, %c0_i32_0 : i32, i32
  }
  func.func @transform_3(%arg0: i32) -> (i32, i32) {
    %c0_i32 = arith.constant 0 : i32
    %c0_i32_0 = arith.constant 0 : i32
    %c0_i32_1 = arith.constant 0 : i32
    return %c0_i32, %c0_i32_0 : i32, i32
  }
  func.func @transform_4(%arg0: i32) -> (i32, i32) {
    %c0_i32 = arith.constant 0 : i32
    %c0_i32_0 = arith.constant 0 : i32
    %c0_i32_1 = arith.constant 0 : i32
    return %c0_i32, %c0_i32_0 : i32, i32
  }
  func.func @transform_5(%arg0: i32) -> (i32, i32) {
    %c0_i32 = arith.constant 0 : i32
    %c0_i32_0 = arith.constant 0 : i32
    %c0_i32_1 = arith.constant 0 : i32
    return %c0_i32, %c0_i32_0 : i32, i32
  }
  func.func @transform_6(%arg0: i32) -> (i32, i32) {
    %c0_i32 = arith.constant 0 : i32
    %c0_i32_0 = arith.constant 0 : i32
    %c0_i32_1 = arith.constant 0 : i32
    return %c0_i32, %c0_i32_0 : i32, i32
  }
  func.func @transform_7(%arg0: i32) -> (i32, i32) {
    %c0_i32 = arith.constant 0 : i32
    %c0_i32_0 = arith.constant 0 : i32
    %c0_i32_1 = arith.constant 0 : i32
    return %c0_i32, %c0_i32_0 : i32, i32
  }
  func.func @transform_8(%arg0: i32) -> (i32, i32) {
    %c0_i32 = arith.constant 0 : i32
    %c0_i32_0 = arith.constant 0 : i32
    %c0_i32_1 = arith.constant 0 : i32
    return %c0_i32, %c0_i32_0 : i32, i32
  }
  func.func @transform_9(%arg0: i32) -> (i32, i32, i32) {
    %c0_i32 = arith.constant 0 : i32
    %c0_i32_0 = arith.constant 0 : i32
    %c0_i32_1 = arith.constant 0 : i32
    %c0_i32_2 = arith.constant 0 : i32
    return %c0_i32, %c0_i32_0, %c0_i32_1 : i32, i32, i32
  }
  func.func @transform_10(%arg0: i32) -> (i32, i32, i32) {
    %c0_i32 = arith.constant 0 : i32
    %c0_i32_0 = arith.constant 0 : i32
    %c0_i32_1 = arith.constant 0 : i32
    %c0_i32_2 = arith.constant 0 : i32
    return %c0_i32, %c0_i32_0, %c0_i32_1 : i32, i32, i32
  }
  func.func @transform_11(%arg0: i32) -> (i32, i32, i32) {
    %c0_i32 = arith.constant 0 : i32
    %c0_i32_0 = arith.constant 0 : i32
    %c0_i32_1 = arith.constant 0 : i32
    return %arg0, %c0_i32, %c0_i32_0 : i32, i32, i32
  }
}

</mosaic_0001>

<llo_original>
// kernel: _lambda_.1
$region0: #{_lambda_.1}
  #allocation0 [shape = 'u32[]', space=smem, size = 0x4, offset = 0x4, fixed_abs, tag = 'smem constant byte address 0x4 - core index']
  #allocation1 [shape = 'u32[144,128]{1,0:T(1,128)}', space=vmem, size = 0x12000, scoped, tag = 'internal scratch']
  #allocation2 [shape = 'f32[82,1]{1,0:T(8,128)}', space=vmem, size = 0xb000, scoped, tag = 'scratch operand']
  #allocation3 [shape = 'f32[26,8]{1,0:T(8,128)}', space=vmem, size = 0x4000, scoped, tag = 'scratch operand']
  #allocation4 [shape = 'f32[10,16]{1,0:T(8,128)}', space=vmem, size = 0x2000, scoped, tag = 'scratch operand']
  #allocation5 [shape = 'f32[64,9]{1,0:T(8,128)}', space=vmem, size = 0x8000, scoped, tag = 'scratch operand']
  #allocation6 [shape = 'f32[16,72]{1,0:T(8,128)}', space=vmem, size = 0x2000, scoped, tag = 'scratch operand']
  #allocation7 [shape = 'f32[4,144]{1,0:T(4,128)}', space=vmem, size = 0x1000, scoped, tag = 'scratch operand']
  %s0 = inlined_call_operand.vmem [shape: f32[2,64,1], index: 0, kind: input, shape index: {}]
  %s1 = inlined_call_operand.vmem [shape: f32[9,8], index: 1, kind: input, shape index: {}]
  %s2 = inlined_call_operand.vmem [shape: f32[1,8], index: 2, kind: input, shape index: {}]
  %s3 = inlined_call_operand.vmem [shape: f32[72,16], index: 3, kind: input, shape index: {}]
  %s4 = inlined_call_operand.vmem [shape: f32[1,16], index: 4, kind: input, shape index: {}]
  %s5 = inlined_call_operand.vmem [shape: f32[144,32], index: 5, kind: input, shape index: {}]
  %s6 = inlined_call_operand.vmem [shape: f32[1,32], index: 6, kind: input, shape index: {}]
  %s7 = inlined_call_operand.vmem [shape: f32[32,10], index: 7, kind: input, shape index: {}]
  %s8 = inlined_call_operand.vmem [shape: f32[1,10], index: 8, kind: input, shape index: {}]
  %s9 = inlined_call_operand.vmem [shape: f32[4,16,64], index: 9, kind: input, shape index: {}]
  %s10 = inlined_call_operand.vmem [shape: f32[4,4,16], index: 10, kind: input, shape index: {}]
  %s11 = inlined_call_operand.hbm [shape: f32[2,1,10], index: 11, kind: output, shape index: {}]
  %s12 = sld [smem:[#allocation0]]
  $region77: #{_lambda_.1} parent=0
    _
  %s14 = ssub.s32 1, %s12
  %s15 = scalar_select 0, %s14, %s12
  $region1: #{_lambda_.1} parent=0
    #allocation8 [shape = 'u8[1024]{0}', space=vmem, size = 0x400, scoped, tag = 'output window, operand 0']
    #allocation9 [shape = 's32[2]{0}', space=sflag, size = 0x8, scoped, tag = 'scoped memory for _lambda_.1']
    %16 = vsyncpa [#allocation9], 0
    %s17 = scalar_lea.sflag [#allocation9], 1
    %18 = vsyncpa %s17, 0
    loop: start=0, step=1, limit=4
    $region2: #{_lambda_.1} parent=1 // loop_pre_header
      _
    $region3: #{_lambda_.1} parent=1 // loop_header
      %s20 = sphi 0, %s24
      %p21 = scmp.ge.s32.totalorder %s20, 4
      %s30 = sphi 0, %s32
      %s33 = sphi 0, %s30
      %s34 = sphi 0, %s33
      %s50 = sphi 0, %s34
      %s54 = sphi 0, %s54
      %s56 = sphi 0, %s54
      %s57 = sphi 0, %s56
      %s71 = sphi 0, %s57
      %s75 = sphi 0, %s75
      %s77 = sphi 0, %s75
      %s78 = sphi 0, %s77
      %s92 = sphi 0, %s78
      %s96 = sphi 0, %s96
      %s98 = sphi 0, %s96
      %s99 = sphi 0, %s98
      %s113 = sphi 0, %s99
      %s117 = sphi 0, %s117
      %s119 = sphi 0, %s117
      %s120 = sphi 0, %s119
      %s134 = sphi 0, %s120
      %s138 = sphi 0, %s138
      %s140 = sphi 0, %s138
      %s141 = sphi 0, %s140
      %s155 = sphi 0, %s141
      %s159 = sphi 0, %s159
      %s161 = sphi 0, %s159
      %s162 = sphi 0, %s161
      %s176 = sphi 0, %s162
      %s180 = sphi 0, %s180
      %s182 = sphi 0, %s180
      %s183 = sphi 0, %s182
      %s197 = sphi 0, %s183
      %s201 = sphi 0, %s201
      %s203 = sphi 0, %s201
      %s204 = sphi 0, %s203
      %s218 = sphi 0, %s204
      %s222 = sphi 0, %s222
      %s224 = sphi 0, %s222
      %s225 = sphi 0, %s224
      %s239 = sphi 0, %s225
      %s243 = sphi 0, %s243
      %s245 = sphi 0, %s243
      %s246 = sphi 0, %s245
      %s260 = sphi 0, %s246
      %s266 = sphi 0, %s268
      %s269 = sphi 0, %s266
      %s270 = sphi 0, %s269
      %s286 = sphi 0, %s270
    $region4: #{_lambda_.1} parent=1 // loop_header_branch
      %23 = sbr.rel (%p21) target = $region8
    $region5: #{_lambda_.1} parent=1 // loop_body
      %s25 = ssub.s32 %s20, 1
      %s26 = ssub.s32 %s20, 2
      %s27 = sadd.s32 %s20, 1
      %s28 = ssub.s32 %s20, %s27
      %p29 = scmp.eq.s32.totalorder %s28, 0
      %s31 = sadd.s32 %s30, 1
      %s32 = scalar_select %p29, %s30, %s31
      %p35 = pneg %p29
      %p36 = scmp.eq.s32.totalorder %s20, 1
      %p37 = por %p35, %p36
      %p38 = scmp.ne.s32.totalorder %s30, %s33
      %p39 = scmp.eq.s32.totalorder %s20, 0
      %p40 = por %p38, %p39
      %p41 = scmp.ne.s32.totalorder %s30, %s33
      %p42 = scmp.eq.s32.totalorder %s25, 1
      %p43 = por %p41, %p42
      %p44 = scmp.ne.s32.totalorder %s33, %s34
      %p45 = scmp.eq.s32.totalorder %s25, 0
      %p46 = por %p44, %p45
      %p47 = scmp.ne.s32.totalorder %s33, %s34
      %p48 = scmp.eq.s32.totalorder %s26, 1
      %p49 = por %p47, %p48
      %p51 = scmp.ne.s32.totalorder %s34, %s50
      %p52 = scmp.eq.s32.totalorder %s26, 0
      %p53 = por %p51, %p52
      %s55 = sadd.s32 %s54, 1
      %p58 = scmp.eq.s32.totalorder %s20, 1
      %p59 = scmp.ne.s32.totalorder %s54, %s56
      %p60 = scmp.eq.s32.totalorder %s20, 0
      %p61 = por %p59, %p60
      %p62 = scmp.ne.s32.totalorder %s54, %s56
      %p63 = scmp.eq.s32.totalorder %s25, 1
      %p64 = por %p62, %p63
      %p65 = scmp.ne.s32.totalorder %s56, %s57
      %p66 = scmp.eq.s32.totalorder %s25, 0
      %p67 = por %p65, %p66
      %p68 = scmp.ne.s32.totalorder %s56, %s57
      %p69 = scmp.eq.s32.totalorder %s26, 1
      %p70 = por %p68, %p69
      %p72 = scmp.ne.s32.totalorder %s57, %s71
      %p73 = scmp.eq.s32.totalorder %s26, 0
      %p74 = por %p72, %p73
      %s76 = sadd.s32 %s75, 1
      %p79 = scmp.eq.s32.totalorder %s20, 1
      %p80 = scmp.ne.s32.totalorder %s75, %s77
      %p81 = scmp.eq.s32.totalorder %s20, 0
      %p82 = por %p80, %p81
      %p83 = scmp.ne.s32.totalorder %s75, %s77
      %p84 = scmp.eq.s32.totalorder %s25, 1
      %p85 = por %p83, %p84
      %p86 = scmp.ne.s32.totalorder %s77, %s78
      %p87 = scmp.eq.s32.totalorder %s25, 0
      %p88 = por %p86, %p87
      %p89 = scmp.ne.s32.totalorder %s77, %s78
      %p90 = scmp.eq.s32.totalorder %s26, 1
      %p91 = por %p89, %p90
      %p93 = scmp.ne.s32.totalorder %s78, %s92
      %p94 = scmp.eq.s32.totalorder %s26, 0
      %p95 = por %p93, %p94
      %s97 = sadd.s32 %s96, 1
      %p100 = scmp.eq.s32.totalorder %s20, 1
      %p101 = scmp.ne.s32.totalorder %s96, %s98
      %p102 = scmp.eq.s32.totalorder %s20, 0
      %p103 = por %p101, %p102
      %p104 = scmp.ne.s32.totalorder %s96, %s98
      %p105 = scmp.eq.s32.totalorder %s25, 1
      %p106 = por %p104, %p105
      %p107 = scmp.ne.s32.totalorder %s98, %s99
      %p108 = scmp.eq.s32.totalorder %s25, 0
      %p109 = por %p107, %p108
      %p110 = scmp.ne.s32.totalorder %s98, %s99
      %p111 = scmp.eq.s32.totalorder %s26, 1
      %p112 = por %p110, %p111
      %p114 = scmp.ne.s32.totalorder %s99, %s113
      %p115 = scmp.eq.s32.totalorder %s26, 0
      %p116 = por %p114, %p115
      %s118 = sadd.s32 %s117, 1
      %p121 = scmp.eq.s32.totalorder %s20, 1
      %p122 = scmp.ne.s32.totalorder %s117, %s119
      %p123 = scmp.eq.s32.totalorder %s20, 0
      %p124 = por %p122, %p123
      %p125 = scmp.ne.s32.totalorder %s117, %s119
      %p126 = scmp.eq.s32.totalorder %s25, 1
      %p127 = por %p125, %p126
      %p128 = scmp.ne.s32.totalorder %s119, %s120
      %p129 = scmp.eq.s32.totalorder %s25, 0
      %p130 = por %p128, %p129
      %p131 = scmp.ne.s32.totalorder %s119, %s120
      %p132 = scmp.eq.s32.totalorder %s26, 1
      %p133 = por %p131, %p132
      %p135 = scmp.ne.s32.totalorder %s120, %s134
      %p136 = scmp.eq.s32.totalorder %s26, 0
      %p137 = por %p135, %p136
      %s139 = sadd.s32 %s138, 1
      %p142 = scmp.eq.s32.totalorder %s20, 1
      %p143 = scmp.ne.s32.totalorder %s138, %s140
      %p144 = scmp.eq.s32.totalorder %s20, 0
      %p145 = por %p143, %p144
      %p146 = scmp.ne.s32.totalorder %s138, %s140
      %p147 = scmp.eq.s32.totalorder %s25, 1
      %p148 = por %p146, %p147
      %p149 = scmp.ne.s32.totalorder %s140, %s141
      %p150 = scmp.eq.s32.totalorder %s25, 0
      %p151 = por %p149, %p150
      %p152 = scmp.ne.s32.totalorder %s140, %s141
      %p153 = scmp.eq.s32.totalorder %s26, 1
      %p154 = por %p152, %p153
      %p156 = scmp.ne.s32.totalorder %s141, %s155
      %p157 = scmp.eq.s32.totalorder %s26, 0
      %p158 = por %p156, %p157
      %s160 = sadd.s32 %s159, 1
      %p163 = scmp.eq.s32.totalorder %s20, 1
      %p164 = scmp.ne.s32.totalorder %s159, %s161
      %p165 = scmp.eq.s32.totalorder %s20, 0
      %p166 = por %p164, %p165
      %p167 = scmp.ne.s32.totalorder %s159, %s161
      %p168 = scmp.eq.s32.totalorder %s25, 1
      %p169 = por %p167, %p168
      %p170 = scmp.ne.s32.totalorder %s161, %s162
      %p171 = scmp.eq.s32.totalorder %s25, 0
      %p172 = por %p170, %p171
      %p173 = scmp.ne.s32.totalorder %s161, %s162
      %p174 = scmp.eq.s32.totalorder %s26, 1
      %p175 = por %p173, %p174
      %p177 = scmp.ne.s32.totalorder %s162, %s176
      %p178 = scmp.eq.s32.totalorder %s26, 0
      %p179 = por %p177, %p178
      %s181 = sadd.s32 %s180, 1
      %p184 = scmp.eq.s32.totalorder %s20, 1
      %p185 = scmp.ne.s32.totalorder %s180, %s182
      %p186 = scmp.eq.s32.totalorder %s20, 0
      %p187 = por %p185, %p186
      %p188 = scmp.ne.s32.totalorder %s180, %s182
      %p189 = scmp.eq.s32.totalorder %s25, 1
      %p190 = por %p188, %p189
      %p191 = scmp.ne.s32.totalorder %s182, %s183
      %p192 = scmp.eq.s32.totalorder %s25, 0
      %p193 = por %p191, %p192
      %p194 = scmp.ne.s32.totalorder %s182, %s183
      %p195 = scmp.eq.s32.totalorder %s26, 1
      %p196 = por %p194, %p195
      %p198 = scmp.ne.s32.totalorder %s183, %s197
      %p199 = scmp.eq.s32.totalorder %s26, 0
      %p200 = por %p198, %p199
      %s202 = sadd.s32 %s201, 1
      %p205 = scmp.eq.s32.totalorder %s20, 1
      %p206 = scmp.ne.s32.totalorder %s201, %s203
      %p207 = scmp.eq.s32.totalorder %s20, 0
      %p208 = por %p206, %p207
      %p209 = scmp.ne.s32.totalorder %s201, %s203
      %p210 = scmp.eq.s32.totalorder %s25, 1
      %p211 = por %p209, %p210
      %p212 = scmp.ne.s32.totalorder %s203, %s204
      %p213 = scmp.eq.s32.totalorder %s25, 0
      %p214 = por %p212, %p213
      %p215 = scmp.ne.s32.totalorder %s203, %s204
      %p216 = scmp.eq.s32.totalorder %s26, 1
      %p217 = por %p215, %p216
      %p219 = scmp.ne.s32.totalorder %s204, %s218
      %p220 = scmp.eq.s32.totalorder %s26, 0
      %p221 = por %p219, %p220
      %s223 = sadd.s32 %s222, 1
      %p226 = scmp.eq.s32.totalorder %s20, 1
      %p227 = scmp.ne.s32.totalorder %s222, %s224
      %p228 = scmp.eq.s32.totalorder %s20, 0
      %p229 = por %p227, %p228
      %p230 = scmp.ne.s32.totalorder %s222, %s224
      %p231 = scmp.eq.s32.totalorder %s25, 1
      %p232 = por %p230, %p231
      %p233 = scmp.ne.s32.totalorder %s224, %s225
      %p234 = scmp.eq.s32.totalorder %s25, 0
      %p235 = por %p233, %p234
      %p236 = scmp.ne.s32.totalorder %s224, %s225
      %p237 = scmp.eq.s32.totalorder %s26, 1
      %p238 = por %p236, %p237
      %p240 = scmp.ne.s32.totalorder %s225, %s239
      %p241 = scmp.eq.s32.totalorder %s26, 0
      %p242 = por %p240, %p241
      %s244 = sadd.s32 %s243, 1
      %p247 = scmp.eq.s32.totalorder %s20, 1
      %p248 = scmp.ne.s32.totalorder %s243, %s245
      %p249 = scmp.eq.s32.totalorder %s20, 0
      %p250 = por %p248, %p249
      %p251 = scmp.ne.s32.totalorder %s243, %s245
      %p252 = scmp.eq.s32.totalorder %s25, 1
      %p253 = por %p251, %p252
      %p254 = scmp.ne.s32.totalorder %s245, %s246
      %p255 = scmp.eq.s32.totalorder %s25, 0
      %p256 = por %p254, %p255
      %p257 = scmp.ne.s32.totalorder %s245, %s246
      %p258 = scmp.eq.s32.totalorder %s26, 1
      %p259 = por %p257, %p258
      %p261 = scmp.ne.s32.totalorder %s246, %s260
      %p262 = scmp.eq.s32.totalorder %s26, 0
      %p263 = por %p261, %p262
      %s264 = ssub.s32 %s20, %s27
      %p265 = scmp.eq.s32.totalorder %s264, 0
      %s267 = sadd.s32 %s266, 1
      %s268 = scalar_select %p265, %s266, %s267
      %p271 = pneg %p265
      %p272 = scmp.eq.s32.totalorder %s20, 1
      %p273 = por %p271, %p272
      %p274 = scmp.ne.s32.totalorder %s266, %s269
      %p275 = scmp.eq.s32.totalorder %s20, 0
      %p276 = por %p274, %p275
      %p277 = scmp.ne.s32.totalorder %s266, %s269
      %p278 = scmp.eq.s32.totalorder %s25, 1
      %p279 = por %p277, %p278
      %p280 = scmp.ne.s32.totalorder %s269, %s270
      %p281 = scmp.eq.s32.totalorder %s25, 0
      %p282 = por %p280, %p281
      %p283 = scmp.ne.s32.totalorder %s269, %s270
      %p284 = scmp.eq.s32.totalorder %s26, 1
      %p285 = por %p283, %p284
      %p287 = scmp.ne.s32.totalorder %s270, %s286
      %p288 = scmp.eq.s32.totalorder %s26, 0
      %p289 = por %p287, %p288
      %p290 = scmp.le.s32.totalorder 1, %s20
      %p291 = scmp.lt.s32.totalorder %s20, 3
      %p292 = pnand %p290, %p291
      %p293 = pneg %p292
      // Predicated region
      $region9: #{_lambda_.1} parent=5 // pred_check
        _
      $region10: #{_lambda_.1} parent=5 // pred_check_branch
        %295 = sbr.rel (%p292) target = $region12
      $region11: #{_lambda_.1} parent=5 // pred_region
        %s296 = ssub.s32 %s20, 1
        // Predicated region
        $region13: #{_lambda_.1} parent=11 // pred_check
          %p297 = pneg %p67
        $region14: #{_lambda_.1} parent=11 // pred_check_branch
          %299 = sbr.rel (%p297) target = $region16
        $region15: #{_lambda_.1} parent=11 // pred_region
          _
        $region16: #{_lambda_.1} parent=11 // pred_fallthru
          _
        // Predicated region
        $region17: #{_lambda_.1} parent=11 // pred_check
          %p300 = pneg %p88
        $region18: #{_lambda_.1} parent=11 // pred_check_branch
          %302 = sbr.rel (%p300) target = $region20
        $region19: #{_lambda_.1} parent=11 // pred_region
          _
        $region20: #{_lambda_.1} parent=11 // pred_fallthru
          _
        // Predicated region
        $region21: #{_lambda_.1} parent=11 // pred_check
          %p303 = pneg %p109
        $region22: #{_lambda_.1} parent=11 // pred_check_branch
          %305 = sbr.rel (%p303) target = $region24
        $region23: #{_lambda_.1} parent=11 // pred_region
          _
        $region24: #{_lambda_.1} parent=11 // pred_fallthru
          _
        // Predicated region
        $region25: #{_lambda_.1} parent=11 // pred_check
          %p306 = pneg %p130
        $region26: #{_lambda_.1} parent=11 // pred_check_branch
          %308 = sbr.rel (%p306) target = $region28
        $region27: #{_lambda_.1} parent=11 // pred_region
          _
        $region28: #{_lambda_.1} parent=11 // pred_fallthru
          _
        // Predicated region
        $region29: #{_lambda_.1} parent=11 // pred_check
          %p309 = pneg %p151
        $region30: #{_lambda_.1} parent=11 // pred_check_branch
          %311 = sbr.rel (%p309) target = $region32
        $region31: #{_lambda_.1} parent=11 // pred_region
          _
        $region32: #{_lambda_.1} parent=11 // pred_fallthru
          _
        // Predicated region
        $region33: #{_lambda_.1} parent=11 // pred_check
          %p312 = pneg %p172
        $region34: #{_lambda_.1} parent=11 // pred_check_branch
          %314 = sbr.rel (%p312) target = $region36
        $region35: #{_lambda_.1} parent=11 // pred_region
          _
        $region36: #{_lambda_.1} parent=11 // pred_fallthru
          _
        // Predicated region
        $region37: #{_lambda_.1} parent=11 // pred_check
          %p315 = pneg %p193
        $region38: #{_lambda_.1} parent=11 // pred_check_branch
          %317 = sbr.rel (%p315) target = $region40
        $region39: #{_lambda_.1} parent=11 // pred_region
          _
        $region40: #{_lambda_.1} parent=11 // pred_fallthru
          _
        // Predicated region
        $region41: #{_lambda_.1} parent=11 // pred_check
          %p318 = pneg %p214
        $region42: #{_lambda_.1} parent=11 // pred_check_branch
          %320 = sbr.rel (%p318) target = $region44
        $region43: #{_lambda_.1} parent=11 // pred_region
          _
        $region44: #{_lambda_.1} parent=11 // pred_fallthru
          _
        // Predicated region
        $region45: #{_lambda_.1} parent=11 // pred_check
          %p321 = pneg %p235
        $region46: #{_lambda_.1} parent=11 // pred_check_branch
          %323 = sbr.rel (%p321) target = $region48
        $region47: #{_lambda_.1} parent=11 // pred_region
          _
        $region48: #{_lambda_.1} parent=11 // pred_fallthru
          _
        // Predicated region
        $region49: #{_lambda_.1} parent=11 // pred_check
          %p324 = pneg %p256
        $region50: #{_lambda_.1} parent=11 // pred_check_branch
          %326 = sbr.rel (%p324) target = $region52
        $region51: #{_lambda_.1} parent=11 // pred_region
          _
        $region52: #{_lambda_.1} parent=11 // pred_fallthru
          _
      $region12: #{_lambda_.1} parent=5 // pred_fallthru
        _
      %p327 = scmp.lt.s32.totalorder %s20, 2
      // Predicated region
      $region53: #{_lambda_.1} parent=5 // pred_check
        %p328 = pneg %p327
      $region54: #{_lambda_.1} parent=5 // pred_check_branch
        %330 = sbr.rel (%p328) target = $region56
      $region55: #{_lambda_.1} parent=5 // pred_region
        // Predicated region
        $region57: #{_lambda_.1} parent=55 // pred_check
          %p331 = pneg %p40
        $region58: #{_lambda_.1} parent=55 // pred_check_branch
          %333 = sbr.rel (%p331) target = $region60
        $region59: #{_lambda_.1} parent=55 // pred_region
          %p334 = scmp.lt.s32.totalorder %s20, 1
          %s335 = scalar_select %p334, %s20, 1
          %s336 = smul.addr %s335, 8
          %s337 = smul.addr %s336, 8
          %s338 = scalar_lea.vmem %s0, %s337
        $region60: #{_lambda_.1} parent=55 // pred_fallthru
          _
      $region56: #{_lambda_.1} parent=5 // pred_fallthru
        _
      %p339 = scmp.le.s32.totalorder 1, %s20
      %p340 = scmp.lt.s32.totalorder %s20, 3
      %p341 = pnand %p339, %p340
      %p342 = pneg %p341
      // Predicated region
      $region61: #{_lambda_.1} parent=5 // pred_check
        _
      $region62: #{_lambda_.1} parent=5 // pred_check_branch
        %344 = sbr.rel (%p341) target = $region64
      $region63: #{_lambda_.1} parent=5 // pred_region
        %s345 = ssub.s32 %s20, 1
        %p346 = scmp.lt.s32.totalorder %s25, 1
        %s347 = scalar_select %p346, %s25, 1
        %s348 = smul.addr %s347, 8
        %s349 = smul.addr %s348, 8
        %s350 = scalar_lea.vmem %s0, %s349
        %p351 = pneg %p46
        %p352 = pneg %p43
        %p353 = pneg %p67
        %p354 = pneg %p64
        %p355 = pneg %p88
        %p356 = pneg %p85
        %p357 = pneg %p109
        %p358 = pneg %p106
        %p359 = pneg %p130
        %p360 = pneg %p127
        %p361 = pneg %p151
        %p362 = pneg %p148
        %p363 = pneg %p172
        %p364 = pneg %p169
        %p365 = pneg %p193
        %p366 = pneg %p190
        %p367 = pneg %p214
        %p368 = pneg %p211
        %p369 = pneg %p235
        %p370 = pneg %p232
        %p371 = pneg %p256
        %p372 = pneg %p253
        %p373 = pneg %p282
        %p374 = pneg %p279
        %s375 = sand.u32 %s269, 1
        %s376 = scalar_lea.sflag [#allocation9], %s375
        %s377 = sand.u32 %s269, 1
        %s378 = scalar_lea.vmem [#allocation8], %s377
        %p379 = scmp.lt.s32.totalorder %s25, 1
        %s380 = scalar_select %p379, %s25, 1
        %s381 = smul.addr %s380, 8
        %s382 = smul.addr %s381, 8
        %s383 = scalar_lea.vmem %s0, %s382
        %vm384 = vcmask 7168
        %385 = vst.msk [vmem:[#allocation2] sm:$0xff] %vm384, 0.0
        %386 = vst.msk [vmem:[#allocation2 + $0x8] sm:$0xff] %vm384, 0.0
        %387 = vst.msk [vmem:[#allocation2 + $0x10] sm:$0xff] %vm384, 0.0
        %388 = vst.msk [vmem:[#allocation2 + $0x18] sm:$0xff] %vm384, 0.0
        %389 = vst.msk [vmem:[#allocation2 + $0x20] sm:$0xff] %vm384, 0.0
        %390 = vst.msk [vmem:[#allocation2 + $0x28] sm:$0xff] %vm384, 0.0
        %391 = vst.msk [vmem:[#allocation2 + $0x30] sm:$0xff] %vm384, 0.0
        %392 = vst.msk [vmem:[#allocation2 + $0x38] sm:$0xff] %vm384, 0.0
        %393 = vst.msk [vmem:[#allocation2 + $0x40] sm:$0xff] %vm384, 0.0
        %394 = vst.msk [vmem:[#allocation2 + $0x48] sm:$0xff] %vm384, 0.0
        %vm395 = vcmask 1024
        %396 = vst.msk [vmem:[#allocation2 + $0x50] sm:$0x3] %vm395, 0.0
        %vm397 = vcmask 64512
        %398 = vst.msk [vmem:[#allocation3] sm:$0xff] %vm397, 0.0
        %399 = vst.msk [vmem:[#allocation3 + $0x8] sm:$0xff] %vm397, 0.0
        %400 = vst.msk [vmem:[#allocation3 + $0x10] sm:$0xff] %vm397, 0.0
        %vm401 = vcmask 58368
        %402 = vst.msk [vmem:[#allocation3 + $0x18] sm:$0x3] %vm401, 0.0
        %vm403 = vcmask 130048
        %404 = vst.msk [vmem:[#allocation4] sm:$0xff] %vm403, 0.0
        %vm405 = vcmask 123904
        %406 = vst.msk [vmem:[#allocation4 + $0x8] sm:$0x3] %vm405, 0.0
        %v407 = vld [vmem:[%s383] sm:$0xff]
        %v408 = vld [vmem:[%s383 + $0x8] sm:$0xff]
        %v409 = vld [vmem:[%s383 + $0x10] sm:$0xff]
        %v410 = vld [vmem:[%s383 + $0x18] sm:$0xff]
        %v411 = vld [vmem:[%s383 + $0x20] sm:$0xff]
        %v412 = vld [vmem:[%s383 + $0x28] sm:$0xff]
        %v413 = vld [vmem:[%s383 + $0x30] sm:$0xff]
        %v414 = vld [vmem:[%s383 + $0x38] sm:$0xff]
        %415 = vst.msk [vmem:[#allocation2 + $0x9] sm:$0xff] %vm384, %v407
        %416 = vst.msk [vmem:[#allocation2 + $0x11] sm:$0xff] %vm384, %v408
        %417 = vst.msk [vmem:[#allocation2 + $0x19] sm:$0xff] %vm384, %v409
        %418 = vst.msk [vmem:[#allocation2 + $0x21] sm:$0xff] %vm384, %v410
        %419 = vst.msk [vmem:[#allocation2 + $0x29] sm:$0xff] %vm384, %v411
        %420 = vst.msk [vmem:[#allocation2 + $0x31] sm:$0xff] %vm384, %v412
        %421 = vst.msk [vmem:[#allocation2 + $0x39] sm:$0xff] %vm384, %v413
        %422 = vst.msk [vmem:[#allocation2 + $0x41] sm:$0xff] %vm384, %v414
        %v423 = vlaneseq
        %v424 = vshrl.u32 %v423, 7
        %v425 = vadd.s32 %v424, 8
        %v426 = vadd.s32 %v424, 16
        %v427 = vadd.s32 %v424, 24
        %v428 = vadd.s32 %v424, 32
        %v429 = vadd.s32 %v424, 40
        %v430 = vadd.s32 %v424, 48
        %v431 = vadd.s32 %v424, 56
        %vm432 = vcmp.lt.s32.totalorder %v424, 0
        %v433 = vsub.s32 0, %v424
        %v434 = vsel %vm432, %v433, %v424
        %v435 = vshrl.u32 %v434, 3
        %v436 = vand.u32 %v434, 7
        %v437 = vsub.s32 0, %v436
        %v438 = vsel %vm432, %v437, %v436
        %vm439 = vcmp.lt.s32.totalorder %v425, 0
        %v440 = vsub.s32 0, %v425
        %v441 = vsel %vm439, %v440, %v425
        %v442 = vshrl.u32 %v441, 3
        %v443 = vand.u32 %v441, 7
        %v444 = vsub.s32 0, %v443
        %v445 = vsel %vm439, %v444, %v443
        %vm446 = vcmp.lt.s32.totalorder %v426, 0
        %v447 = vsub.s32 0, %v426
        %v448 = vsel %vm446, %v447, %v426
        %v449 = vshrl.u32 %v448, 3
        %v450 = vand.u32 %v448, 7
        %v451 = vsub.s32 0, %v450
        %v452 = vsel %vm446, %v451, %v450
        %vm453 = vcmp.lt.s32.totalorder %v427, 0
        %v454 = vsub.s32 0, %v427
        %v455 = vsel %vm453, %v454, %v427
        %v456 = vshrl.u32 %v455, 3
        %v457 = vand.u32 %v455, 7
        %v458 = vsub.s32 0, %v457
        %v459 = vsel %vm453, %v458, %v457
        %vm460 = vcmp.lt.s32.totalorder %v428, 0
        %v461 = vsub.s32 0, %v428
        %v462 = vsel %vm460, %v461, %v428
        %v463 = vshrl.u32 %v462, 3
        %v464 = vand.u32 %v462, 7
        %v465 = vsub.s32 0, %v464
        %v466 = vsel %vm460, %v465, %v464
        %vm467 = vcmp.lt.s32.totalorder %v429, 0
        %v468 = vsub.s32 0, %v429
        %v469 = vsel %vm467, %v468, %v429
        %v470 = vshrl.u32 %v469, 3
        %v471 = vand.u32 %v469, 7
        %v472 = vsub.s32 0, %v471
        %v473 = vsel %vm467, %v472, %v471
        %vm474 = vcmp.lt.s32.totalorder %v430, 0
        %v475 = vsub.s32 0, %v430
        %v476 = vsel %vm474, %v475, %v430
        %v477 = vshrl.u32 %v476, 3
        %v478 = vand.u32 %v476, 7
        %v479 = vsub.s32 0, %v478
        %v480 = vsel %vm474, %v479, %v478
        %vm481 = vcmp.lt.s32.totalorder %v431, 0
        %v482 = vsub.s32 0, %v431
        %v483 = vsel %vm481, %v482, %v431
        %v484 = vshrl.u32 %v483, 3
        %v485 = vand.u32 %v483, 7
        %v486 = vsub.s32 0, %v485
        %v487 = vsel %vm481, %v486, %v485
        %vm488 = vcmp.ne.s32.totalorder %v438, 0
        %vm489 = vcmp.ne.s32.totalorder %v445, 0
        %vm490 = vcmp.ne.s32.totalorder %v452, 0
        %vm491 = vcmp.ne.s32.totalorder %v459, 0
        %vm492 = vcmp.ne.s32.totalorder %v466, 0
        %vm493 = vcmp.ne.s32.totalorder %v473, 0
        %vm494 = vcmp.ne.s32.totalorder %v480, 0
        %vm495 = vcmp.ne.s32.totalorder %v487, 0
        %vm496 = vcmp.lt.s32.totalorder %v438, 0
        %vm497 = vcmp.lt.s32.totalorder %v445, 0
        %vm498 = vcmp.lt.s32.totalorder %v452, 0
        %vm499 = vcmp.lt.s32.totalorder %v459, 0
        %vm500 = vcmp.lt.s32.totalorder %v466, 0
        %vm501 = vcmp.lt.s32.totalorder %v473, 0
        %vm502 = vcmp.lt.s32.totalorder %v480, 0
        %vm503 = vcmp.lt.s32.totalorder %v487, 0
        %vm504 = vmand %vm496, %vm488
        %vm505 = vmand %vm497, %vm489
        %vm506 = vmand %vm498, %vm490
        %vm507 = vmand %vm499, %vm491
        %vm508 = vmand %vm500, %vm492
        %vm509 = vmand %vm501, %vm493
        %vm510 = vmand %vm502, %vm494
        %vm511 = vmand %vm503, %vm495
        %v512 = vadd.s32 %v438, 8
        %v513 = vadd.s32 %v445, 8
        %v514 = vadd.s32 %v452, 8
        %v515 = vadd.s32 %v459, 8
        %v516 = vadd.s32 %v466, 8
        %v517 = vadd.s32 %v473, 8
        %v518 = vadd.s32 %v480, 8
        %v519 = vadd.s32 %v487, 8
        %v520 = vsel %vm504, %v512, %v438
        %v521 = vsel %vm505, %v513, %v445
        %v522 = vsel %vm506, %v514, %v452
        %v523 = vsel %vm507, %v515, %v459
        %v524 = vsel %vm508, %v516, %v466
        %v525 = vsel %vm509, %v517, %v473
        %v526 = vsel %vm510, %v518, %v480
        %v527 = vsel %vm511, %v519, %v487
        %vm528 = vcmp.ne.s32.totalorder %v520, 0
        %vm529 = vcmp.ne.s32.totalorder %v521, 0
        %vm530 = vcmp.ne.s32.totalorder %v522, 0
        %vm531 = vcmp.ne.s32.totalorder %v523, 0
        %vm532 = vcmp.ne.s32.totalorder %v524, 0
        %vm533 = vcmp.ne.s32.totalorder %v525, 0
        %vm534 = vcmp.ne.s32.totalorder %v526, 0
        %vm535 = vcmp.ne.s32.totalorder %v527, 0
        %v536 = vsel %vm528, 1, 0
        %v537 = vsel %vm529, 1, 0
        %v538 = vsel %vm530, 1, 0
        %v539 = vsel %vm531, 1, 0
        %v540 = vsel %vm532, 1, 0
        %v541 = vsel %vm533, 1, 0
        %v542 = vsel %vm534, 1, 0
        %v543 = vsel %vm535, 1, 0
        %v544 = vcvt.s32.f32 %v536
        %v545 = vcvt.s32.f32 %v537
        %v546 = vcvt.s32.f32 %v538
        %v547 = vcvt.s32.f32 %v539
        %v548 = vcvt.s32.f32 %v540
        %v549 = vcvt.s32.f32 %v541
        %v550 = vcvt.s32.f32 %v542
        %v551 = vcvt.s32.f32 %v543
        %vm552 = vcmp.ne.s32.totalorder %v520, 7
        %vm553 = vcmp.ne.s32.totalorder %v521, 7
        %vm554 = vcmp.ne.s32.totalorder %v522, 7
        %vm555 = vcmp.ne.s32.totalorder %v523, 7
        %vm556 = vcmp.ne.s32.totalorder %v524, 7
        %vm557 = vcmp.ne.s32.totalorder %v525, 7
        %vm558 = vcmp.ne.s32.totalorder %v526, 7
        %vm559 = vcmp.ne.s32.totalorder %v527, 7
        %v560 = vsel %vm552, 1, 0
        %v561 = vsel %vm553, 1, 0
        %v562 = vsel %vm554, 1, 0
        %v563 = vsel %vm555, 1, 0
        %v564 = vsel %vm556, 1, 0
        %v565 = vsel %vm557, 1, 0
        %v566 = vsel %vm558, 1, 0
        %v567 = vsel %vm559, 1, 0
        %v568 = vcvt.s32.f32 %v560
        %v569 = vcvt.s32.f32 %v561
        %v570 = vcvt.s32.f32 %v562
        %v571 = vcvt.s32.f32 %v563
        %v572 = vcvt.s32.f32 %v564
        %v573 = vcvt.s32.f32 %v565
        %v574 = vcvt.s32.f32 %v566
        %v575 = vcvt.s32.f32 %v567
        %v576 = vld [vmem:[#allocation2] sm:$0xff]
        %v577 = vld [vmem:[#allocation2 + $0x8] sm:$0xff]
        %v578 = vld [vmem:[#allocation2 + $0x10] sm:$0xff]
        %v579 = vld [vmem:[#allocation2 + $0x18] sm:$0xff]
        %v580 = vld [vmem:[#allocation2 + $0x20] sm:$0xff]
        %v581 = vld [vmem:[#allocation2 + $0x28] sm:$0xff]
        %v582 = vld [vmem:[#allocation2 + $0x30] sm:$0xff]
        %v583 = vld [vmem:[#allocation2 + $0x38] sm:$0xff]
        %v584 = vmul.f32 %v576, %v544
        %v585 = vmul.f32 %v577, %v545
        %v586 = vmul.f32 %v578, %v546
        %v587 = vmul.f32 %v579, %v547
        %v588 = vmul.f32 %v580, %v548
        %v589 = vmul.f32 %v581, %v549
        %v590 = vmul.f32 %v582, %v550
        %v591 = vmul.f32 %v583, %v551
        %592 = vst.msk [vmem:[#allocation5] sm:$0xff] %vm384, %v584
        %593 = vst.msk [vmem:[#allocation5 + $0x8] sm:$0xff] %vm384, %v585
        %594 = vst.msk [vmem:[#allocation5 + $0x10] sm:$0xff] %vm384, %v586
        %595 = vst.msk [vmem:[#allocation5 + $0x18] sm:$0xff] %vm384, %v587
        %596 = vst.msk [vmem:[#allocation5 + $0x20] sm:$0xff] %vm384, %v588
        %597 = vst.msk [vmem:[#allocation5 + $0x28] sm:$0xff] %vm384, %v589
        %598 = vst.msk [vmem:[#allocation5 + $0x30] sm:$0xff] %vm384, %v590
        %599 = vst.msk [vmem:[#allocation5 + $0x38] sm:$0xff] %vm384, %v591
        %v600 = vld [vmem:[#allocation2 + $0x1] sm:$0xff]
        %v601 = vld [vmem:[#allocation2 + $0x9] sm:$0xff]
        %v602 = vld [vmem:[#allocation2 + $0x11] sm:$0xff]
        %v603 = vld [vmem:[#allocation2 + $0x19] sm:$0xff]
        %v604 = vld [vmem:[#allocation2 + $0x21] sm:$0xff]
        %v605 = vld [vmem:[#allocation2 + $0x29] sm:$0xff]
        %v606 = vld [vmem:[#allocation2 + $0x31] sm:$0xff]
        %v607 = vld [vmem:[#allocation2 + $0x39] sm:$0xff]
        %616 = vrot.lane.b32.xlu0 %v600, 1
        %v617 = vpop.permute.xlu0 %616
        %618 = vrot.lane.b32.xlu0 %v601, 1
        %v619 = vpop.permute.xlu0 %618
        %620 = vrot.lane.b32.xlu0 %v602, 1
        %v621 = vpop.permute.xlu0 %620
        %622 = vrot.lane.b32.xlu0 %v603, 1
        %v623 = vpop.permute.xlu0 %622
        %624 = vrot.lane.b32.xlu0 %v604, 1
        %v625 = vpop.permute.xlu0 %624
        %626 = vrot.lane.b32.xlu0 %v605, 1
        %v627 = vpop.permute.xlu0 %626
        %628 = vrot.lane.b32.xlu0 %v606, 1
        %v629 = vpop.permute.xlu0 %628
        %630 = vrot.lane.b32.xlu0 %v607, 1
        %v631 = vpop.permute.xlu0 %630
        %vm640 = vcmask 15368
        %641 = vst.msk [vmem:[#allocation5] sm:$0xff] %vm640, %v617
        %642 = vst.msk [vmem:[#allocation5 + $0x8] sm:$0xff] %vm640, %v619
        %643 = vst.msk [vmem:[#allocation5 + $0x10] sm:$0xff] %vm640, %v621
        %644 = vst.msk [vmem:[#allocation5 + $0x18] sm:$0xff] %vm640, %v623
        %645 = vst.msk [vmem:[#allocation5 + $0x20] sm:$0xff] %vm640, %v625
        %646 = vst.msk [vmem:[#allocation5 + $0x28] sm:$0xff] %vm640, %v627
        %647 = vst.msk [vmem:[#allocation5 + $0x30] sm:$0xff] %vm640, %v629
        %648 = vst.msk [vmem:[#allocation5 + $0x38] sm:$0xff] %vm640, %v631
        %v649 = vld [vmem:[#allocation2 + $0x2] sm:$0xff]
        %v650 = vld [vmem:[#allocation2 + $0xa] sm:$0xff]
        %v651 = vld [vmem:[#allocation2 + $0x12] sm:$0xff]
        %v652 = vld [vmem:[#allocation2 + $0x1a] sm:$0xff]
        %v653 = vld [vmem:[#allocation2 + $0x22] sm:$0xff]
        %v654 = vld [vmem:[#allocation2 + $0x2a] sm:$0xff]
        %v655 = vld [vmem:[#allocation2 + $0x32] sm:$0xff]
        %v656 = vld [vmem:[#allocation2 + $0x3a] sm:$0xff]
        %v657 = vmul.f32 %v649, %v568
        %v658 = vmul.f32 %v650, %v569
        %v659 = vmul.f32 %v651, %v570
        %v660 = vmul.f32 %v652, %v571
        %v661 = vmul.f32 %v653, %v572
        %v662 = vmul.f32 %v654, %v573
        %v663 = vmul.f32 %v655, %v574
        %v664 = vmul.f32 %v656, %v575
        %673 = vrot.lane.b32.xlu0 %v657, 2
        %v674 = vpop.permute.xlu0 %673
        %675 = vrot.lane.b32.xlu0 %v658, 2
        %v676 = vpop.permute.xlu0 %675
        %677 = vrot.lane.b32.xlu0 %v659, 2
        %v678 = vpop.permute.xlu0 %677
        %679 = vrot.lane.b32.xlu0 %v660, 2
        %v680 = vpop.permute.xlu0 %679
        %681 = vrot.lane.b32.xlu0 %v661, 2
        %v682 = vpop.permute.xlu0 %681
        %683 = vrot.lane.b32.xlu0 %v662, 2
        %v684 = vpop.permute.xlu0 %683
        %685 = vrot.lane.b32.xlu0 %v663, 2
        %v686 = vpop.permute.xlu0 %685
        %687 = vrot.lane.b32.xlu0 %v664, 2
        %v688 = vpop.permute.xlu0 %687
        %vm697 = vcmask 23568
        %698 = vst.msk [vmem:[#allocation5] sm:$0xff] %vm697, %v674
        %699 = vst.msk [vmem:[#allocation5 + $0x8] sm:$0xff] %vm697, %v676
        %700 = vst.msk [vmem:[#allocation5 + $0x10] sm:$0xff] %vm697, %v678
        %701 = vst.msk [vmem:[#allocation5 + $0x18] sm:$0xff] %vm697, %v680
        %702 = vst.msk [vmem:[#allocation5 + $0x20] sm:$0xff] %vm697, %v682
        %703 = vst.msk [vmem:[#allocation5 + $0x28] sm:$0xff] %vm697, %v684
        %704 = vst.msk [vmem:[#allocation5 + $0x30] sm:$0xff] %vm697, %v686
        %705 = vst.msk [vmem:[#allocation5 + $0x38] sm:$0xff] %vm697, %v688
        %v706 = vld [vmem:[#allocation2 + $0x8] sm:$0xff]
        %v707 = vld [vmem:[#allocation2 + $0x10] sm:$0xff]
        %v708 = vld [vmem:[#allocation2 + $0x18] sm:$0xff]
        %v709 = vld [vmem:[#allocation2 + $0x20] sm:$0xff]
        %v710 = vld [vmem:[#allocation2 + $0x28] sm:$0xff]
        %v711 = vld [vmem:[#allocation2 + $0x30] sm:$0xff]
        %v712 = vld [vmem:[#allocation2 + $0x38] sm:$0xff]
        %v713 = vld [vmem:[#allocation2 + $0x40] sm:$0xff]
        %v714 = vmul.f32 %v706, %v544
        %v715 = vmul.f32 %v707, %v545
        %v716 = vmul.f32 %v708, %v546
        %v717 = vmul.f32 %v709, %v547
        %v718 = vmul.f32 %v710, %v548
        %v719 = vmul.f32 %v711, %v549
        %v720 = vmul.f32 %v712, %v550
        %v721 = vmul.f32 %v713, %v551
        %730 = vrot.lane.b32.xlu0 %v714, 3
        %v731 = vpop.permute.xlu0 %730
        %732 = vrot.lane.b32.xlu0 %v715, 3
        %v733 = vpop.permute.xlu0 %732
        %734 = vrot.lane.b32.xlu0 %v716, 3
        %v735 = vpop.permute.xlu0 %734
        %736 = vrot.lane.b32.xlu0 %v717, 3
        %v737 = vpop.permute.xlu0 %736
        %738 = vrot.lane.b32.xlu0 %v718, 3
        %v739 = vpop.permute.xlu0 %738
        %740 = vrot.lane.b32.xlu0 %v719, 3
        %v741 = vpop.permute.xlu0 %740
        %742 = vrot.lane.b32.xlu0 %v720, 3
        %v743 = vpop.permute.xlu0 %742
        %744 = vrot.lane.b32.xlu0 %v721, 3
        %v745 = vpop.permute.xlu0 %744
        %vm754 = vcmask 31768
        %755 = vst.msk [vmem:[#allocation5] sm:$0xff] %vm754, %v731
        %756 = vst.msk [vmem:[#allocation5 + $0x8] sm:$0xff] %vm754, %v733
        %757 = vst.msk [vmem:[#allocation5 + $0x10] sm:$0xff] %vm754, %v735
        %758 = vst.msk [vmem:[#allocation5 + $0x18] sm:$0xff] %vm754, %v737
        %759 = vst.msk [vmem:[#allocation5 + $0x20] sm:$0xff] %vm754, %v739
        %760 = vst.msk [vmem:[#allocation5 + $0x28] sm:$0xff] %vm754, %v741
        %761 = vst.msk [vmem:[#allocation5 + $0x30] sm:$0xff] %vm754, %v743
        %762 = vst.msk [vmem:[#allocation5 + $0x38] sm:$0xff] %vm754, %v745
        %v763 = vld [vmem:[#allocation2 + $0x9] sm:$0xff]
        %v764 = vld [vmem:[#allocation2 + $0x11] sm:$0xff]
        %v765 = vld [vmem:[#allocation2 + $0x19] sm:$0xff]
        %v766 = vld [vmem:[#allocation2 + $0x21] sm:$0xff]
        %v767 = vld [vmem:[#allocation2 + $0x29] sm:$0xff]
        %v768 = vld [vmem:[#allocation2 + $0x31] sm:$0xff]
        %v769 = vld [vmem:[#allocation2 + $0x39] sm:$0xff]
        %v770 = vld [vmem:[#allocation2 + $0x41] sm:$0xff]
        %779 = vrot.lane.b32.xlu0 %v763, 4
        %v780 = vpop.permute.xlu0 %779
        %781 = vrot.lane.b32.xlu0 %v764, 4
        %v782 = vpop.permute.xlu0 %781
        %783 = vrot.lane.b32.xlu0 %v765, 4
        %v784 = vpop.permute.xlu0 %783
        %785 = vrot.lane.b32.xlu0 %v766, 4
        %v786 = vpop.permute.xlu0 %785
        %787 = vrot.lane.b32.xlu0 %v767, 4
        %v788 = vpop.permute.xlu0 %787
        %789 = vrot.lane.b32.xlu0 %v768, 4
        %v790 = vpop.permute.xlu0 %789
        %791 = vrot.lane.b32.xlu0 %v769, 4
        %v792 = vpop.permute.xlu0 %791
        %793 = vrot.lane.b32.xlu0 %v770, 4
        %v794 = vpop.permute.xlu0 %793
        %vm803 = vcmask 39968
        %804 = vst.msk [vmem:[#allocation5] sm:$0xff] %vm803, %v780
        %805 = vst.msk [vmem:[#allocation5 + $0x8] sm:$0xff] %vm803, %v782
        %806 = vst.msk [vmem:[#allocation5 + $0x10] sm:$0xff] %vm803, %v784
        %807 = vst.msk [vmem:[#allocation5 + $0x18] sm:$0xff] %vm803, %v786
        %808 = vst.msk [vmem:[#allocation5 + $0x20] sm:$0xff] %vm803, %v788
        %809 = vst.msk [vmem:[#allocation5 + $0x28] sm:$0xff] %vm803, %v790
        %810 = vst.msk [vmem:[#allocation5 + $0x30] sm:$0xff] %vm803, %v792
        %811 = vst.msk [vmem:[#allocation5 + $0x38] sm:$0xff] %vm803, %v794
        %v812 = vld [vmem:[#allocation2 + $0xa] sm:$0xff]
        %v813 = vld [vmem:[#allocation2 + $0x12] sm:$0xff]
        %v814 = vld [vmem:[#allocation2 + $0x1a] sm:$0xff]
        %v815 = vld [vmem:[#allocation2 + $0x22] sm:$0xff]
        %v816 = vld [vmem:[#allocation2 + $0x2a] sm:$0xff]
        %v817 = vld [vmem:[#allocation2 + $0x32] sm:$0xff]
        %v818 = vld [vmem:[#allocation2 + $0x3a] sm:$0xff]
        %v819 = vld [vmem:[#allocation2 + $0x42] sm:$0xff]
        %v820 = vmul.f32 %v812, %v568
        %v821 = vmul.f32 %v813, %v569
        %v822 = vmul.f32 %v814, %v570
        %v823 = vmul.f32 %v815, %v571
        %v824 = vmul.f32 %v816, %v572
        %v825 = vmul.f32 %v817, %v573
        %v826 = vmul.f32 %v818, %v574
        %v827 = vmul.f32 %v819, %v575
        %836 = vrot.lane.b32.xlu0 %v820, 5
        %v837 = vpop.permute.xlu0 %836
        %838 = vrot.lane.b32.xlu0 %v821, 5
        %v839 = vpop.permute.xlu0 %838
        %840 = vrot.lane.b32.xlu0 %v822, 5
        %v841 = vpop.permute.xlu0 %840
        %842 = vrot.lane.b32.xlu0 %v823, 5
        %v843 = vpop.permute.xlu0 %842
        %844 = vrot.lane.b32.xlu0 %v824, 5
        %v845 = vpop.permute.xlu0 %844
        %846 = vrot.lane.b32.xlu0 %v825, 5
        %v847 = vpop.permute.xlu0 %846
        %848 = vrot.lane.b32.xlu0 %v826, 5
        %v849 = vpop.permute.xlu0 %848
        %850 = vrot.lane.b32.xlu0 %v827, 5
        %v851 = vpop.permute.xlu0 %850
        %vm860 = vcmask 48168
        %861 = vst.msk [vmem:[#allocation5] sm:$0xff] %vm860, %v837
        %862 = vst.msk [vmem:[#allocation5 + $0x8] sm:$0xff] %vm860, %v839
        %863 = vst.msk [vmem:[#allocation5 + $0x10] sm:$0xff] %vm860, %v841
        %864 = vst.msk [vmem:[#allocation5 + $0x18] sm:$0xff] %vm860, %v843
        %865 = vst.msk [vmem:[#allocation5 + $0x20] sm:$0xff] %vm860, %v845
        %866 = vst.msk [vmem:[#allocation5 + $0x28] sm:$0xff] %vm860, %v847
        %867 = vst.msk [vmem:[#allocation5 + $0x30] sm:$0xff] %vm860, %v849
        %868 = vst.msk [vmem:[#allocation5 + $0x38] sm:$0xff] %vm860, %v851
        %v869 = vld [vmem:[#allocation2 + $0x10] sm:$0xff]
        %v870 = vld [vmem:[#allocation2 + $0x18] sm:$0xff]
        %v871 = vld [vmem:[#allocation2 + $0x20] sm:$0xff]
        %v872 = vld [vmem:[#allocation2 + $0x28] sm:$0xff]
        %v873 = vld [vmem:[#allocation2 + $0x30] sm:$0xff]
        %v874 = vld [vmem:[#allocation2 + $0x38] sm:$0xff]
        %v875 = vld [vmem:[#allocation2 + $0x40] sm:$0xff]
        %v876 = vld [vmem:[#allocation2 + $0x48] sm:$0xff]
        %v877 = vmul.f32 %v869, %v544
        %v878 = vmul.f32 %v870, %v545
        %v879 = vmul.f32 %v871, %v546
        %v880 = vmul.f32 %v872, %v547
        %v881 = vmul.f32 %v873, %v548
        %v882 = vmul.f32 %v874, %v549
        %v883 = vmul.f32 %v875, %v550
        %v884 = vmul.f32 %v876, %v551
        %893 = vrot.lane.b32.xlu0 %v877, 6
        %v894 = vpop.permute.xlu0 %893
        %895 = vrot.lane.b32.xlu0 %v878, 6
        %v896 = vpop.permute.xlu0 %895
        %897 = vrot.lane.b32.xlu0 %v879, 6
        %v898 = vpop.permute.xlu0 %897
        %899 = vrot.lane.b32.xlu0 %v880, 6
        %v900 = vpop.permute.xlu0 %899
        %901 = vrot.lane.b32.xlu0 %v881, 6
        %v902 = vpop.permute.xlu0 %901
        %903 = vrot.lane.b32.xlu0 %v882, 6
        %v904 = vpop.permute.xlu0 %903
        %905 = vrot.lane.b32.xlu0 %v883, 6
        %v906 = vpop.permute.xlu0 %905
        %907 = vrot.lane.b32.xlu0 %v884, 6
        %v908 = vpop.permute.xlu0 %907
        %vm917 = vcmask 56368
        %918 = vst.msk [vmem:[#allocation5] sm:$0xff] %vm917, %v894
        %919 = vst.msk [vmem:[#allocation5 + $0x8] sm:$0xff] %vm917, %v896
        %920 = vst.msk [vmem:[#allocation5 + $0x10] sm:$0xff] %vm917, %v898
        %921 = vst.msk [vmem:[#allocation5 + $0x18] sm:$0xff] %vm917, %v900
        %922 = vst.msk [vmem:[#allocation5 + $0x20] sm:$0xff] %vm917, %v902
        %923 = vst.msk [vmem:[#allocation5 + $0x28] sm:$0xff] %vm917, %v904
        %924 = vst.msk [vmem:[#allocation5 + $0x30] sm:$0xff] %vm917, %v906
        %925 = vst.msk [vmem:[#allocation5 + $0x38] sm:$0xff] %vm917, %v908
        %v926 = vld [vmem:[#allocation2 + $0x11] sm:$0xff]
        %v927 = vld [vmem:[#allocation2 + $0x19] sm:$0xff]
        %v928 = vld [vmem:[#allocation2 + $0x21] sm:$0xff]
        %v929 = vld [vmem:[#allocation2 + $0x29] sm:$0xff]
        %v930 = vld [vmem:[#allocation2 + $0x31] sm:$0xff]
        %v931 = vld [vmem:[#allocation2 + $0x39] sm:$0xff]
        %v932 = vld [vmem:[#allocation2 + $0x41] sm:$0xff]
        %v933 = vld [vmem:[#allocation2 + $0x49] sm:$0xff]
        %942 = vrot.lane.b32.xlu0 %v926, 7
        %v943 = vpop.permute.xlu0 %942
        %944 = vrot.lane.b32.xlu0 %v927, 7
        %v945 = vpop.permute.xlu0 %944
        %946 = vrot.lane.b32.xlu0 %v928, 7
        %v947 = vpop.permute.xlu0 %946
        %948 = vrot.lane.b32.xlu0 %v929, 7
        %v949 = vpop.permute.xlu0 %948
        %950 = vrot.lane.b32.xlu0 %v930, 7
        %v951 = vpop.permute.xlu0 %950
        %952 = vrot.lane.b32.xlu0 %v931, 7
        %v953 = vpop.permute.xlu0 %952
        %954 = vrot.lane.b32.xlu0 %v932, 7
        %v955 = vpop.permute.xlu0 %954
        %956 = vrot.lane.b32.xlu0 %v933, 7
        %v957 = vpop.permute.xlu0 %956
        %vm966 = vcmask 64568
        %967 = vst.msk [vmem:[#allocation5] sm:$0xff] %vm966, %v943
        %968 = vst.msk [vmem:[#allocation5 + $0x8] sm:$0xff] %vm966, %v945
        %969 = vst.msk [vmem:[#allocation5 + $0x10] sm:$0xff] %vm966, %v947
        %970 = vst.msk [vmem:[#allocation5 + $0x18] sm:$0xff] %vm966, %v949
        %971 = vst.msk [vmem:[#allocation5 + $0x20] sm:$0xff] %vm966, %v951
        %972 = vst.msk [vmem:[#allocation5 + $0x28] sm:$0xff] %vm966, %v953
        %973 = vst.msk [vmem:[#allocation5 + $0x30] sm:$0xff] %vm966, %v955
        %974 = vst.msk [vmem:[#allocation5 + $0x38] sm:$0xff] %vm966, %v957
        %v975 = vld [vmem:[#allocation2 + $0x12] sm:$0xff]
        %v976 = vld [vmem:[#allocation2 + $0x1a] sm:$0xff]
        %v977 = vld [vmem:[#allocation2 + $0x22] sm:$0xff]
        %v978 = vld [vmem:[#allocation2 + $0x2a] sm:$0xff]
        %v979 = vld [vmem:[#allocation2 + $0x32] sm:$0xff]
        %v980 = vld [vmem:[#allocation2 + $0x3a] sm:$0xff]
        %v981 = vld [vmem:[#allocation2 + $0x42] sm:$0xff]
        %v982 = vld [vmem:[#allocation2 + $0x4a] sm:$0xff]
        %v983 = vmul.f32 %v975, %v568
        %v984 = vmul.f32 %v976, %v569
        %v985 = vmul.f32 %v977, %v570
        %v986 = vmul.f32 %v978, %v571
        %v987 = vmul.f32 %v979, %v572
        %v988 = vmul.f32 %v980, %v573
        %v989 = vmul.f32 %v981, %v574
        %v990 = vmul.f32 %v982, %v575
        %999 = vrot.lane.b32.xlu0 %v983, 8
        %v1000 = vpop.permute.xlu0 %999
        %1001 = vrot.lane.b32.xlu0 %v984, 8
        %v1002 = vpop.permute.xlu0 %1001
        %1003 = vrot.lane.b32.xlu0 %v985, 8
        %v1004 = vpop.permute.xlu0 %1003
        %1005 = vrot.lane.b32.xlu0 %v986, 8
        %v1006 = vpop.permute.xlu0 %1005
        %1007 = vrot.lane.b32.xlu0 %v987, 8
        %v1008 = vpop.permute.xlu0 %1007
        %1009 = vrot.lane.b32.xlu0 %v988, 8
        %v1010 = vpop.permute.xlu0 %1009
        %1011 = vrot.lane.b32.xlu0 %v989, 8
        %v1012 = vpop.permute.xlu0 %1011
        %1013 = vrot.lane.b32.xlu0 %v990, 8
        %v1014 = vpop.permute.xlu0 %1013
        %vm1023 = vcmask 72768
        %1024 = vst.msk [vmem:[#allocation5] sm:$0xff] %vm1023, %v1000
        %1025 = vst.msk [vmem:[#allocation5 + $0x8] sm:$0xff] %vm1023, %v1002
        %1026 = vst.msk [vmem:[#allocation5 + $0x10] sm:$0xff] %vm1023, %v1004
        %1027 = vst.msk [vmem:[#allocation5 + $0x18] sm:$0xff] %vm1023, %v1006
        %1028 = vst.msk [vmem:[#allocation5 + $0x20] sm:$0xff] %vm1023, %v1008
        %1029 = vst.msk [vmem:[#allocation5 + $0x28] sm:$0xff] %vm1023, %v1010
        %1030 = vst.msk [vmem:[#allocation5 + $0x30] sm:$0xff] %vm1023, %v1012
        %1031 = vst.msk [vmem:[#allocation5 + $0x38] sm:$0xff] %vm1023, %v1014
        %v1032 = vld [vmem:[#allocation5] sm:$0xff]
        %v1033 = vld [vmem:[#allocation5 + $0x8] sm:$0xff]
        %v1034 = vld [vmem:[#allocation5 + $0x10] sm:$0xff]
        %v1035 = vld [vmem:[#allocation5 + $0x18] sm:$0xff]
        %v1036 = vld [vmem:[#allocation5 + $0x20] sm:$0xff]
        %v1037 = vld [vmem:[#allocation5 + $0x28] sm:$0xff]
        %v1038 = vld [vmem:[#allocation5 + $0x30] sm:$0xff]
        %v1039 = vld [vmem:[#allocation5 + $0x38] sm:$0xff]
        %v1040 = vld [vmem:[%s1] sm:$0xff]
        %v1041 = vld [vmem:[%s1 + $0x8] sm:$0x1]
        %v1042 = vld [vmem:[%s2] sm:$0x1]
        %v1044 = vlaneseq
        %v1045 = vshrl.u32 %v1044, 7
        %v1046 = vsub.s32 0, %v1045
        %v1047 = vrot.slane %v1042, %v1046
        %vm1049 = vcmask 72704
        %v1051 = vsel %vm1049, %v1032, 0
        %v1054 = vsel %vm1049, %v1033, 0
        %v1057 = vsel %vm1049, %v1034, 0
        %v1060 = vsel %vm1049, %v1035, 0
        %v1063 = vsel %vm1049, %v1036, 0
        %v1066 = vsel %vm1049, %v1037, 0
        %v1069 = vsel %vm1049, %v1038, 0
        %v1072 = vsel %vm1049, %v1039, 0
        %vm1074 = vcmask 1040384
        %v1076 = vsel %vm1074, %v1041, 0
        %1078 = vmatprep.subr.mxu0 0.0
        %1079 = vmatpush1.msra.mxu0 %v1040
        %1080 = vmatprep.subr.mxu0 0.0
        %1081 = vmatpush1.msra.mxu0 %v1076
        %1082 = vmatprep.subr.mxu0 0.0
        %1083 = vmatpush1.msra.mxu0 0.0
        %1084 = vmatprep.subr.mxu0 0.0
        %1085 = vmatpush1.msra.mxu0 0.0
        %1086 = vmatprep.subr.mxu0 0.0
        %1087 = vmatpush1.msra.mxu0 0.0
        %1088 = vmatprep.subr.mxu0 0.0
        %1089 = vmatpush1.msra.mxu0 0.0
        %1090 = vmatprep.subr.mxu0 0.0
        %1091 = vmatpush1.msra.mxu0 0.0
        %1092 = vmatprep.subr.mxu0 0.0
        %1093 = vmatpush1.msra.mxu0 0.0
        %1094 = vmatprep.subr.mxu0 0.0
        %1095 = vmatpush1.msra.mxu0 0.0
        %1096 = vmatprep.subr.mxu0 0.0
        %1097 = vmatpush1.msra.mxu0 0.0
        %1098 = vmatprep.subr.mxu0 0.0
        %1099 = vmatpush1.msra.mxu0 0.0
        %1100 = vmatprep.subr.mxu0 0.0
        %1101 = vmatpush1.msra.mxu0 0.0
        %1102 = vmatprep.subr.mxu0 0.0
        %1103 = vmatpush1.msra.mxu0 0.0
        %1104 = vmatprep.subr.mxu0 0.0
        %1105 = vmatpush1.msra.mxu0 0.0
        %1106 = vmatprep.subr.mxu0 0.0
        %1107 = vmatpush1.msra.mxu0 0.0
        %1108 = vmatprep.subr.mxu0 0.0
        %1109 = vmatpush1.msra.mxu0 0.0
        %1110 = vmatprep.subr.mxu0 0.0
        %1111 = vmatpush1.msra.mxu0 0.0
        %1112 = vmatprep.subr.mxu0 0.0
        %1113 = vmatpush1.msra.mxu0 0.0
        %1114 = vmatprep.subr.mxu0 0.0
        %1115 = vmatpush1.msra.mxu0 0.0
        %1116 = vmatprep.subr.mxu0 0.0
        %1117 = vmatpush1.msra.mxu0 0.0
        %1118 = vmatprep.subr.mxu0 0.0
        %1119 = vmatpush1.msra.mxu0 0.0
        %1120 = vmatprep.subr.mxu0 0.0
        %1121 = vmatpush1.msra.mxu0 0.0
        %1122 = vmatprep.subr.mxu0 0.0
        %1123 = vmatpush1.msra.mxu0 0.0
        %1124 = vmatprep.subr.mxu0 0.0
        %1125 = vmatpush1.msra.mxu0 0.0
        %1126 = vmatprep.subr.mxu0 0.0
        %1127 = vmatpush1.msra.mxu0 0.0
        %1128 = vmatprep.subr.mxu0 0.0
        %1129 = vmatpush1.msra.mxu0 0.0
        %1130 = vmatprep.subr.mxu0 0.0
        %1131 = vmatpush1.msra.mxu0 0.0
        %1132 = vmatprep.subr.mxu0 0.0
        %1133 = vmatpush1.msra.mxu0 0.0
        %1134 = vmatprep.subr.mxu0 0.0
        %1135 = vmatpush1.msra.mxu0 0.0
        %1136 = vmatprep.subr.mxu0 0.0
        %1137 = vmatpush1.msra.mxu0 0.0
        %1138 = vmatprep.subr.mxu0 0.0
        %1139 = vmatpush1.msra.mxu0 0.0
        %1140 = vmatprep.subr.mxu0 0.0
        %1141 = vmatpush1.msra.mxu0 0.0
        %1142 = vmatprep.mubr.f32.mxu0 0.0
        %1143 = vmatmul.mubr.f32.gmra.mrb[0].mxu0 %v1051
        %v1144 = vpop.f32.mrb[0].mxu0
        %v1145 = vadd.f32 %v1047, %v1144
        %v1146 = vpop.f32.mrb[0].mxu0
        %1147 = vmatprep.mubr.f32.mxu0 0.0
        %1148 = vmatmul.mubr.f32.gmra.mrb[0].mxu0 %v1054
        %v1149 = vpop.f32.mrb[0].mxu0
        %v1150 = vadd.f32 %v1047, %v1149
        %v1151 = vpop.f32.mrb[0].mxu0
        %1152 = vmatprep.mubr.f32.mxu0 0.0
        %1153 = vmatmul.mubr.f32.gmra.mrb[0].mxu0 %v1057
        %v1154 = vpop.f32.mrb[0].mxu0
        %v1155 = vadd.f32 %v1047, %v1154
        %v1156 = vpop.f32.mrb[0].mxu0
        %1157 = vmatprep.mubr.f32.mxu0 0.0
        %1158 = vmatmul.mubr.f32.gmra.mrb[0].mxu0 %v1060
        %v1159 = vpop.f32.mrb[0].mxu0
        %v1160 = vadd.f32 %v1047, %v1159
        %v1161 = vpop.f32.mrb[0].mxu0
        %1162 = vmatprep.mubr.f32.mxu0 0.0
        %1163 = vmatmul.mubr.f32.gmra.mrb[0].mxu0 %v1063
        %v1164 = vpop.f32.mrb[0].mxu0
        %v1165 = vadd.f32 %v1047, %v1164
        %v1166 = vpop.f32.mrb[0].mxu0
        %1167 = vmatprep.mubr.f32.mxu0 0.0
        %1168 = vmatmul.mubr.f32.gmra.mrb[0].mxu0 %v1066
        %v1169 = vpop.f32.mrb[0].mxu0
        %v1170 = vadd.f32 %v1047, %v1169
        %v1171 = vpop.f32.mrb[0].mxu0
        %1172 = vmatprep.mubr.f32.mxu0 0.0
        %1173 = vmatmul.mubr.f32.gmra.mrb[0].mxu0 %v1069
        %v1174 = vpop.f32.mrb[0].mxu0
        %v1175 = vadd.f32 %v1047, %v1174
        %v1176 = vpop.f32.mrb[0].mxu0
        %1177 = vmatprep.mubr.f32.mxu0 0.0
        %1178 = vmatmul.mubr.f32.gmra.mrb[0].mxu0 %v1072
        %v1179 = vpop.f32.mrb[0].mxu0
        %v1180 = vadd.f32 %v1047, %v1179
        %v1181 = vpop.f32.mrb[0].mxu0
        %1182 = vdwg.mxu0
        %v1183 = vmax.f32 %v1145, 0.0
        %v1184 = vmax.f32 %v1150, 0.0
        %v1185 = vmax.f32 %v1155, 0.0
        %v1186 = vmax.f32 %v1160, 0.0
        %v1187 = vmax.f32 %v1165, 0.0
        %v1188 = vmax.f32 %v1170, 0.0
        %v1189 = vmax.f32 %v1175, 0.0
        %v1190 = vmax.f32 %v1180, 0.0
        %v1191 = vld [vmem:[%s9] sm:$0xff]
        %v1192 = vld [vmem:[%s9 + $0x8] sm:$0xff]
        %vm1193 = vcmask 523264
        %v1195 = vsel %vm1193, %v1191, 0
        %v1198 = vsel %vm1193, %v1192, 0
        %1200 = vmatprep.subr.mxu0 0.0
        %1201 = vmatpush1.msra.mxu0 %v1183
        %1202 = vmatprep.subr.mxu0 0.0
        %1203 = vmatpush1.msra.mxu0 %v1184
        %1204 = vmatprep.subr.mxu0 0.0
        %1205 = vmatpush1.msra.mxu0 %v1185
        %1206 = vmatprep.subr.mxu0 0.0
        %1207 = vmatpush1.msra.mxu0 %v1186
        %1208 = vmatprep.subr.mxu0 0.0
        %1209 = vmatpush1.msra.mxu0 %v1187
        %1210 = vmatprep.subr.mxu0 0.0
        %1211 = vmatpush1.msra.mxu0 %v1188
        %1212 = vmatprep.subr.mxu0 0.0
        %1213 = vmatpush1.msra.mxu0 %v1189
        %1214 = vmatprep.subr.mxu0 0.0
        %1215 = vmatpush1.msra.mxu0 %v1190
        %1216 = vmatprep.subr.mxu0 0.0
        %1217 = vmatpush1.msra.mxu0 0.0
        %1218 = vmatprep.subr.mxu0 0.0
        %1219 = vmatpush1.msra.mxu0 0.0
        %1220 = vmatprep.subr.mxu0 0.0
        %1221 = vmatpush1.msra.mxu0 0.0
        %1222 = vmatprep.subr.mxu0 0.0
        %1223 = vmatpush1.msra.mxu0 0.0
        %1224 = vmatprep.subr.mxu0 0.0
        %1225 = vmatpush1.msra.mxu0 0.0
        %1226 = vmatprep.subr.mxu0 0.0
        %1227 = vmatpush1.msra.mxu0 0.0
        %1228 = vmatprep.subr.mxu0 0.0
        %1229 = vmatpush1.msra.mxu0 0.0
        %1230 = vmatprep.subr.mxu0 0.0
        %1231 = vmatpush1.msra.mxu0 0.0
        %1232 = vmatprep.subr.mxu0 0.0
        %1233 = vmatpush1.msra.mxu0 0.0
        %1234 = vmatprep.subr.mxu0 0.0
        %1235 = vmatpush1.msra.mxu0 0.0
        %1236 = vmatprep.subr.mxu0 0.0
        %1237 = vmatpush1.msra.mxu0 0.0
        %1238 = vmatprep.subr.mxu0 0.0
        %1239 = vmatpush1.msra.mxu0 0.0
        %1240 = vmatprep.subr.mxu0 0.0
        %1241 = vmatpush1.msra.mxu0 0.0
        %1242 = vmatprep.subr.mxu0 0.0
        %1243 = vmatpush1.msra.mxu0 0.0
        %1244 = vmatprep.subr.mxu0 0.0
        %1245 = vmatpush1.msra.mxu0 0.0
        %1246 = vmatprep.subr.mxu0 0.0
        %1247 = vmatpush1.msra.mxu0 0.0
        %1248 = vmatprep.subr.mxu0 0.0
        %1249 = vmatpush1.msra.mxu0 0.0
        %1250 = vmatprep.subr.mxu0 0.0
        %1251 = vmatpush1.msra.mxu0 0.0
        %1252 = vmatprep.subr.mxu0 0.0
        %1253 = vmatpush1.msra.mxu0 0.0
        %1254 = vmatprep.subr.mxu0 0.0
        %1255 = vmatpush1.msra.mxu0 0.0
        %1256 = vmatprep.subr.mxu0 0.0
        %1257 = vmatpush1.msra.mxu0 0.0
        %1258 = vmatprep.subr.mxu0 0.0
        %1259 = vmatpush1.msra.mxu0 0.0
        %1260 = vmatprep.subr.mxu0 0.0
        %1261 = vmatpush1.msra.mxu0 0.0
        %1262 = vmatprep.subr.mxu0 0.0
        %1263 = vmatpush1.msra.mxu0 0.0
        %1264 = vmatprep.mubr.f32.mxu0 0.0
        %1265 = vmatmul.mubr.f32.gmra.mrb[0].mxu0 %v1195
        %v1266 = vpop.f32.mrb[0].mxu0
        %v1267 = vadd.f32 0.0, %v1266
        %v1268 = vpop.f32.mrb[0].mxu0
        %1269 = vmatprep.mubr.f32.mxu0 0.0
        %1270 = vmatmul.mubr.f32.gmra.mrb[0].mxu0 %v1198
        %v1271 = vpop.f32.mrb[0].mxu0
        %v1272 = vadd.f32 0.0, %v1271
        %v1273 = vpop.f32.mrb[0].mxu0
        %1274 = vdwg.mxu0
        %s1275 = scalar_lea.vmem %s9, 16
        %v1276 = vld [vmem:[%s1275] sm:$0xff]
        %v1277 = vld [vmem:[%s1275 + $0x8] sm:$0xff]
        %v1279 = vsel %vm1193, %v1276, 0
        %v1282 = vsel %vm1193, %v1277, 0
        %1284 = vmatprep.subr.mxu0 0.0
        %1285 = vmatpush1.msra.mxu0 %v1183
        %1286 = vmatprep.subr.mxu0 0.0
        %1287 = vmatpush1.msra.mxu0 %v1184
        %1288 = vmatprep.subr.mxu0 0.0
        %1289 = vmatpush1.msra.mxu0 %v1185
        %1290 = vmatprep.subr.mxu0 0.0
        %1291 = vmatpush1.msra.mxu0 %v1186
        %1292 = vmatprep.subr.mxu0 0.0
        %1293 = vmatpush1.msra.mxu0 %v1187
        %1294 = vmatprep.subr.mxu0 0.0
        %1295 = vmatpush1.msra.mxu0 %v1188
        %1296 = vmatprep.subr.mxu0 0.0
        %1297 = vmatpush1.msra.mxu0 %v1189
        %1298 = vmatprep.subr.mxu0 0.0
        %1299 = vmatpush1.msra.mxu0 %v1190
        %1300 = vmatprep.subr.mxu0 0.0
        %1301 = vmatpush1.msra.mxu0 0.0
        %1302 = vmatprep.subr.mxu0 0.0
        %1303 = vmatpush1.msra.mxu0 0.0
        %1304 = vmatprep.subr.mxu0 0.0
        %1305 = vmatpush1.msra.mxu0 0.0
        %1306 = vmatprep.subr.mxu0 0.0
        %1307 = vmatpush1.msra.mxu0 0.0
        %1308 = vmatprep.subr.mxu0 0.0
        %1309 = vmatpush1.msra.mxu0 0.0
        %1310 = vmatprep.subr.mxu0 0.0
        %1311 = vmatpush1.msra.mxu0 0.0
        %1312 = vmatprep.subr.mxu0 0.0
        %1313 = vmatpush1.msra.mxu0 0.0
        %1314 = vmatprep.subr.mxu0 0.0
        %1315 = vmatpush1.msra.mxu0 0.0
        %1316 = vmatprep.subr.mxu0 0.0
        %1317 = vmatpush1.msra.mxu0 0.0
        %1318 = vmatprep.subr.mxu0 0.0
        %1319 = vmatpush1.msra.mxu0 0.0
        %1320 = vmatprep.subr.mxu0 0.0
        %1321 = vmatpush1.msra.mxu0 0.0
        %1322 = vmatprep.subr.mxu0 0.0
        %1323 = vmatpush1.msra.mxu0 0.0
        %1324 = vmatprep.subr.mxu0 0.0
        %1325 = vmatpush1.msra.mxu0 0.0
        %1326 = vmatprep.subr.mxu0 0.0
        %1327 = vmatpush1.msra.mxu0 0.0
        %1328 = vmatprep.subr.mxu0 0.0
        %1329 = vmatpush1.msra.mxu0 0.0
        %1330 = vmatprep.subr.mxu0 0.0
        %1331 = vmatpush1.msra.mxu0 0.0
        %1332 = vmatprep.subr.mxu0 0.0
        %1333 = vmatpush1.msra.mxu0 0.0
        %1334 = vmatprep.subr.mxu0 0.0
        %1335 = vmatpush1.msra.mxu0 0.0
        %1336 = vmatprep.subr.mxu0 0.0
        %1337 = vmatpush1.msra.mxu0 0.0
        %1338 = vmatprep.subr.mxu0 0.0
        %1339 = vmatpush1.msra.mxu0 0.0
        %1340 = vmatprep.subr.mxu0 0.0
        %1341 = vmatpush1.msra.mxu0 0.0
        %1342 = vmatprep.subr.mxu0 0.0
        %1343 = vmatpush1.msra.mxu0 0.0
        %1344 = vmatprep.subr.mxu0 0.0
        %1345 = vmatpush1.msra.mxu0 0.0
        %1346 = vmatprep.subr.mxu0 0.0
        %1347 = vmatpush1.msra.mxu0 0.0
        %1348 = vmatprep.mubr.f32.mxu0 0.0
        %1349 = vmatmul.mubr.f32.gmra.mrb[0].mxu0 %v1279
        %v1350 = vpop.f32.mrb[0].mxu0
        %v1351 = vadd.f32 0.0, %v1350
        %v1352 = vpop.f32.mrb[0].mxu0
        %1353 = vmatprep.mubr.f32.mxu0 0.0
        %1354 = vmatmul.mubr.f32.gmra.mrb[0].mxu0 %v1282
        %v1355 = vpop.f32.mrb[0].mxu0
        %v1356 = vadd.f32 0.0, %v1355
        %v1357 = vpop.f32.mrb[0].mxu0
        %1358 = vdwg.mxu0
        %v1359 = vmax.f32 %v1267, %v1351
        %v1360 = vmax.f32 %v1272, %v1356
        %s1361 = scalar_lea.vmem %s9, 32
        %v1362 = vld [vmem:[%s1361] sm:$0xff]
        %v1363 = vld [vmem:[%s1361 + $0x8] sm:$0xff]
        %v1365 = vsel %vm1193, %v1362, 0
        %v1368 = vsel %vm1193, %v1363, 0
        %1370 = vmatprep.subr.mxu0 0.0
        %1371 = vmatpush1.msra.mxu0 %v1183
        %1372 = vmatprep.subr.mxu0 0.0
        %1373 = vmatpush1.msra.mxu0 %v1184
        %1374 = vmatprep.subr.mxu0 0.0
        %1375 = vmatpush1.msra.mxu0 %v1185
        %1376 = vmatprep.subr.mxu0 0.0
        %1377 = vmatpush1.msra.mxu0 %v1186
        %1378 = vmatprep.subr.mxu0 0.0
        %1379 = vmatpush1.msra.mxu0 %v1187
        %1380 = vmatprep.subr.mxu0 0.0
        %1381 = vmatpush1.msra.mxu0 %v1188
        %1382 = vmatprep.subr.mxu0 0.0
        %1383 = vmatpush1.msra.mxu0 %v1189
        %1384 = vmatprep.subr.mxu0 0.0
        %1385 = vmatpush1.msra.mxu0 %v1190
        %1386 = vmatprep.subr.mxu0 0.0
        %1387 = vmatpush1.msra.mxu0 0.0
        %1388 = vmatprep.subr.mxu0 0.0
        %1389 = vmatpush1.msra.mxu0 0.0
        %1390 = vmatprep.subr.mxu0 0.0
        %1391 = vmatpush1.msra.mxu0 0.0
        %1392 = vmatprep.subr.mxu0 0.0
        %1393 = vmatpush1.msra.mxu0 0.0
        %1394 = vmatprep.subr.mxu0 0.0
        %1395 = vmatpush1.msra.mxu0 0.0
        %1396 = vmatprep.subr.mxu0 0.0
        %1397 = vmatpush1.msra.mxu0 0.0
        %1398 = vmatprep.subr.mxu0 0.0
        %1399 = vmatpush1.msra.mxu0 0.0
        %1400 = vmatprep.subr.mxu0 0.0
        %1401 = vmatpush1.msra.mxu0 0.0
        %1402 = vmatprep.subr.mxu0 0.0
        %1403 = vmatpush1.msra.mxu0 0.0
        %1404 = vmatprep.subr.mxu0 0.0
        %1405 = vmatpush1.msra.mxu0 0.0
        %1406 = vmatprep.subr.mxu0 0.0
        %1407 = vmatpush1.msra.mxu0 0.0
        %1408 = vmatprep.subr.mxu0 0.0
        %1409 = vmatpush1.msra.mxu0 0.0
        %1410 = vmatprep.subr.mxu0 0.0
        %1411 = vmatpush1.msra.mxu0 0.0
        %1412 = vmatprep.subr.mxu0 0.0
        %1413 = vmatpush1.msra.mxu0 0.0
        %1414 = vmatprep.subr.mxu0 0.0
        %1415 = vmatpush1.msra.mxu0 0.0
        %1416 = vmatprep.subr.mxu0 0.0
        %1417 = vmatpush1.msra.mxu0 0.0
        %1418 = vmatprep.subr.mxu0 0.0
        %1419 = vmatpush1.msra.mxu0 0.0
        %1420 = vmatprep.subr.mxu0 0.0
        %1421 = vmatpush1.msra.mxu0 0.0
        %1422 = vmatprep.subr.mxu0 0.0
        %1423 = vmatpush1.msra.mxu0 0.0
        %1424 = vmatprep.subr.mxu0 0.0
        %1425 = vmatpush1.msra.mxu0 0.0
        %1426 = vmatprep.subr.mxu0 0.0
        %1427 = vmatpush1.msra.mxu0 0.0
        %1428 = vmatprep.subr.mxu0 0.0
        %1429 = vmatpush1.msra.mxu0 0.0
        %1430 = vmatprep.subr.mxu0 0.0
        %1431 = vmatpush1.msra.mxu0 0.0
        %1432 = vmatprep.subr.mxu0 0.0
        %1433 = vmatpush1.msra.mxu0 0.0
        %1434 = vmatprep.mubr.f32.mxu0 0.0
        %1435 = vmatmul.mubr.f32.gmra.mrb[0].mxu0 %v1365
        %v1436 = vpop.f32.mrb[0].mxu0
        %v1437 = vadd.f32 0.0, %v1436
        %v1438 = vpop.f32.mrb[0].mxu0
        %1439 = vmatprep.mubr.f32.mxu0 0.0
        %1440 = vmatmul.mubr.f32.gmra.mrb[0].mxu0 %v1368
        %v1441 = vpop.f32.mrb[0].mxu0
        %v1442 = vadd.f32 0.0, %v1441
        %v1443 = vpop.f32.mrb[0].mxu0
        %1444 = vdwg.mxu0
        %v1445 = vmax.f32 %v1359, %v1437
        %v1446 = vmax.f32 %v1360, %v1442
        %s1447 = scalar_lea.vmem %s9, 48
        %v1448 = vld [vmem:[%s1447] sm:$0xff]
        %v1449 = vld [vmem:[%s1447 + $0x8] sm:$0xff]
        %v1451 = vsel %vm1193, %v1448, 0
        %v1454 = vsel %vm1193, %v1449, 0
        %1456 = vmatprep.subr.mxu0 0.0
        %1457 = vmatpush1.msra.mxu0 %v1183
        %1458 = vmatprep.subr.mxu0 0.0
        %1459 = vmatpush1.msra.mxu0 %v1184
        %1460 = vmatprep.subr.mxu0 0.0
        %1461 = vmatpush1.msra.mxu0 %v1185
        %1462 = vmatprep.subr.mxu0 0.0
        %1463 = vmatpush1.msra.mxu0 %v1186
        %1464 = vmatprep.subr.mxu0 0.0
        %1465 = vmatpush1.msra.mxu0 %v1187
        %1466 = vmatprep.subr.mxu0 0.0
        %1467 = vmatpush1.msra.mxu0 %v1188
        %1468 = vmatprep.subr.mxu0 0.0
        %1469 = vmatpush1.msra.mxu0 %v1189
        %1470 = vmatprep.subr.mxu0 0.0
        %1471 = vmatpush1.msra.mxu0 %v1190
        %1472 = vmatprep.subr.mxu0 0.0
        %1473 = vmatpush1.msra.mxu0 0.0
        %1474 = vmatprep.subr.mxu0 0.0
        %1475 = vmatpush1.msra.mxu0 0.0
        %1476 = vmatprep.subr.mxu0 0.0
        %1477 = vmatpush1.msra.mxu0 0.0
        %1478 = vmatprep.subr.mxu0 0.0
        %1479 = vmatpush1.msra.mxu0 0.0
        %1480 = vmatprep.subr.mxu0 0.0
        %1481 = vmatpush1.msra.mxu0 0.0
        %1482 = vmatprep.subr.mxu0 0.0
        %1483 = vmatpush1.msra.mxu0 0.0
        %1484 = vmatprep.subr.mxu0 0.0
        %1485 = vmatpush1.msra.mxu0 0.0
        %1486 = vmatprep.subr.mxu0 0.0
        %1487 = vmatpush1.msra.mxu0 0.0
        %1488 = vmatprep.subr.mxu0 0.0
        %1489 = vmatpush1.msra.mxu0 0.0
        %1490 = vmatprep.subr.mxu0 0.0
        %1491 = vmatpush1.msra.mxu0 0.0
        %1492 = vmatprep.subr.mxu0 0.0
        %1493 = vmatpush1.msra.mxu0 0.0
        %1494 = vmatprep.subr.mxu0 0.0
        %1495 = vmatpush1.msra.mxu0 0.0
        %1496 = vmatprep.subr.mxu0 0.0
        %1497 = vmatpush1.msra.mxu0 0.0
        %1498 = vmatprep.subr.mxu0 0.0
        %1499 = vmatpush1.msra.mxu0 0.0
        %1500 = vmatprep.subr.mxu0 0.0
        %1501 = vmatpush1.msra.mxu0 0.0
        %1502 = vmatprep.subr.mxu0 0.0
        %1503 = vmatpush1.msra.mxu0 0.0
        %1504 = vmatprep.subr.mxu0 0.0
        %1505 = vmatpush1.msra.mxu0 0.0
        %1506 = vmatprep.subr.mxu0 0.0
        %1507 = vmatpush1.msra.mxu0 0.0
        %1508 = vmatprep.subr.mxu0 0.0
        %1509 = vmatpush1.msra.mxu0 0.0
        %1510 = vmatprep.subr.mxu0 0.0
        %1511 = vmatpush1.msra.mxu0 0.0
        %1512 = vmatprep.subr.mxu0 0.0
        %1513 = vmatpush1.msra.mxu0 0.0
        %1514 = vmatprep.subr.mxu0 0.0
        %1515 = vmatpush1.msra.mxu0 0.0
        %1516 = vmatprep.subr.mxu0 0.0
        %1517 = vmatpush1.msra.mxu0 0.0
        %1518 = vmatprep.subr.mxu0 0.0
        %1519 = vmatpush1.msra.mxu0 0.0
        %1520 = vmatprep.mubr.f32.mxu0 0.0
        %1521 = vmatmul.mubr.f32.gmra.mrb[0].mxu0 %v1451
        %v1522 = vpop.f32.mrb[0].mxu0
        %v1523 = vadd.f32 0.0, %v1522
        %v1524 = vpop.f32.mrb[0].mxu0
        %1525 = vmatprep.mubr.f32.mxu0 0.0
        %1526 = vmatmul.mubr.f32.gmra.mrb[0].mxu0 %v1454
        %v1527 = vpop.f32.mrb[0].mxu0
        %v1528 = vadd.f32 0.0, %v1527
        %v1529 = vpop.f32.mrb[0].mxu0
        %1530 = vdwg.mxu0
        %v1531 = vmax.f32 %v1445, %v1523
        %v1532 = vmax.f32 %v1446, %v1528
        %1533 = vst.msk [vmem:[#allocation3 + $0x5] sm:$0xff] %vm397, %v1531
        %1534 = vst.msk [vmem:[#allocation3 + $0xd] sm:$0xff] %vm397, %v1532
        %vm1535 = vcmp.lt.s32.totalorder %v424, 0
        %v1536 = vsub.s32 0, %v424
        %v1537 = vsel %vm1535, %v1536, %v424
        %v1538 = vshrl.u32 %v1537, 2
        %v1539 = vand.u32 %v1537, 3
        %v1540 = vsub.s32 0, %v1539
        %v1541 = vsel %vm1535, %v1540, %v1539
        %vm1542 = vcmp.lt.s32.totalorder %v425, 0
        %v1543 = vsub.s32 0, %v425
        %v1544 = vsel %vm1542, %v1543, %v425
        %v1545 = vshrl.u32 %v1544, 2
        %v1546 = vand.u32 %v1544, 3
        %v1547 = vsub.s32 0, %v1546
        %v1548 = vsel %vm1542, %v1547, %v1546
        %vm1549 = vcmp.ne.s32.totalorder %v1541, 0
        %vm1550 = vcmp.ne.s32.totalorder %v1548, 0
        %vm1551 = vcmp.lt.s32.totalorder %v1541, 0
        %vm1552 = vcmp.lt.s32.totalorder %v1548, 0
        %vm1553 = vmand %vm1551, %vm1549
        %vm1554 = vmand %vm1552, %vm1550
        %v1555 = vadd.s32 %v1541, 4
        %v1556 = vadd.s32 %v1548, 4
        %v1557 = vsel %vm1553, %v1555, %v1541
        %v1558 = vsel %vm1554, %v1556, %v1548
        %vm1559 = vcmp.ne.s32.totalorder %v1557, 0
        %vm1560 = vcmp.ne.s32.totalorder %v1558, 0
        %v1561 = vsel %vm1559, 1, 0
        %v1562 = vsel %vm1560, 1, 0
        %v1563 = vcvt.s32.f32 %v1561
        %v1564 = vcvt.s32.f32 %v1562
        %vm1565 = vcmp.ne.s32.totalorder %v1557, 3
        %vm1566 = vcmp.ne.s32.totalorder %v1558, 3
        %v1567 = vsel %vm1565, 1, 0
        %v1568 = vsel %vm1566, 1, 0
        %v1569 = vcvt.s32.f32 %v1567
        %v1570 = vcvt.s32.f32 %v1568
        %v1571 = vld [vmem:[#allocation3] sm:$0xff]
        %v1572 = vld [vmem:[#allocation3 + $0x8] sm:$0xff]
        %v1573 = vmul.f32 %v1571, %v1563
        %v1574 = vmul.f32 %v1572, %v1564
        %1575 = vst.msk [vmem:[#allocation6] sm:$0xff] %vm397, %v1573
        %1576 = vst.msk [vmem:[#allocation6 + $0x8] sm:$0xff] %vm397, %v1574
        %v1577 = vld [vmem:[#allocation3 + $0x1] sm:$0xff]
        %v1578 = vld [vmem:[#allocation3 + $0x9] sm:$0xff]
        %1581 = vrot.lane.b32.xlu0 %v1577, 8
        %v1582 = vpop.permute.xlu0 %1581
        %1583 = vrot.lane.b32.xlu0 %v1578, 8
        %v1584 = vpop.permute.xlu0 %1583
        %vm1587 = vcmask 130112
        %1588 = vst.msk [vmem:[#allocation6] sm:$0xff] %vm1587, %v1582
        %1589 = vst.msk [vmem:[#allocation6 + $0x8] sm:$0xff] %vm1587, %v1584
        %v1590 = vld [vmem:[#allocation3 + $0x2] sm:$0xff]
        %v1591 = vld [vmem:[#allocation3 + $0xa] sm:$0xff]
        %v1592 = vmul.f32 %v1590, %v1569
        %v1593 = vmul.f32 %v1591, %v1570
        %1596 = vrot.lane.b32.xlu0 %v1592, 16
        %v1597 = vpop.permute.xlu0 %1596
        %1598 = vrot.lane.b32.xlu0 %v1593, 16
        %v1599 = vpop.permute.xlu0 %1598
        %vm1602 = vcmask 195712
        %1603 = vst.msk [vmem:[#allocation6] sm:$0xff] %vm1602, %v1597
        %1604 = vst.msk [vmem:[#allocation6 + $0x8] sm:$0xff] %vm1602, %v1599
        %v1605 = vld [vmem:[#allocation3 + $0x4] sm:$0xff]
        %v1606 = vld [vmem:[#allocation3 + $0xc] sm:$0xff]
        %v1607 = vmul.f32 %v1605, %v1563
        %v1608 = vmul.f32 %v1606, %v1564
        %1611 = vrot.lane.b32.xlu0 %v1607, 24
        %v1612 = vpop.permute.xlu0 %1611
        %1613 = vrot.lane.b32.xlu0 %v1608, 24
        %v1614 = vpop.permute.xlu0 %1613
        %vm1617 = vcmask 261312
        %1618 = vst.msk [vmem:[#allocation6] sm:$0xff] %vm1617, %v1612
        %1619 = vst.msk [vmem:[#allocation6 + $0x8] sm:$0xff] %vm1617, %v1614
        %v1620 = vld [vmem:[#allocation3 + $0x5] sm:$0xff]
        %v1621 = vld [vmem:[#allocation3 + $0xd] sm:$0xff]
        %1624 = vrot.lane.b32.xlu0 %v1620, 32
        %v1625 = vpop.permute.xlu0 %1624
        %1626 = vrot.lane.b32.xlu0 %v1621, 32
        %v1627 = vpop.permute.xlu0 %1626
        %vm1630 = vcmask 326912
        %1631 = vst.msk [vmem:[#allocation6] sm:$0xff] %vm1630, %v1625
        %1632 = vst.msk [vmem:[#allocation6 + $0x8] sm:$0xff] %vm1630, %v1627
        %v1633 = vld [vmem:[#allocation3 + $0x6] sm:$0xff]
        %v1634 = vld [vmem:[#allocation3 + $0xe] sm:$0xff]
        %v1635 = vmul.f32 %v1633, %v1569
        %v1636 = vmul.f32 %v1634, %v1570
        %1639 = vrot.lane.b32.xlu0 %v1635, 40
        %v1640 = vpop.permute.xlu0 %1639
        %1641 = vrot.lane.b32.xlu0 %v1636, 40
        %v1642 = vpop.permute.xlu0 %1641
        %vm1645 = vcmask 392512
        %1646 = vst.msk [vmem:[#allocation6] sm:$0xff] %vm1645, %v1640
        %1647 = vst.msk [vmem:[#allocation6 + $0x8] sm:$0xff] %vm1645, %v1642
        %v1648 = vld [vmem:[#allocation3 + $0x8] sm:$0xff]
        %v1649 = vld [vmem:[#allocation3 + $0x10] sm:$0xff]
        %v1650 = vmul.f32 %v1648, %v1563
        %v1651 = vmul.f32 %v1649, %v1564
        %1654 = vrot.lane.b32.xlu0 %v1650, 48
        %v1655 = vpop.permute.xlu0 %1654
        %1656 = vrot.lane.b32.xlu0 %v1651, 48
        %v1657 = vpop.permute.xlu0 %1656
        %vm1660 = vcmask 458112
        %1661 = vst.msk [vmem:[#allocation6] sm:$0xff] %vm1660, %v1655
        %1662 = vst.msk [vmem:[#allocation6 + $0x8] sm:$0xff] %vm1660, %v1657
        %v1663 = vld [vmem:[#allocation3 + $0x9] sm:$0xff]
        %v1664 = vld [vmem:[#allocation3 + $0x11] sm:$0xff]
        %1667 = vrot.lane.b32.xlu0 %v1663, 56
        %v1668 = vpop.permute.xlu0 %1667
        %1669 = vrot.lane.b32.xlu0 %v1664, 56
        %v1670 = vpop.permute.xlu0 %1669
        %vm1673 = vcmask 523712
        %1674 = vst.msk [vmem:[#allocation6] sm:$0xff] %vm1673, %v1668
        %1675 = vst.msk [vmem:[#allocation6 + $0x8] sm:$0xff] %vm1673, %v1670
        %v1676 = vld [vmem:[#allocation3 + $0xa] sm:$0xff]
        %v1677 = vld [vmem:[#allocation3 + $0x12] sm:$0xff]
        %v1678 = vmul.f32 %v1676, %v1569
        %v1679 = vmul.f32 %v1677, %v1570
        %1682 = vrot.lane.b32.xlu0 %v1678, 64
        %v1683 = vpop.permute.xlu0 %1682
        %1684 = vrot.lane.b32.xlu0 %v1679, 64
        %v1685 = vpop.permute.xlu0 %1684
        %vm1688 = vcmask 589312
        %1689 = vst.msk [vmem:[#allocation6] sm:$0xff] %vm1688, %v1683
        %1690 = vst.msk [vmem:[#allocation6 + $0x8] sm:$0xff] %vm1688, %v1685
        %v1691 = vld [vmem:[#allocation6] sm:$0xff]
        %v1692 = vld [vmem:[#allocation6 + $0x8] sm:$0xff]
        %v1693 = vld [vmem:[%s3] sm:$0xff]
        %v1694 = vld [vmem:[%s3 + $0x8] sm:$0xff]
        %v1695 = vld [vmem:[%s3 + $0x10] sm:$0xff]
        %v1696 = vld [vmem:[%s3 + $0x18] sm:$0xff]
        %v1697 = vld [vmem:[%s3 + $0x20] sm:$0xff]
        %v1698 = vld [vmem:[%s3 + $0x28] sm:$0xff]
        %v1699 = vld [vmem:[%s3 + $0x30] sm:$0xff]
        %v1700 = vld [vmem:[%s3 + $0x38] sm:$0xff]
        %v1701 = vld [vmem:[%s3 + $0x40] sm:$0xff]
        %v1702 = vld [vmem:[%s4] sm:$0x1]
        %v1704 = vlaneseq
        %v1705 = vshrl.u32 %v1704, 7
        %v1706 = vsub.s32 0, %v1705
        %v1707 = vrot.slane %v1702, %v1706
        %vm1709 = vcmask 588800
        %v1711 = vsel %vm1709, %v1691, 0
        %v1714 = vsel %vm1709, %v1692, 0
        %1716 = vmatprep.subr.mxu0 0.0
        %1717 = vmatpush1.msra.mxu0 %v1693
        %1718 = vmatprep.subr.mxu0 0.0
        %1719 = vmatpush1.msra.mxu0 %v1694
        %1720 = vmatprep.subr.mxu0 0.0
        %1721 = vmatpush1.msra.mxu0 %v1695
        %1722 = vmatprep.subr.mxu0 0.0
        %1723 = vmatpush1.msra.mxu0 %v1696
        %1724 = vmatprep.subr.mxu0 0.0
        %1725 = vmatpush1.msra.mxu0 %v1697
        %1726 = vmatprep.subr.mxu0 0.0
        %1727 = vmatpush1.msra.mxu0 %v1698
        %1728 = vmatprep.subr.mxu0 0.0
        %1729 = vmatpush1.msra.mxu0 %v1699
        %1730 = vmatprep.subr.mxu0 0.0
        %1731 = vmatpush1.msra.mxu0 %v1700
        %1732 = vmatprep.subr.mxu0 0.0
        %1733 = vmatpush1.msra.mxu0 %v1701
        %1734 = vmatprep.subr.mxu0 0.0
        %1735 = vmatpush1.msra.mxu0 0.0
        %1736 = vmatprep.subr.mxu0 0.0
        %1737 = vmatpush1.msra.mxu0 0.0
        %1738 = vmatprep.subr.mxu0 0.0
        %1739 = vmatpush1.msra.mxu0 0.0
        %1740 = vmatprep.subr.mxu0 0.0
        %1741 = vmatpush1.msra.mxu0 0.0
        %1742 = vmatprep.subr.mxu0 0.0
        %1743 = vmatpush1.msra.mxu0 0.0
        %1744 = vmatprep.subr.mxu0 0.0
        %1745 = vmatpush1.msra.mxu0 0.0
        %1746 = vmatprep.subr.mxu0 0.0
        %1747 = vmatpush1.msra.mxu0 0.0
        %1748 = vmatprep.subr.mxu0 0.0
        %1749 = vmatpush1.msra.mxu0 0.0
        %1750 = vmatprep.subr.mxu0 0.0
        %1751 = vmatpush1.msra.mxu0 0.0
        %1752 = vmatprep.subr.mxu0 0.0
        %1753 = vmatpush1.msra.mxu0 0.0
        %1754 = vmatprep.subr.mxu0 0.0
        %1755 = vmatpush1.msra.mxu0 0.0
        %1756 = vmatprep.subr.mxu0 0.0
        %1757 = vmatpush1.msra.mxu0 0.0
        %1758 = vmatprep.subr.mxu0 0.0
        %1759 = vmatpush1.msra.mxu0 0.0
        %1760 = vmatprep.subr.mxu0 0.0
        %1761 = vmatpush1.msra.mxu0 0.0
        %1762 = vmatprep.subr.mxu0 0.0
        %1763 = vmatpush1.msra.mxu0 0.0
        %1764 = vmatprep.subr.mxu0 0.0
        %1765 = vmatpush1.msra.mxu0 0.0
        %1766 = vmatprep.subr.mxu0 0.0
        %1767 = vmatpush1.msra.mxu0 0.0
        %1768 = vmatprep.subr.mxu0 0.0
        %1769 = vmatpush1.msra.mxu0 0.0
        %1770 = vmatprep.subr.mxu0 0.0
        %1771 = vmatpush1.msra.mxu0 0.0
        %1772 = vmatprep.subr.mxu0 0.0
        %1773 = vmatpush1.msra.mxu0 0.0
        %1774 = vmatprep.subr.mxu0 0.0
        %1775 = vmatpush1.msra.mxu0 0.0
        %1776 = vmatprep.subr.mxu0 0.0
        %1777 = vmatpush1.msra.mxu0 0.0
        %1778 = vmatprep.subr.mxu0 0.0
        %1779 = vmatpush1.msra.mxu0 0.0
        %1780 = vmatprep.mubr.f32.mxu0 0.0
        %1781 = vmatmul.mubr.f32.gmra.mrb[0].mxu0 %v1711
        %v1782 = vpop.f32.mrb[0].mxu0
        %v1783 = vadd.f32 %v1707, %v1782
        %v1784 = vpop.f32.mrb[0].mxu0
        %1785 = vmatprep.mubr.f32.mxu0 0.0
        %1786 = vmatmul.mubr.f32.gmra.mrb[0].mxu0 %v1714
        %v1787 = vpop.f32.mrb[0].mxu0
        %v1788 = vadd.f32 %v1707, %v1787
        %v1789 = vpop.f32.mrb[0].mxu0
        %1790 = vdwg.mxu0
        %v1791 = vmax.f32 %v1783, 0.0
        %v1792 = vmax.f32 %v1788, 0.0
        %v1793 = vld [vmem:[%s10] sm:$0xf]
        %v1795 = vsel %vm403, %v1793, 0
        %1797 = vmatprep.subr.mxu0 0.0
        %1798 = vmatpush1.msra.mxu0 %v1791
        %1799 = vmatprep.subr.mxu0 0.0
        %1800 = vmatpush1.msra.mxu0 %v1792
        %1801 = vmatprep.subr.mxu0 0.0
        %1802 = vmatpush1.msra.mxu0 0.0
        %1803 = vmatprep.subr.mxu0 0.0
        %1804 = vmatpush1.msra.mxu0 0.0
        %1805 = vmatprep.subr.mxu0 0.0
        %1806 = vmatpush1.msra.mxu0 0.0
        %1807 = vmatprep.subr.mxu0 0.0
        %1808 = vmatpush1.msra.mxu0 0.0
        %1809 = vmatprep.subr.mxu0 0.0
        %1810 = vmatpush1.msra.mxu0 0.0
        %1811 = vmatprep.subr.mxu0 0.0
        %1812 = vmatpush1.msra.mxu0 0.0
        %1813 = vmatprep.subr.mxu0 0.0
        %1814 = vmatpush1.msra.mxu0 0.0
        %1815 = vmatprep.subr.mxu0 0.0
        %1816 = vmatpush1.msra.mxu0 0.0
        %1817 = vmatprep.subr.mxu0 0.0
        %1818 = vmatpush1.msra.mxu0 0.0
        %1819 = vmatprep.subr.mxu0 0.0
        %1820 = vmatpush1.msra.mxu0 0.0
        %1821 = vmatprep.subr.mxu0 0.0
        %1822 = vmatpush1.msra.mxu0 0.0
        %1823 = vmatprep.subr.mxu0 0.0
        %1824 = vmatpush1.msra.mxu0 0.0
        %1825 = vmatprep.subr.mxu0 0.0
        %1826 = vmatpush1.msra.mxu0 0.0
        %1827 = vmatprep.subr.mxu0 0.0
        %1828 = vmatpush1.msra.mxu0 0.0
        %1829 = vmatprep.subr.mxu0 0.0
        %1830 = vmatpush1.msra.mxu0 0.0
        %1831 = vmatprep.subr.mxu0 0.0
        %1832 = vmatpush1.msra.mxu0 0.0
        %1833 = vmatprep.subr.mxu0 0.0
        %1834 = vmatpush1.msra.mxu0 0.0
        %1835 = vmatprep.subr.mxu0 0.0
        %1836 = vmatpush1.msra.mxu0 0.0
        %1837 = vmatprep.subr.mxu0 0.0
        %1838 = vmatpush1.msra.mxu0 0.0
        %1839 = vmatprep.subr.mxu0 0.0
        %1840 = vmatpush1.msra.mxu0 0.0
        %1841 = vmatprep.subr.mxu0 0.0
        %1842 = vmatpush1.msra.mxu0 0.0
        %1843 = vmatprep.subr.mxu0 0.0
        %1844 = vmatpush1.msra.mxu0 0.0
        %1845 = vmatprep.subr.mxu0 0.0
        %1846 = vmatpush1.msra.mxu0 0.0
        %1847 = vmatprep.subr.mxu0 0.0
        %1848 = vmatpush1.msra.mxu0 0.0
        %1849 = vmatprep.subr.mxu0 0.0
        %1850 = vmatpush1.msra.mxu0 0.0
        %1851 = vmatprep.subr.mxu0 0.0
        %1852 = vmatpush1.msra.mxu0 0.0
        %1853 = vmatprep.subr.mxu0 0.0
        %1854 = vmatpush1.msra.mxu0 0.0
        %1855 = vmatprep.subr.mxu0 0.0
        %1856 = vmatpush1.msra.mxu0 0.0
        %1857 = vmatprep.subr.mxu0 0.0
        %1858 = vmatpush1.msra.mxu0 0.0
        %1859 = vmatprep.subr.mxu0 0.0
        %1860 = vmatpush1.msra.mxu0 0.0
        %1861 = vmatprep.mubr.f32.mxu0 0.0
        %1862 = vmatmul.mubr.f32.gmra.mrb[0].mxu0 %v1795
        %v1863 = vpop.f32.mrb[0].mxu0
        %v1864 = vadd.f32 0.0, %v1863
        %v1865 = vpop.f32.mrb[0].mxu0
        %1866 = vdwg.mxu0
        %s1867 = scalar_lea.vmem %s10, 4
        %v1868 = vld [vmem:[%s1867] sm:$0xf]
        %v1870 = vsel %vm403, %v1868, 0
        %1872 = vmatprep.subr.mxu0 0.0
        %1873 = vmatpush1.msra.mxu0 %v1791
        %1874 = vmatprep.subr.mxu0 0.0
        %1875 = vmatpush1.msra.mxu0 %v1792
        %1876 = vmatprep.subr.mxu0 0.0
        %1877 = vmatpush1.msra.mxu0 0.0
        %1878 = vmatprep.subr.mxu0 0.0
        %1879 = vmatpush1.msra.mxu0 0.0
        %1880 = vmatprep.subr.mxu0 0.0
        %1881 = vmatpush1.msra.mxu0 0.0
        %1882 = vmatprep.subr.mxu0 0.0
        %1883 = vmatpush1.msra.mxu0 0.0
        %1884 = vmatprep.subr.mxu0 0.0
        %1885 = vmatpush1.msra.mxu0 0.0
        %1886 = vmatprep.subr.mxu0 0.0
        %1887 = vmatpush1.msra.mxu0 0.0
        %1888 = vmatprep.subr.mxu0 0.0
        %1889 = vmatpush1.msra.mxu0 0.0
        %1890 = vmatprep.subr.mxu0 0.0
        %1891 = vmatpush1.msra.mxu0 0.0
        %1892 = vmatprep.subr.mxu0 0.0
        %1893 = vmatpush1.msra.mxu0 0.0
        %1894 = vmatprep.subr.mxu0 0.0
        %1895 = vmatpush1.msra.mxu0 0.0
        %1896 = vmatprep.subr.mxu0 0.0
        %1897 = vmatpush1.msra.mxu0 0.0
        %1898 = vmatprep.subr.mxu0 0.0
        %1899 = vmatpush1.msra.mxu0 0.0
        %1900 = vmatprep.subr.mxu0 0.0
        %1901 = vmatpush1.msra.mxu0 0.0
        %1902 = vmatprep.subr.mxu0 0.0
        %1903 = vmatpush1.msra.mxu0 0.0
        %1904 = vmatprep.subr.mxu0 0.0
        %1905 = vmatpush1.msra.mxu0 0.0
        %1906 = vmatprep.subr.mxu0 0.0
        %1907 = vmatpush1.msra.mxu0 0.0
        %1908 = vmatprep.subr.mxu0 0.0
        %1909 = vmatpush1.msra.mxu0 0.0
        %1910 = vmatprep.subr.mxu0 0.0
        %1911 = vmatpush1.msra.mxu0 0.0
        %1912 = vmatprep.subr.mxu0 0.0
        %1913 = vmatpush1.msra.mxu0 0.0
        %1914 = vmatprep.subr.mxu0 0.0
        %1915 = vmatpush1.msra.mxu0 0.0
        %1916 = vmatprep.subr.mxu0 0.0
        %1917 = vmatpush1.msra.mxu0 0.0
        %1918 = vmatprep.subr.mxu0 0.0
        %1919 = vmatpush1.msra.mxu0 0.0
        %1920 = vmatprep.subr.mxu0 0.0
        %1921 = vmatpush1.msra.mxu0 0.0
        %1922 = vmatprep.subr.mxu0 0.0
        %1923 = vmatpush1.msra.mxu0 0.0
        %1924 = vmatprep.subr.mxu0 0.0
        %1925 = vmatpush1.msra.mxu0 0.0
        %1926 = vmatprep.subr.mxu0 0.0
        %1927 = vmatpush1.msra.mxu0 0.0
        %1928 = vmatprep.subr.mxu0 0.0
        %1929 = vmatpush1.msra.mxu0 0.0
        %1930 = vmatprep.subr.mxu0 0.0
        %1931 = vmatpush1.msra.mxu0 0.0
        %1932 = vmatprep.subr.mxu0 0.0
        %1933 = vmatpush1.msra.mxu0 0.0
        %1934 = vmatprep.subr.mxu0 0.0
        %1935 = vmatpush1.msra.mxu0 0.0
        %1936 = vmatprep.mubr.f32.mxu0 0.0
        %1937 = vmatmul.mubr.f32.gmra.mrb[0].mxu0 %v1870
        %v1938 = vpop.f32.mrb[0].mxu0
        %v1939 = vadd.f32 0.0, %v1938
        %v1940 = vpop.f32.mrb[0].mxu0
        %1941 = vdwg.mxu0
        %v1942 = vmax.f32 %v1864, %v1939
        %s1943 = scalar_lea.vmem %s10, 8
        %v1944 = vld [vmem:[%s1943] sm:$0xf]
        %v1946 = vsel %vm403, %v1944, 0
        %1948 = vmatprep.subr.mxu0 0.0
        %1949 = vmatpush1.msra.mxu0 %v1791
        %1950 = vmatprep.subr.mxu0 0.0
        %1951 = vmatpush1.msra.mxu0 %v1792
        %1952 = vmatprep.subr.mxu0 0.0
        %1953 = vmatpush1.msra.mxu0 0.0
        %1954 = vmatprep.subr.mxu0 0.0
        %1955 = vmatpush1.msra.mxu0 0.0
        %1956 = vmatprep.subr.mxu0 0.0
        %1957 = vmatpush1.msra.mxu0 0.0
        %1958 = vmatprep.subr.mxu0 0.0
        %1959 = vmatpush1.msra.mxu0 0.0
        %1960 = vmatprep.subr.mxu0 0.0
        %1961 = vmatpush1.msra.mxu0 0.0
        %1962 = vmatprep.subr.mxu0 0.0
        %1963 = vmatpush1.msra.mxu0 0.0
        %1964 = vmatprep.subr.mxu0 0.0
        %1965 = vmatpush1.msra.mxu0 0.0
        %1966 = vmatprep.subr.mxu0 0.0
        %1967 = vmatpush1.msra.mxu0 0.0
        %1968 = vmatprep.subr.mxu0 0.0
        %1969 = vmatpush1.msra.mxu0 0.0
        %1970 = vmatprep.subr.mxu0 0.0
        %1971 = vmatpush1.msra.mxu0 0.0
        %1972 = vmatprep.subr.mxu0 0.0
        %1973 = vmatpush1.msra.mxu0 0.0
        %1974 = vmatprep.subr.mxu0 0.0
        %1975 = vmatpush1.msra.mxu0 0.0
        %1976 = vmatprep.subr.mxu0 0.0
        %1977 = vmatpush1.msra.mxu0 0.0
        %1978 = vmatprep.subr.mxu0 0.0
        %1979 = vmatpush1.msra.mxu0 0.0
        %1980 = vmatprep.subr.mxu0 0.0
        %1981 = vmatpush1.msra.mxu0 0.0
        %1982 = vmatprep.subr.mxu0 0.0
        %1983 = vmatpush1.msra.mxu0 0.0
        %1984 = vmatprep.subr.mxu0 0.0
        %1985 = vmatpush1.msra.mxu0 0.0
        %1986 = vmatprep.subr.mxu0 0.0
        %1987 = vmatpush1.msra.mxu0 0.0
        %1988 = vmatprep.subr.mxu0 0.0
        %1989 = vmatpush1.msra.mxu0 0.0
        %1990 = vmatprep.subr.mxu0 0.0
        %1991 = vmatpush1.msra.mxu0 0.0
        %1992 = vmatprep.subr.mxu0 0.0
        %1993 = vmatpush1.msra.mxu0 0.0
        %1994 = vmatprep.subr.mxu0 0.0
        %1995 = vmatpush1.msra.mxu0 0.0
        %1996 = vmatprep.subr.mxu0 0.0
        %1997 = vmatpush1.msra.mxu0 0.0
        %1998 = vmatprep.subr.mxu0 0.0
        %1999 = vmatpush1.msra.mxu0 0.0
        %2000 = vmatprep.subr.mxu0 0.0
        %2001 = vmatpush1.msra.mxu0 0.0
        %2002 = vmatprep.subr.mxu0 0.0
        %2003 = vmatpush1.msra.mxu0 0.0
        %2004 = vmatprep.subr.mxu0 0.0
        %2005 = vmatpush1.msra.mxu0 0.0
        %2006 = vmatprep.subr.mxu0 0.0
        %2007 = vmatpush1.msra.mxu0 0.0
        %2008 = vmatprep.subr.mxu0 0.0
        %2009 = vmatpush1.msra.mxu0 0.0
        %2010 = vmatprep.subr.mxu0 0.0
        %2011 = vmatpush1.msra.mxu0 0.0
        %2012 = vmatprep.mubr.f32.mxu0 0.0
        %2013 = vmatmul.mubr.f32.gmra.mrb[0].mxu0 %v1946
        %v2014 = vpop.f32.mrb[0].mxu0
        %v2015 = vadd.f32 0.0, %v2014
        %v2016 = vpop.f32.mrb[0].mxu0
        %2017 = vdwg.mxu0
        %v2018 = vmax.f32 %v1942, %v2015
        %s2019 = scalar_lea.vmem %s10, 12
        %v2020 = vld [vmem:[%s2019] sm:$0xf]
        %v2022 = vsel %vm403, %v2020, 0
        %2024 = vmatprep.subr.mxu0 0.0
        %2025 = vmatpush1.msra.mxu0 %v1791
        %2026 = vmatprep.subr.mxu0 0.0
        %2027 = vmatpush1.msra.mxu0 %v1792
        %2028 = vmatprep.subr.mxu0 0.0
        %2029 = vmatpush1.msra.mxu0 0.0
        %2030 = vmatprep.subr.mxu0 0.0
        %2031 = vmatpush1.msra.mxu0 0.0
        %2032 = vmatprep.subr.mxu0 0.0
        %2033 = vmatpush1.msra.mxu0 0.0
        %2034 = vmatprep.subr.mxu0 0.0
        %2035 = vmatpush1.msra.mxu0 0.0
        %2036 = vmatprep.subr.mxu0 0.0
        %2037 = vmatpush1.msra.mxu0 0.0
        %2038 = vmatprep.subr.mxu0 0.0
        %2039 = vmatpush1.msra.mxu0 0.0
        %2040 = vmatprep.subr.mxu0 0.0
        %2041 = vmatpush1.msra.mxu0 0.0
        %2042 = vmatprep.subr.mxu0 0.0
        %2043 = vmatpush1.msra.mxu0 0.0
        %2044 = vmatprep.subr.mxu0 0.0
        %2045 = vmatpush1.msra.mxu0 0.0
        %2046 = vmatprep.subr.mxu0 0.0
        %2047 = vmatpush1.msra.mxu0 0.0
        %2048 = vmatprep.subr.mxu0 0.0
        %2049 = vmatpush1.msra.mxu0 0.0
        %2050 = vmatprep.subr.mxu0 0.0
        %2051 = vmatpush1.msra.mxu0 0.0
        %2052 = vmatprep.subr.mxu0 0.0
        %2053 = vmatpush1.msra.mxu0 0.0
        %2054 = vmatprep.subr.mxu0 0.0
        %2055 = vmatpush1.msra.mxu0 0.0
        %2056 = vmatprep.subr.mxu0 0.0
        %2057 = vmatpush1.msra.mxu0 0.0
        %2058 = vmatprep.subr.mxu0 0.0
        %2059 = vmatpush1.msra.mxu0 0.0
        %2060 = vmatprep.subr.mxu0 0.0
        %2061 = vmatpush1.msra.mxu0 0.0
        %2062 = vmatprep.subr.mxu0 0.0
        %2063 = vmatpush1.msra.mxu0 0.0
        %2064 = vmatprep.subr.mxu0 0.0
        %2065 = vmatpush1.msra.mxu0 0.0
        %2066 = vmatprep.subr.mxu0 0.0
        %2067 = vmatpush1.msra.mxu0 0.0
        %2068 = vmatprep.subr.mxu0 0.0
        %2069 = vmatpush1.msra.mxu0 0.0
        %2070 = vmatprep.subr.mxu0 0.0
        %2071 = vmatpush1.msra.mxu0 0.0
        %2072 = vmatprep.subr.mxu0 0.0
        %2073 = vmatpush1.msra.mxu0 0.0
        %2074 = vmatprep.subr.mxu0 0.0
        %2075 = vmatpush1.msra.mxu0 0.0
        %2076 = vmatprep.subr.mxu0 0.0
        %2077 = vmatpush1.msra.mxu0 0.0
        %2078 = vmatprep.subr.mxu0 0.0
        %2079 = vmatpush1.msra.mxu0 0.0
        %2080 = vmatprep.subr.mxu0 0.0
        %2081 = vmatpush1.msra.mxu0 0.0
        %2082 = vmatprep.subr.mxu0 0.0
        %2083 = vmatpush1.msra.mxu0 0.0
        %2084 = vmatprep.subr.mxu0 0.0
        %2085 = vmatpush1.msra.mxu0 0.0
        %2086 = vmatprep.subr.mxu0 0.0
        %2087 = vmatpush1.msra.mxu0 0.0
        %2088 = vmatprep.mubr.f32.mxu0 0.0
        %2089 = vmatmul.mubr.f32.gmra.mrb[0].mxu0 %v2022
        %v2090 = vpop.f32.mrb[0].mxu0
        %v2091 = vadd.f32 0.0, %v2090
        %v2092 = vpop.f32.mrb[0].mxu0
        %2093 = vdwg.mxu0
        %v2094 = vmax.f32 %v2018, %v2091
        %vm2095 = vcmask 125952
        %2096 = vst.msk [vmem:[#allocation4 + $0x3] sm:$0xf] %vm2095, %v2094
        %vm2097 = vcmp.lt.s32.totalorder %v424, 0
        %v2098 = vsub.s32 0, %v424
        %v2099 = vsel %vm2097, %v2098, %v424
        %v2100 = vshrl.u32 %v2099, 1
        %v2101 = vand.u32 %v2099, 1
        %v2102 = vsub.s32 0, %v2101
        %v2103 = vsel %vm2097, %v2102, %v2101
        %vm2104 = vcmp.ne.s32.totalorder %v2103, 0
        %vm2105 = vcmp.lt.s32.totalorder %v2103, 0
        %vm2106 = vmand %vm2105, %vm2104
        %v2107 = vadd.s32 %v2103, 2
        %v2108 = vsel %vm2106, %v2107, %v2103
        %vm2109 = vcmp.ne.s32.totalorder %v2108, 0
        %v2110 = vsel %vm2109, 1, 0
        %v2111 = vcvt.s32.f32 %v2110
        %vm2112 = vcmp.ne.s32.totalorder %v2108, 1
        %v2113 = vsel %vm2112, 1, 0
        %v2114 = vcvt.s32.f32 %v2113
        %v2115 = vld [vmem:[#allocation4] sm:$0xf]
        %v2116 = vmul.f32 %v2115, %v2111
        %2117 = vst.msk [vmem:[#allocation7] sm:$0xf] %vm2095, %v2116
        %v2118 = vld [vmem:[#allocation4 + $0x1] sm:$0xf]
        %2120 = vrot.lane.b32.xlu0 %v2118, 16
        %v2121 = vpop.permute.xlu0 %2120
        %vm2123 = vcmask 257152
        %2124 = vst.msk [vmem:[#allocation7] sm:$0xf] %vm2123, %v2121
        %v2125 = vld [vmem:[#allocation4 + $0x2] sm:$0xf]
        %v2126 = vmul.f32 %v2125, %v2114
        %2128 = vrot.lane.b32.xlu0 %v2126, 32
        %v2129 = vpop.permute.xlu0 %2128
        %vm2131 = vcmask 388352
        %2132 = vst.msk [vmem:[#allocation7] sm:$0xf] %vm2131, %v2129
        %v2133 = vld [vmem:[#allocation4 + $0x2] sm:$0xf]
        %v2134 = vmul.f32 %v2133, %v2111
        %2136 = vrot.lane.b32.xlu0 %v2134, 48
        %v2137 = vpop.permute.xlu0 %2136
        %vm2139 = vcmask 519552
        %2140 = vst.msk [vmem:[#allocation7] sm:$0xf] %vm2139, %v2137
        %v2141 = vld [vmem:[#allocation4 + $0x3] sm:$0xf]
        %2143 = vrot.lane.b32.xlu0 %v2141, 64
        %v2144 = vpop.permute.xlu0 %2143
        %vm2146 = vcmask 650752
        %2147 = vst.msk [vmem:[#allocation7] sm:$0xf] %vm2146, %v2144
        %v2148 = vld [vmem:[#allocation4 + $0x4] sm:$0xf]
        %v2149 = vmul.f32 %v2148, %v2114
        %2151 = vrot.lane.b32.xlu0 %v2149, 80
        %v2152 = vpop.permute.xlu0 %2151
        %vm2154 = vcmask 781952
        %2155 = vst.msk [vmem:[#allocation7] sm:$0xf] %vm2154, %v2152
        %v2156 = vld [vmem:[#allocation4 + $0x4] sm:$0xf]
        %v2157 = vmul.f32 %v2156, %v2111
        %2159 = vrot.lane.b32.xlu0 %v2157, 96
        %v2160 = vpop.permute.xlu0 %2159
        %vm2162 = vcmask 913152
        %2163 = vst.msk [vmem:[#allocation7] sm:$0xf] %vm2162, %v2160
        %v2164 = vld [vmem:[#allocation4 + $0x5] sm:$0xf]
        %2166 = vrot.lane.b32.xlu0 %v2164, 112
        %v2167 = vpop.permute.xlu0 %2166
        %vm2169 = vcmask 1044352
        %2170 = vst.msk [vmem:[#allocation7] sm:$0xf] %vm2169, %v2167
        %v2171 = vld [vmem:[#allocation4 + $0x6] sm:$0xf]
        %v2172 = vmul.f32 %v2171, %v2114
        %2173 = vst.msk [vmem:[#allocation7 + $0x4] sm:$0xf] %vm2095, %v2172
        %v2174 = vld [vmem:[#allocation7] sm:$0xff]
        %v2175 = vld [vmem:[%s5] sm:$0xff]
        %v2176 = vld [vmem:[%s5 + $0x8] sm:$0xff]
        %v2177 = vld [vmem:[%s5 + $0x10] sm:$0xff]
        %v2178 = vld [vmem:[%s5 + $0x18] sm:$0xff]
        %v2179 = vld [vmem:[%s5 + $0x20] sm:$0xff]
        %v2180 = vld [vmem:[%s5 + $0x28] sm:$0xff]
        %v2181 = vld [vmem:[%s5 + $0x30] sm:$0xff]
        %v2182 = vld [vmem:[%s5 + $0x38] sm:$0xff]
        %v2183 = vld [vmem:[%s5 + $0x40] sm:$0xff]
        %v2184 = vld [vmem:[%s5 + $0x48] sm:$0xff]
        %v2185 = vld [vmem:[%s5 + $0x50] sm:$0xff]
        %v2186 = vld [vmem:[%s5 + $0x58] sm:$0xff]
        %v2187 = vld [vmem:[%s5 + $0x60] sm:$0xff]
        %v2188 = vld [vmem:[%s5 + $0x68] sm:$0xff]
        %v2189 = vld [vmem:[%s5 + $0x70] sm:$0xff]
        %v2190 = vld [vmem:[%s5 + $0x78] sm:$0xff]
        %v2191 = vld [vmem:[%s5 + $0x80] sm:$0xff]
        %v2192 = vld [vmem:[%s5 + $0x88] sm:$0xff]
        %v2193 = vld [vmem:[%s6] sm:$0x1]
        %v2195 = vlaneseq
        %v2196 = vshrl.u32 %v2195, 7
        %v2197 = vsub.s32 0, %v2196
        %v2198 = vrot.slane %v2193, %v2197
        %v2201 = vcombine.high %v2174, %v2174
        %v2202 = vsel %vm403, %v2201, 0
        %2204 = vmatprep.subr.mxu0 0.0
        %2205 = vmatpush1.msra.mxu0 %v2175
        %2206 = vmatprep.subr.mxu0 0.0
        %2207 = vmatpush1.msra.mxu0 %v2176
        %2208 = vmatprep.subr.mxu0 0.0
        %2209 = vmatpush1.msra.mxu0 %v2177
        %2210 = vmatprep.subr.mxu0 0.0
        %2211 = vmatpush1.msra.mxu0 %v2178
        %2212 = vmatprep.subr.mxu0 0.0
        %2213 = vmatpush1.msra.mxu0 %v2179
        %2214 = vmatprep.subr.mxu0 0.0
        %2215 = vmatpush1.msra.mxu0 %v2180
        %2216 = vmatprep.subr.mxu0 0.0
        %2217 = vmatpush1.msra.mxu0 %v2181
        %2218 = vmatprep.subr.mxu0 0.0
        %2219 = vmatpush1.msra.mxu0 %v2182
        %2220 = vmatprep.subr.mxu0 0.0
        %2221 = vmatpush1.msra.mxu0 %v2183
        %2222 = vmatprep.subr.mxu0 0.0
        %2223 = vmatpush1.msra.mxu0 %v2184
        %2224 = vmatprep.subr.mxu0 0.0
        %2225 = vmatpush1.msra.mxu0 %v2185
        %2226 = vmatprep.subr.mxu0 0.0
        %2227 = vmatpush1.msra.mxu0 %v2186
        %2228 = vmatprep.subr.mxu0 0.0
        %2229 = vmatpush1.msra.mxu0 %v2187
        %2230 = vmatprep.subr.mxu0 0.0
        %2231 = vmatpush1.msra.mxu0 %v2188
        %2232 = vmatprep.subr.mxu0 0.0
        %2233 = vmatpush1.msra.mxu0 %v2189
        %2234 = vmatprep.subr.mxu0 0.0
        %2235 = vmatpush1.msra.mxu0 %v2190
        %2236 = vmatprep.subr.mxu0 0.0
        %2237 = vmatpush1.msra.mxu0 %v2191
        %2238 = vmatprep.subr.mxu0 0.0
        %2239 = vmatpush1.msra.mxu0 %v2192
        %2240 = vmatprep.subr.mxu0 0.0
        %2241 = vmatpush1.msra.mxu0 0.0
        %2242 = vmatprep.subr.mxu0 0.0
        %2243 = vmatpush1.msra.mxu0 0.0
        %2244 = vmatprep.subr.mxu0 0.0
        %2245 = vmatpush1.msra.mxu0 0.0
        %2246 = vmatprep.subr.mxu0 0.0
        %2247 = vmatpush1.msra.mxu0 0.0
        %2248 = vmatprep.subr.mxu0 0.0
        %2249 = vmatpush1.msra.mxu0 0.0
        %2250 = vmatprep.subr.mxu0 0.0
        %2251 = vmatpush1.msra.mxu0 0.0
        %2252 = vmatprep.subr.mxu0 0.0
        %2253 = vmatpush1.msra.mxu0 0.0
        %2254 = vmatprep.subr.mxu0 0.0
        %2255 = vmatpush1.msra.mxu0 0.0
        %2256 = vmatprep.subr.mxu0 0.0
        %2257 = vmatpush1.msra.mxu0 0.0
        %2258 = vmatprep.subr.mxu0 0.0
        %2259 = vmatpush1.msra.mxu0 0.0
        %2260 = vmatprep.subr.mxu0 0.0
        %2261 = vmatpush1.msra.mxu0 0.0
        %2262 = vmatprep.subr.mxu0 0.0
        %2263 = vmatpush1.msra.mxu0 0.0
        %2264 = vmatprep.subr.mxu0 0.0
        %2265 = vmatpush1.msra.mxu0 0.0
        %2266 = vmatprep.subr.mxu0 0.0
        %2267 = vmatpush1.msra.mxu0 0.0
        %2268 = vmatprep.mubr.f32.mxu0 %v2202
        %2269 = vmatmul.mubr.f32.gmra.mrb[0].mxu0 %v2174
        %v2270 = vpop.f32.mrb[0].mxu0
        %v2271 = vadd.f32 %v2198, %v2270
        %v2272 = vpop.f32.mrb[0].mxu0
        %2273 = vdwg.mxu0
        %v2274 = vmax.f32 %v2271, 0.0
        %vm2275 = vcmask 257024
        %v2276 = vsel %vm2275, %v2274, -inf
        %v2277 = vrot.slane %v2276, 4
        %v2278 = vmax.f32 %v2276, %v2277
        %v2279 = vrot.slane %v2278, 2
        %v2280 = vmax.f32 %v2278, %v2279
        %v2281 = vrot.slane %v2280, 1
        %v2282 = vmax.f32 %v2280, %v2281
        %v2283 = vld [vmem:[%s7] sm:$0xff]
        %v2284 = vld [vmem:[%s7 + $0x8] sm:$0xff]
        %v2285 = vld [vmem:[%s7 + $0x10] sm:$0xff]
        %v2286 = vld [vmem:[%s7 + $0x18] sm:$0xff]
        %v2287 = vld [vmem:[%s8] sm:$0x1]
        %vm2288 = vcmask 261120
        %v2290 = vsel %vm2288, %v2282, 0
        %2292 = vmatprep.subr.mxu0 0.0
        %2293 = vmatpush1.msra.mxu0 %v2283
        %2294 = vmatprep.subr.mxu0 0.0
        %2295 = vmatpush1.msra.mxu0 %v2284
        %2296 = vmatprep.subr.mxu0 0.0
        %2297 = vmatpush1.msra.mxu0 %v2285
        %2298 = vmatprep.subr.mxu0 0.0
        %2299 = vmatpush1.msra.mxu0 %v2286
        %2300 = vmatprep.subr.mxu0 0.0
        %2301 = vmatpush1.msra.mxu0 0.0
        %2302 = vmatprep.subr.mxu0 0.0
        %2303 = vmatpush1.msra.mxu0 0.0
        %2304 = vmatprep.subr.mxu0 0.0
        %2305 = vmatpush1.msra.mxu0 0.0
        %2306 = vmatprep.subr.mxu0 0.0
        %2307 = vmatpush1.msra.mxu0 0.0
        %2308 = vmatprep.subr.mxu0 0.0
        %2309 = vmatpush1.msra.mxu0 0.0
        %2310 = vmatprep.subr.mxu0 0.0
        %2311 = vmatpush1.msra.mxu0 0.0
        %2312 = vmatprep.subr.mxu0 0.0
        %2313 = vmatpush1.msra.mxu0 0.0
        %2314 = vmatprep.subr.mxu0 0.0
        %2315 = vmatpush1.msra.mxu0 0.0
        %2316 = vmatprep.subr.mxu0 0.0
        %2317 = vmatpush1.msra.mxu0 0.0
        %2318 = vmatprep.subr.mxu0 0.0
        %2319 = vmatpush1.msra.mxu0 0.0
        %2320 = vmatprep.subr.mxu0 0.0
        %2321 = vmatpush1.msra.mxu0 0.0
        %2322 = vmatprep.subr.mxu0 0.0
        %2323 = vmatpush1.msra.mxu0 0.0
        %2324 = vmatprep.subr.mxu0 0.0
        %2325 = vmatpush1.msra.mxu0 0.0
        %2326 = vmatprep.subr.mxu0 0.0
        %2327 = vmatpush1.msra.mxu0 0.0
        %2328 = vmatprep.subr.mxu0 0.0
        %2329 = vmatpush1.msra.mxu0 0.0
        %2330 = vmatprep.subr.mxu0 0.0
        %2331 = vmatpush1.msra.mxu0 0.0
        %2332 = vmatprep.subr.mxu0 0.0
        %2333 = vmatpush1.msra.mxu0 0.0
        %2334 = vmatprep.subr.mxu0 0.0
        %2335 = vmatpush1.msra.mxu0 0.0
        %2336 = vmatprep.subr.mxu0 0.0
        %2337 = vmatpush1.msra.mxu0 0.0
        %2338 = vmatprep.subr.mxu0 0.0
        %2339 = vmatpush1.msra.mxu0 0.0
        %2340 = vmatprep.subr.mxu0 0.0
        %2341 = vmatpush1.msra.mxu0 0.0
        %2342 = vmatprep.subr.mxu0 0.0
        %2343 = vmatpush1.msra.mxu0 0.0
        %2344 = vmatprep.subr.mxu0 0.0
        %2345 = vmatpush1.msra.mxu0 0.0
        %2346 = vmatprep.subr.mxu0 0.0
        %2347 = vmatpush1.msra.mxu0 0.0
        %2348 = vmatprep.subr.mxu0 0.0
        %2349 = vmatpush1.msra.mxu0 0.0
        %2350 = vmatprep.subr.mxu0 0.0
        %2351 = vmatpush1.msra.mxu0 0.0
        %2352 = vmatprep.subr.mxu0 0.0
        %2353 = vmatpush1.msra.mxu0 0.0
        %2354 = vmatprep.subr.mxu0 0.0
        %2355 = vmatpush1.msra.mxu0 0.0
        %2356 = vmatprep.mubr.f32.mxu0 0.0
        %2357 = vmatmul.mubr.f32.gmra.mrb[0].mxu0 %v2290
        %v2358 = vpop.f32.mrb[0].mxu0
        %v2359 = vadd.f32 %v2287, %v2358
        %v2360 = vpop.f32.mrb[0].mxu0
        %2361 = vdwg.mxu0
        %vm2362 = vcmask 73728
        %2363 = vst.msk [vmem:[%s378] sm:$0x1] %vm2362, %v2359
        %s2364 = sand.u32 %s269, 1
        %s2365 = scalar_lea.sflag [#allocation9], %s2364
        %s2366 = sand.u32 %s269, 1
        %s2367 = scalar_lea.vmem [#allocation8], %s2366
        // Predicated region
        $region65: #{_lambda_.1} parent=63 // pred_check
          %p2368 = pneg %p279
        $region66: #{_lambda_.1} parent=63 // pred_check_branch
          %2370 = sbr.rel (%p2368) target = $region68
        $region67: #{_lambda_.1} parent=63 // pred_region
          %s2372 = ssub.s32 16, 16
          %2373 = vsyncadd %s2365, %s2372
          %s2374 = smul.addr %s25, 16
          %s2375 = scalar_lea.hbm %s11, %s2374
          %s2377 = sshll.u32 %s2367, 4
          %s2378 = int_to_ptr.vmem [resolvable:$true] %s2377
          %2380 = dma.vmem_to_hbm [thread:$0]  %s2378, 16, %s2375, %s2365
        $region68: #{_lambda_.1} parent=63 // pred_fallthru
          _
      $region64: #{_lambda_.1} parent=5 // pred_fallthru
        _
      %p2381 = scmp.le.s32.totalorder 2, %s20
      // Predicated region
      $region69: #{_lambda_.1} parent=5 // pred_check
        %p2382 = pneg %p2381
      $region70: #{_lambda_.1} parent=5 // pred_check_branch
        %2384 = sbr.rel (%p2382) target = $region72
      $region71: #{_lambda_.1} parent=5 // pred_region
        %s2385 = ssub.s32 %s20, 2
        // Predicated region
        $region73: #{_lambda_.1} parent=71 // pred_check
          %p2386 = pneg %p285
        $region74: #{_lambda_.1} parent=71 // pred_check_branch
          %2388 = sbr.rel (%p2386) target = $region76
        $region75: #{_lambda_.1} parent=71 // pred_region
          %s2389 = sand.u32 %s270, 1
          %s2390 = scalar_lea.sflag [#allocation9], %s2389
          %s2391 = sand.u32 %s270, 1
          %s2392 = scalar_lea.vmem [#allocation8], %s2391
          %2393 = dma.done %s2390, 16
        $region76: #{_lambda_.1} parent=71 // pred_fallthru
          _
      $region72: #{_lambda_.1} parent=5 // pred_fallthru
        _
    $region6: #{_lambda_.1} parent=1 // loop_footer
      %s24 = sadd.s32 1, %s20
    $region7: #{_lambda_.1} parent=1 // loop_footer_branch
      %19 = sbr.rel target = $region3
    $region8: #{_lambda_.1} parent=1 // loop_exit
      _
    %2394 = vsyncpa [#allocation9], 1
    %s2395 = scalar_lea.sflag [#allocation9], 1
    %2396 = vsyncpa %s2395, 1

</llo_original>
